<compile_context>
chip_gen: v7x
topology: tpu7x:2x2x1
jax: 0.10.0
libtpu: 0.0.40
codegen_flags: <defaults>
</compile_context>

<pallas_src>
import functools

import jax
import jax.numpy as jnp
import numpy as np
from jax.experimental import pallas as pl
from jax.experimental.pallas import tpu as pltpu

BN_EPS = 1e-5
IN_FEATURES = 5
K_PAD = 8  # pad the 5-wide input contraction to 8 sublanes


def revival_dnn_kernel(
    xT_ref,              # (K_PAD, TB)    bf16   (batch on the lane axis)
    w1_ref, c1_ref,      # (512, K_PAD) bf16, (512, 1) f32
    w2_ref, c2_ref,      # (256, 512)   bf16, (256, 1) f32
    w3_ref, c3_ref,      # (128, 256)   bf16, (128, 1) f32
    w4_ref, b4_ref,      # (128, 1) f32,      (1, 1)   f32
    o_ref,               # (1, TB) f32
):
    """One batch tile of the fused MLP, activations transposed (feat, batch)."""
    x = xT_ref[...]                                                # bf16

    # fc1 + folded bn1 + relu   (dropout == identity at inference)
    h = jnp.dot(w1_ref[...], x, preferred_element_type=jnp.float32)
    h = jnp.maximum(h + c1_ref[...], 0.0)                          # (512, TB) f32

    # fc2 + folded bn2 + relu
    h = jnp.dot(w2_ref[...], h.astype(jnp.bfloat16),
                preferred_element_type=jnp.float32)
    h = jnp.maximum(h + c2_ref[...], 0.0)                          # (256, TB) f32

    # fc3 + folded bn3 + relu
    h = jnp.dot(w3_ref[...], h.astype(jnp.bfloat16),
                preferred_element_type=jnp.float32)
    h = jnp.maximum(h + c3_ref[...], 0.0)                          # (128, TB) f32

    # fc4 (128 -> 1): VPU multiply + cross-sublane reduce -> lane-dense row.
    o = jnp.sum(h * w4_ref[...], axis=0, keepdims=True) + b4_ref[...]
    o_ref[...] = o.astype(o_ref.dtype)                             # (1, TB)


@functools.partial(jax.jit, static_argnames=("tile_b",))
def revival_dnn_forward(x, folded, tile_b=512):
    """x: (B, 5) float32.  folded: dict from fold_params().  Returns (B, 1) f32."""
    B = x.shape[0]
    b_pad = pl.cdiv(B, tile_b) * tile_b
    num_tiles = b_pad // tile_b

    # Transposed, K-padded, bf16 input: (K_PAD, b_pad); batch on the lane axis.
    xT = jnp.zeros((K_PAD, b_pad), jnp.bfloat16)
    xT = xT.at[:IN_FEATURES, :B].set(x.T.astype(jnp.bfloat16))

    w1, c1 = folded["w1"], folded["c1"]
    w2, c2 = folded["w2"], folded["c2"]
    w3, c3 = folded["w3"], folded["c3"]
    w4, b4 = folded["w4"], folded["b4"]

    def full(arr):
        # whole array every grid step (same block index -> no re-fetch)
        return pl.BlockSpec(arr.shape, lambda i: (0, 0))

    out_row = pl.pallas_call(
        revival_dnn_kernel,
        out_shape=jax.ShapeDtypeStruct((1, b_pad), jnp.float32),
        grid_spec=pltpu.PrefetchScalarGridSpec(
            num_scalar_prefetch=0,
            grid=(num_tiles,),
            in_specs=[
                pl.BlockSpec((K_PAD, tile_b), lambda i: (0, i)),   # x tile
                full(w1), full(c1),
                full(w2), full(c2),
                full(w3), full(c3),
                full(w4), full(b4),
            ],
            out_specs=pl.BlockSpec((1, tile_b), lambda i: (0, i)),
        ),
        compiler_params=pltpu.CompilerParams(
            dimension_semantics=("parallel",),
        ),
    )(xT, w1, c1, w2, c2, w3, c3, w4, b4)

    return out_row[0, :B][:, None]


def make_raw_params(key):
    """PyTorch-layout params: Linear weight (out, in), bias (out,); BN stats."""
    dims = [(IN_FEATURES, 512), (512, 256), (256, 128), (128, 1)]
    keys = jax.random.split(key, 8 * len(dims))
    p = {}
    ki = 0
    for layer, (fan_in, fan_out) in enumerate(dims, start=1):
        bound = 1.0 / np.sqrt(fan_in)
        p[f"w{layer}"] = jax.random.uniform(
            keys[ki], (fan_out, fan_in), jnp.float32, -bound, bound); ki += 1
        p[f"b{layer}"] = jax.random.uniform(
            keys[ki], (fan_out,), jnp.float32, -bound, bound); ki += 1
        if layer < 4:  # BatchNorm1d after fc1/fc2/fc3
            p[f"gamma{layer}"] = 1.0 + 0.1 * jax.random.normal(
                keys[ki], (fan_out,), jnp.float32); ki += 1
            p[f"beta{layer}"] = 0.1 * jax.random.normal(
                keys[ki], (fan_out,), jnp.float32); ki += 1
            p[f"mean{layer}"] = 0.1 * jax.random.normal(
                keys[ki], (fan_out,), jnp.float32); ki += 1
            p[f"var{layer}"] = jax.random.uniform(
                keys[ki], (fan_out,), jnp.float32, 0.5, 1.5); ki += 1
    return p


def fold_params(raw):
    """Fold inference BatchNorm into the linear layers; bf16 matmul weights."""
    folded = {}
    for layer in (1, 2, 3):
        w, b = raw[f"w{layer}"], raw[f"b{layer}"]
        s = raw[f"gamma{layer}"] / jnp.sqrt(raw[f"var{layer}"] + BN_EPS)
        c = s * (b - raw[f"mean{layer}"]) + raw[f"beta{layer}"]
        w_scaled = w * s[:, None]                                  # (out, in)
        if layer == 1:                                             # pad K: 5 -> 8
            w_scaled = jnp.zeros((w.shape[0], K_PAD), jnp.float32
                                 ).at[:, :IN_FEATURES].set(w_scaled)
        folded[f"w{layer}"] = w_scaled.astype(jnp.bfloat16)
        folded[f"c{layer}"] = c[:, None].astype(jnp.float32)       # (out, 1)
    folded["w4"] = raw["w4"].reshape(-1, 1).astype(jnp.float32)    # (128, 1)
    folded["b4"] = raw["b4"].reshape(1, 1).astype(jnp.float32)
    return folded


def reference_forward(x, folded):
    """Pure-JAX reference with matching numerics (bf16 matmuls, f32 math)."""
    h = jnp.zeros((x.shape[0], K_PAD), jnp.bfloat16
                  ).at[:, :IN_FEATURES].set(x.astype(jnp.bfloat16))
    z = None
    for layer in (1, 2, 3):
        z = jnp.dot(h, folded[f"w{layer}"].T,
                    preferred_element_type=jnp.float32)
        z = jnp.maximum(z + folded[f"c{layer}"][:, 0], 0.0)
        h = z.astype(jnp.bfloat16)
    return z @ folded["w4"] + folded["b4"][0, 0]                   # (B, 1) f32


if __name__ == "__main__":
    key = jax.random.PRNGKey(0)
    k_param, k_x = jax.random.split(key)

    raw = make_raw_params(k_param)
    folded = fold_params(raw)

    B = 1000  # deliberately NOT a multiple of tile_b -> exercises padding; 2 grid steps
    x = jax.random.normal(k_x, (B, IN_FEATURES), jnp.float32)

    out = revival_dnn_forward(x, folded, tile_b=512)
    out = jax.block_until_ready(out)

    ref = jax.block_until_ready(reference_forward(x, folded))
    assert out.shape == (B, 1)
    np.testing.assert_allclose(np.asarray(out), np.asarray(ref),
                               rtol=5e-3, atol=5e-3)
    print("KERNEL_OK")
</pallas_src>

<mosaic_0001>
module attributes {stable_mosaic.version = 11 : i64} {
  func.func @revival_dnn_kernel(%arg0: i32, %arg1: memref<8x512xbf16, #tpu.memory_space<vmem>>, %arg2: memref<512x8xbf16, #tpu.memory_space<vmem>>, %arg3: memref<512x1xf32, #tpu.memory_space<vmem>>, %arg4: memref<256x512xbf16, #tpu.memory_space<vmem>>, %arg5: memref<256x1xf32, #tpu.memory_space<vmem>>, %arg6: memref<128x256xbf16, #tpu.memory_space<vmem>>, %arg7: memref<128x1xf32, #tpu.memory_space<vmem>>, %arg8: memref<128x1xf32, #tpu.memory_space<vmem>>, %arg9: memref<1x1xf32, #tpu.memory_space<vmem>>, %arg10: memref<1x512xf32, #tpu.memory_space<vmem>>) attributes {dimension_semantics = [#tpu.dimension_semantics<parallel>], iteration_bounds = array<i64: 2>, scalar_prefetch = 0 : i64, scratch_operands = 0 : i64, tpu.core_type = #tpu.core_type<tc>, window_params = [{transform_indices = @transform_0, window_bounds = array<i64: 8, 512>}, {pipeline_mode = #tpu.pipeline_mode<synchronous>, transform_indices = @transform_1, window_bounds = array<i64: 512, 8>}, {pipeline_mode = #tpu.pipeline_mode<synchronous>, transform_indices = @transform_2, window_bounds = array<i64: 512, 1>}, {pipeline_mode = #tpu.pipeline_mode<synchronous>, transform_indices = @transform_3, window_bounds = array<i64: 256, 512>}, {pipeline_mode = #tpu.pipeline_mode<synchronous>, transform_indices = @transform_4, window_bounds = array<i64: 256, 1>}, {pipeline_mode = #tpu.pipeline_mode<synchronous>, transform_indices = @transform_5, window_bounds = array<i64: 128, 256>}, {pipeline_mode = #tpu.pipeline_mode<synchronous>, transform_indices = @transform_6, window_bounds = array<i64: 128, 1>}, {pipeline_mode = #tpu.pipeline_mode<synchronous>, transform_indices = @transform_7, window_bounds = array<i64: 128, 1>}, {pipeline_mode = #tpu.pipeline_mode<synchronous>, transform_indices = @transform_8, window_bounds = array<i64: 1, 1>}, {transform_indices = @transform_9, window_bounds = array<i64: 1, 512>}]} {
    %c0 = arith.constant 0 : index
    %c0_0 = arith.constant 0 : index
    %0 = vector.load %arg1[%c0, %c0_0] : memref<8x512xbf16, #tpu.memory_space<vmem>>, vector<8x512xbf16>
    %c0_1 = arith.constant 0 : index
    %c0_2 = arith.constant 0 : index
    %1 = vector.load %arg2[%c0_1, %c0_2] : memref<512x8xbf16, #tpu.memory_space<vmem>>, vector<512x8xbf16>
    %cst = arith.constant dense<0.000000e+00> : vector<512x512xf32>
    %2 = tpu.matmul %1, %0, %cst {dimension_numbers = #tpu.dot_dimension_numbers<[1], [0], [0], [1], [0, 0, 1, 1], [], []>} : vector<512x8xbf16>, vector<8x512xbf16>, vector<512x512xf32> -> vector<512x512xf32>
    %c0_3 = arith.constant 0 : index
    %c0_4 = arith.constant 0 : index
    %3 = vector.load %arg3[%c0_3, %c0_4] : memref<512x1xf32, #tpu.memory_space<vmem>>, vector<512x1xf32>
    %4 = vector.broadcast %3 : vector<512x1xf32> to vector<512x512xf32>
    %5 = arith.addf %2, %4 : vector<512x512xf32>
    %cst_5 = arith.constant 0.000000e+00 : f32
    %6 = vector.broadcast %cst_5 : f32 to vector<512x512xf32>
    %7 = arith.maximumf %5, %6 : vector<512x512xf32>
    %c0_6 = arith.constant 0 : index
    %c0_7 = arith.constant 0 : index
    %8 = vector.load %arg4[%c0_6, %c0_7] : memref<256x512xbf16, #tpu.memory_space<vmem>>, vector<256x512xbf16>
    %9 = arith.truncf %7 : vector<512x512xf32> to vector<512x512xbf16>
    %cst_8 = arith.constant dense<0.000000e+00> : vector<256x512xf32>
    %10 = tpu.matmul %8, %9, %cst_8 {dimension_numbers = #tpu.dot_dimension_numbers<[1], [0], [0], [1], [0, 0, 1, 1], [], []>} : vector<256x512xbf16>, vector<512x512xbf16>, vector<256x512xf32> -> vector<256x512xf32>
    %c0_9 = arith.constant 0 : index
    %c0_10 = arith.constant 0 : index
    %11 = vector.load %arg5[%c0_9, %c0_10] : memref<256x1xf32, #tpu.memory_space<vmem>>, vector<256x1xf32>
    %12 = vector.broadcast %11 : vector<256x1xf32> to vector<256x512xf32>
    %13 = arith.addf %10, %12 : vector<256x512xf32>
    %cst_11 = arith.constant 0.000000e+00 : f32
    %14 = vector.broadcast %cst_11 : f32 to vector<256x512xf32>
    %15 = arith.maximumf %13, %14 : vector<256x512xf32>
    %c0_12 = arith.constant 0 : index
    %c0_13 = arith.constant 0 : index
    %16 = vector.load %arg6[%c0_12, %c0_13] : memref<128x256xbf16, #tpu.memory_space<vmem>>, vector<128x256xbf16>
    %17 = arith.truncf %15 : vector<256x512xf32> to vector<256x512xbf16>
    %cst_14 = arith.constant dense<0.000000e+00> : vector<128x512xf32>
    %18 = tpu.matmul %16, %17, %cst_14 {dimension_numbers = #tpu.dot_dimension_numbers<[1], [0], [0], [1], [0, 0, 1, 1], [], []>} : vector<128x256xbf16>, vector<256x512xbf16>, vector<128x512xf32> -> vector<128x512xf32>
    %c0_15 = arith.constant 0 : index
    %c0_16 = arith.constant 0 : index
    %19 = vector.load %arg7[%c0_15, %c0_16] : memref<128x1xf32, #tpu.memory_space<vmem>>, vector<128x1xf32>
    %20 = vector.broadcast %19 : vector<128x1xf32> to vector<128x512xf32>
    %21 = arith.addf %18, %20 : vector<128x512xf32>
    %cst_17 = arith.constant 0.000000e+00 : f32
    %22 = vector.broadcast %cst_17 : f32 to vector<128x512xf32>
    %23 = arith.maximumf %21, %22 : vector<128x512xf32>
    %c0_18 = arith.constant 0 : index
    %c0_19 = arith.constant 0 : index
    %24 = vector.load %arg8[%c0_18, %c0_19] : memref<128x1xf32, #tpu.memory_space<vmem>>, vector<128x1xf32>
    %25 = vector.broadcast %24 : vector<128x1xf32> to vector<128x512xf32>
    %26 = arith.mulf %23, %25 : vector<128x512xf32>
    %cst_20 = arith.constant dense<0.000000e+00> : vector<512xf32>
    %27 = vector.multi_reduction <add>, %26, %cst_20 [0] : vector<128x512xf32> to vector<512xf32>
    %28 = vector.shape_cast %27 : vector<512xf32> to vector<1x512xf32>
    %c0_21 = arith.constant 0 : index
    %c0_22 = arith.constant 0 : index
    %29 = vector.load %arg9[%c0_21, %c0_22] : memref<1x1xf32, #tpu.memory_space<vmem>>, vector<1x1xf32>
    %30 = vector.broadcast %29 : vector<1x1xf32> to vector<1x512xf32>
    %31 = arith.addf %28, %30 : vector<1x512xf32>
    %c0_23 = arith.constant 0 : index
    %c0_24 = arith.constant 0 : index
    %32 = vector.load %arg10[%c0_23, %c0_24] : memref<1x512xf32, #tpu.memory_space<vmem>>, vector<1x512xf32>
    tpu.vector_store %arg10[%c0_23, %c0_24], %31 {strides = array<i32>} : memref<1x512xf32, #tpu.memory_space<vmem>>, vector<1x512xf32>,
    return
  }
  func.func @transform_0(%arg0: i32) -> (i32, i32) {
    %c0_i32 = arith.constant 0 : i32
    %c0_i32_0 = arith.constant 0 : i32
    return %c0_i32, %arg0 : i32, i32
  }
  func.func @transform_1(%arg0: i32) -> (i32, i32) {
    %c0_i32 = arith.constant 0 : i32
    %c0_i32_0 = arith.constant 0 : i32
    %c0_i32_1 = arith.constant 0 : i32
    return %c0_i32, %c0_i32_0 : i32, i32
  }
  func.func @transform_2(%arg0: i32) -> (i32, i32) {
    %c0_i32 = arith.constant 0 : i32
    %c0_i32_0 = arith.constant 0 : i32
    %c0_i32_1 = arith.constant 0 : i32
    return %c0_i32, %c0_i32_0 : i32, i32
  }
  func.func @transform_3(%arg0: i32) -> (i32, i32) {
    %c0_i32 = arith.constant 0 : i32
    %c0_i32_0 = arith.constant 0 : i32
    %c0_i32_1 = arith.constant 0 : i32
    return %c0_i32, %c0_i32_0 : i32, i32
  }
  func.func @transform_4(%arg0: i32) -> (i32, i32) {
    %c0_i32 = arith.constant 0 : i32
    %c0_i32_0 = arith.constant 0 : i32
    %c0_i32_1 = arith.constant 0 : i32
    return %c0_i32, %c0_i32_0 : i32, i32
  }
  func.func @transform_5(%arg0: i32) -> (i32, i32) {
    %c0_i32 = arith.constant 0 : i32
    %c0_i32_0 = arith.constant 0 : i32
    %c0_i32_1 = arith.constant 0 : i32
    return %c0_i32, %c0_i32_0 : i32, i32
  }
  func.func @transform_6(%arg0: i32) -> (i32, i32) {
    %c0_i32 = arith.constant 0 : i32
    %c0_i32_0 = arith.constant 0 : i32
    %c0_i32_1 = arith.constant 0 : i32
    return %c0_i32, %c0_i32_0 : i32, i32
  }
  func.func @transform_7(%arg0: i32) -> (i32, i32) {
    %c0_i32 = arith.constant 0 : i32
    %c0_i32_0 = arith.constant 0 : i32
    %c0_i32_1 = arith.constant 0 : i32
    return %c0_i32, %c0_i32_0 : i32, i32
  }
  func.func @transform_8(%arg0: i32) -> (i32, i32) {
    %c0_i32 = arith.constant 0 : i32
    %c0_i32_0 = arith.constant 0 : i32
    %c0_i32_1 = arith.constant 0 : i32
    return %c0_i32, %c0_i32_0 : i32, i32
  }
  func.func @transform_9(%arg0: i32) -> (i32, i32) {
    %c0_i32 = arith.constant 0 : i32
    %c0_i32_0 = arith.constant 0 : i32
    return %c0_i32, %arg0 : i32, i32
  }
}

</mosaic_0001>

<llo_original>
// kernel: revival_dnn_forward.1
$region0: #{revival_dnn_forward.1}
  #allocation0 [shape = 'u32[]', space=smem, size = 0x4, offset = 0x4, fixed_abs, tag = 'smem constant byte address 0x4 - core index']
  #allocation1 [shape = 'u32[144,128]{1,0:T(1,128)}', space=vmem, size = 0x12000, scoped, tag = 'internal scratch']
  #allocation2 [shape = 'f32[1,1]{1,0:T(1,128)S(1)}', space=vmem, size = 0x200, scoped, tag = 'scoped memory for revival_dnn_forward.1']
  %s0 = inlined_call_operand.vmem [shape: bf16[8,1024], index: 0, kind: input, shape index: {}]
  %s1 = inlined_call_operand.vmem [shape: bf16[512,8], index: 1, kind: input, shape index: {}]
  %s2 = inlined_call_operand.vmem [shape: f32[512,1], index: 2, kind: input, shape index: {}]
  %s3 = inlined_call_operand.vmem [shape: bf16[256,512], index: 3, kind: input, shape index: {}]
  %s4 = inlined_call_operand.vmem [shape: f32[256,1], index: 4, kind: input, shape index: {}]
  %s5 = inlined_call_operand.vmem [shape: bf16[128,256], index: 5, kind: input, shape index: {}]
  %s6 = inlined_call_operand.vmem [shape: f32[128,1], index: 6, kind: input, shape index: {}]
  %s7 = inlined_call_operand.vmem [shape: f32[128,1], index: 7, kind: input, shape index: {}]
  %s8 = inlined_call_operand.<no memory space> [shape: f32[1,1], index: 8, kind: input, shape index: {}]
  %s9 = inlined_call_operand.vmem [shape: f32[1,1024], index: 9, kind: output, shape index: {}]
  %s10 = sld [smem:[#allocation0]]
  $region69: #{revival_dnn_forward.1} parent=0
    _
  %s12 = ssub.s32 1, %s10
  %s13 = scalar_select 0, %s12, %s10
  %v14 = vstv %s8
  %15 = vst [vmem:[#allocation2] sm:$0x1] %v14
  loop: start=0, step=1, limit=4
  $region2: #{revival_dnn_forward.1} parent=0 // loop_pre_header
    _
  $region3: #{revival_dnn_forward.1} parent=0 // loop_header
    %s17 = sphi 0, %s21
    %p18 = scmp.ge.s32.totalorder %s17, 4
    %s27 = sphi 0, %s29
    %s30 = sphi 0, %s27
    %s31 = sphi 0, %s30
    %s47 = sphi 0, %s31
    %s51 = sphi 0, %s51
    %s53 = sphi 0, %s51
    %s54 = sphi 0, %s53
    %s68 = sphi 0, %s54
    %s72 = sphi 0, %s72
    %s74 = sphi 0, %s72
    %s75 = sphi 0, %s74
    %s89 = sphi 0, %s75
    %s93 = sphi 0, %s93
    %s95 = sphi 0, %s93
    %s96 = sphi 0, %s95
    %s110 = sphi 0, %s96
    %s114 = sphi 0, %s114
    %s116 = sphi 0, %s114
    %s117 = sphi 0, %s116
    %s131 = sphi 0, %s117
    %s135 = sphi 0, %s135
    %s137 = sphi 0, %s135
    %s138 = sphi 0, %s137
    %s152 = sphi 0, %s138
    %s156 = sphi 0, %s156
    %s158 = sphi 0, %s156
    %s159 = sphi 0, %s158
    %s173 = sphi 0, %s159
    %s177 = sphi 0, %s177
    %s179 = sphi 0, %s177
    %s180 = sphi 0, %s179
    %s194 = sphi 0, %s180
    %s198 = sphi 0, %s198
    %s200 = sphi 0, %s198
    %s201 = sphi 0, %s200
    %s215 = sphi 0, %s201
    %s221 = sphi 0, %s223
    %s224 = sphi 0, %s221
    %s225 = sphi 0, %s224
    %s241 = sphi 0, %s225
  $region4: #{revival_dnn_forward.1} parent=0 // loop_header_branch
    %20 = sbr.rel (%p18) target = $region8
  $region5: #{revival_dnn_forward.1} parent=0 // loop_body
    %s22 = ssub.s32 %s17, 1
    %s23 = ssub.s32 %s17, 2
    %s24 = sadd.s32 %s17, 1
    %s25 = ssub.s32 %s17, %s24
    %p26 = scmp.eq.s32.totalorder %s25, 0
    %s28 = sadd.s32 %s27, 1
    %s29 = scalar_select %p26, %s27, %s28
    %p32 = pneg %p26
    %p33 = scmp.eq.s32.totalorder %s17, 1
    %p34 = por %p32, %p33
    %p35 = scmp.ne.s32.totalorder %s27, %s30
    %p36 = scmp.eq.s32.totalorder %s17, 0
    %p37 = por %p35, %p36
    %p38 = scmp.ne.s32.totalorder %s27, %s30
    %p39 = scmp.eq.s32.totalorder %s22, 1
    %p40 = por %p38, %p39
    %p41 = scmp.ne.s32.totalorder %s30, %s31
    %p42 = scmp.eq.s32.totalorder %s22, 0
    %p43 = por %p41, %p42
    %p44 = scmp.ne.s32.totalorder %s30, %s31
    %p45 = scmp.eq.s32.totalorder %s23, 1
    %p46 = por %p44, %p45
    %p48 = scmp.ne.s32.totalorder %s31, %s47
    %p49 = scmp.eq.s32.totalorder %s23, 0
    %p50 = por %p48, %p49
    %s52 = sadd.s32 %s51, 1
    %p55 = scmp.eq.s32.totalorder %s17, 1
    %p56 = scmp.ne.s32.totalorder %s51, %s53
    %p57 = scmp.eq.s32.totalorder %s17, 0
    %p58 = por %p56, %p57
    %p59 = scmp.ne.s32.totalorder %s51, %s53
    %p60 = scmp.eq.s32.totalorder %s22, 1
    %p61 = por %p59, %p60
    %p62 = scmp.ne.s32.totalorder %s53, %s54
    %p63 = scmp.eq.s32.totalorder %s22, 0
    %p64 = por %p62, %p63
    %p65 = scmp.ne.s32.totalorder %s53, %s54
    %p66 = scmp.eq.s32.totalorder %s23, 1
    %p67 = por %p65, %p66
    %p69 = scmp.ne.s32.totalorder %s54, %s68
    %p70 = scmp.eq.s32.totalorder %s23, 0
    %p71 = por %p69, %p70
    %s73 = sadd.s32 %s72, 1
    %p76 = scmp.eq.s32.totalorder %s17, 1
    %p77 = scmp.ne.s32.totalorder %s72, %s74
    %p78 = scmp.eq.s32.totalorder %s17, 0
    %p79 = por %p77, %p78
    %p80 = scmp.ne.s32.totalorder %s72, %s74
    %p81 = scmp.eq.s32.totalorder %s22, 1
    %p82 = por %p80, %p81
    %p83 = scmp.ne.s32.totalorder %s74, %s75
    %p84 = scmp.eq.s32.totalorder %s22, 0
    %p85 = por %p83, %p84
    %p86 = scmp.ne.s32.totalorder %s74, %s75
    %p87 = scmp.eq.s32.totalorder %s23, 1
    %p88 = por %p86, %p87
    %p90 = scmp.ne.s32.totalorder %s75, %s89
    %p91 = scmp.eq.s32.totalorder %s23, 0
    %p92 = por %p90, %p91
    %s94 = sadd.s32 %s93, 1
    %p97 = scmp.eq.s32.totalorder %s17, 1
    %p98 = scmp.ne.s32.totalorder %s93, %s95
    %p99 = scmp.eq.s32.totalorder %s17, 0
    %p100 = por %p98, %p99
    %p101 = scmp.ne.s32.totalorder %s93, %s95
    %p102 = scmp.eq.s32.totalorder %s22, 1
    %p103 = por %p101, %p102
    %p104 = scmp.ne.s32.totalorder %s95, %s96
    %p105 = scmp.eq.s32.totalorder %s22, 0
    %p106 = por %p104, %p105
    %p107 = scmp.ne.s32.totalorder %s95, %s96
    %p108 = scmp.eq.s32.totalorder %s23, 1
    %p109 = por %p107, %p108
    %p111 = scmp.ne.s32.totalorder %s96, %s110
    %p112 = scmp.eq.s32.totalorder %s23, 0
    %p113 = por %p111, %p112
    %s115 = sadd.s32 %s114, 1
    %p118 = scmp.eq.s32.totalorder %s17, 1
    %p119 = scmp.ne.s32.totalorder %s114, %s116
    %p120 = scmp.eq.s32.totalorder %s17, 0
    %p121 = por %p119, %p120
    %p122 = scmp.ne.s32.totalorder %s114, %s116
    %p123 = scmp.eq.s32.totalorder %s22, 1
    %p124 = por %p122, %p123
    %p125 = scmp.ne.s32.totalorder %s116, %s117
    %p126 = scmp.eq.s32.totalorder %s22, 0
    %p127 = por %p125, %p126
    %p128 = scmp.ne.s32.totalorder %s116, %s117
    %p129 = scmp.eq.s32.totalorder %s23, 1
    %p130 = por %p128, %p129
    %p132 = scmp.ne.s32.totalorder %s117, %s131
    %p133 = scmp.eq.s32.totalorder %s23, 0
    %p134 = por %p132, %p133
    %s136 = sadd.s32 %s135, 1
    %p139 = scmp.eq.s32.totalorder %s17, 1
    %p140 = scmp.ne.s32.totalorder %s135, %s137
    %p141 = scmp.eq.s32.totalorder %s17, 0
    %p142 = por %p140, %p141
    %p143 = scmp.ne.s32.totalorder %s135, %s137
    %p144 = scmp.eq.s32.totalorder %s22, 1
    %p145 = por %p143, %p144
    %p146 = scmp.ne.s32.totalorder %s137, %s138
    %p147 = scmp.eq.s32.totalorder %s22, 0
    %p148 = por %p146, %p147
    %p149 = scmp.ne.s32.totalorder %s137, %s138
    %p150 = scmp.eq.s32.totalorder %s23, 1
    %p151 = por %p149, %p150
    %p153 = scmp.ne.s32.totalorder %s138, %s152
    %p154 = scmp.eq.s32.totalorder %s23, 0
    %p155 = por %p153, %p154
    %s157 = sadd.s32 %s156, 1
    %p160 = scmp.eq.s32.totalorder %s17, 1
    %p161 = scmp.ne.s32.totalorder %s156, %s158
    %p162 = scmp.eq.s32.totalorder %s17, 0
    %p163 = por %p161, %p162
    %p164 = scmp.ne.s32.totalorder %s156, %s158
    %p165 = scmp.eq.s32.totalorder %s22, 1
    %p166 = por %p164, %p165
    %p167 = scmp.ne.s32.totalorder %s158, %s159
    %p168 = scmp.eq.s32.totalorder %s22, 0
    %p169 = por %p167, %p168
    %p170 = scmp.ne.s32.totalorder %s158, %s159
    %p171 = scmp.eq.s32.totalorder %s23, 1
    %p172 = por %p170, %p171
    %p174 = scmp.ne.s32.totalorder %s159, %s173
    %p175 = scmp.eq.s32.totalorder %s23, 0
    %p176 = por %p174, %p175
    %s178 = sadd.s32 %s177, 1
    %p181 = scmp.eq.s32.totalorder %s17, 1
    %p182 = scmp.ne.s32.totalorder %s177, %s179
    %p183 = scmp.eq.s32.totalorder %s17, 0
    %p184 = por %p182, %p183
    %p185 = scmp.ne.s32.totalorder %s177, %s179
    %p186 = scmp.eq.s32.totalorder %s22, 1
    %p187 = por %p185, %p186
    %p188 = scmp.ne.s32.totalorder %s179, %s180
    %p189 = scmp.eq.s32.totalorder %s22, 0
    %p190 = por %p188, %p189
    %p191 = scmp.ne.s32.totalorder %s179, %s180
    %p192 = scmp.eq.s32.totalorder %s23, 1
    %p193 = por %p191, %p192
    %p195 = scmp.ne.s32.totalorder %s180, %s194
    %p196 = scmp.eq.s32.totalorder %s23, 0
    %p197 = por %p195, %p196
    %s199 = sadd.s32 %s198, 1
    %p202 = scmp.eq.s32.totalorder %s17, 1
    %p203 = scmp.ne.s32.totalorder %s198, %s200
    %p204 = scmp.eq.s32.totalorder %s17, 0
    %p205 = por %p203, %p204
    %p206 = scmp.ne.s32.totalorder %s198, %s200
    %p207 = scmp.eq.s32.totalorder %s22, 1
    %p208 = por %p206, %p207
    %p209 = scmp.ne.s32.totalorder %s200, %s201
    %p210 = scmp.eq.s32.totalorder %s22, 0
    %p211 = por %p209, %p210
    %p212 = scmp.ne.s32.totalorder %s200, %s201
    %p213 = scmp.eq.s32.totalorder %s23, 1
    %p214 = por %p212, %p213
    %p216 = scmp.ne.s32.totalorder %s201, %s215
    %p217 = scmp.eq.s32.totalorder %s23, 0
    %p218 = por %p216, %p217
    %s219 = ssub.s32 %s17, %s24
    %p220 = scmp.eq.s32.totalorder %s219, 0
    %s222 = sadd.s32 %s221, 1
    %s223 = scalar_select %p220, %s221, %s222
    %p226 = pneg %p220
    %p227 = scmp.eq.s32.totalorder %s17, 1
    %p228 = por %p226, %p227
    %p229 = scmp.ne.s32.totalorder %s221, %s224
    %p230 = scmp.eq.s32.totalorder %s17, 0
    %p231 = por %p229, %p230
    %p232 = scmp.ne.s32.totalorder %s221, %s224
    %p233 = scmp.eq.s32.totalorder %s22, 1
    %p234 = por %p232, %p233
    %p235 = scmp.ne.s32.totalorder %s224, %s225
    %p236 = scmp.eq.s32.totalorder %s22, 0
    %p237 = por %p235, %p236
    %p238 = scmp.ne.s32.totalorder %s224, %s225
    %p239 = scmp.eq.s32.totalorder %s23, 1
    %p240 = por %p238, %p239
    %p242 = scmp.ne.s32.totalorder %s225, %s241
    %p243 = scmp.eq.s32.totalorder %s23, 0
    %p244 = por %p242, %p243
    %p245 = scmp.le.s32.totalorder 1, %s17
    %p246 = scmp.lt.s32.totalorder %s17, 3
    %p247 = pnand %p245, %p246
    %p248 = pneg %p247
    // Predicated region
    $region9: #{revival_dnn_forward.1} parent=5 // pred_check
      _
    $region10: #{revival_dnn_forward.1} parent=5 // pred_check_branch
      %250 = sbr.rel (%p247) target = $region12
    $region11: #{revival_dnn_forward.1} parent=5 // pred_region
      %s251 = ssub.s32 %s17, 1
      // Predicated region
      $region13: #{revival_dnn_forward.1} parent=11 // pred_check
        %p252 = pneg %p64
      $region14: #{revival_dnn_forward.1} parent=11 // pred_check_branch
        %254 = sbr.rel (%p252) target = $region16
      $region15: #{revival_dnn_forward.1} parent=11 // pred_region
        _
      $region16: #{revival_dnn_forward.1} parent=11 // pred_fallthru
        _
      // Predicated region
      $region17: #{revival_dnn_forward.1} parent=11 // pred_check
        %p255 = pneg %p85
      $region18: #{revival_dnn_forward.1} parent=11 // pred_check_branch
        %257 = sbr.rel (%p255) target = $region20
      $region19: #{revival_dnn_forward.1} parent=11 // pred_region
        _
      $region20: #{revival_dnn_forward.1} parent=11 // pred_fallthru
        _
      // Predicated region
      $region21: #{revival_dnn_forward.1} parent=11 // pred_check
        %p258 = pneg %p106
      $region22: #{revival_dnn_forward.1} parent=11 // pred_check_branch
        %260 = sbr.rel (%p258) target = $region24
      $region23: #{revival_dnn_forward.1} parent=11 // pred_region
        _
      $region24: #{revival_dnn_forward.1} parent=11 // pred_fallthru
        _
      // Predicated region
      $region25: #{revival_dnn_forward.1} parent=11 // pred_check
        %p261 = pneg %p127
      $region26: #{revival_dnn_forward.1} parent=11 // pred_check_branch
        %263 = sbr.rel (%p261) target = $region28
      $region27: #{revival_dnn_forward.1} parent=11 // pred_region
        _
      $region28: #{revival_dnn_forward.1} parent=11 // pred_fallthru
        _
      // Predicated region
      $region29: #{revival_dnn_forward.1} parent=11 // pred_check
        %p264 = pneg %p148
      $region30: #{revival_dnn_forward.1} parent=11 // pred_check_branch
        %266 = sbr.rel (%p264) target = $region32
      $region31: #{revival_dnn_forward.1} parent=11 // pred_region
        _
      $region32: #{revival_dnn_forward.1} parent=11 // pred_fallthru
        _
      // Predicated region
      $region33: #{revival_dnn_forward.1} parent=11 // pred_check
        %p267 = pneg %p169
      $region34: #{revival_dnn_forward.1} parent=11 // pred_check_branch
        %269 = sbr.rel (%p267) target = $region36
      $region35: #{revival_dnn_forward.1} parent=11 // pred_region
        _
      $region36: #{revival_dnn_forward.1} parent=11 // pred_fallthru
        _
      // Predicated region
      $region37: #{revival_dnn_forward.1} parent=11 // pred_check
        %p270 = pneg %p190
      $region38: #{revival_dnn_forward.1} parent=11 // pred_check_branch
        %272 = sbr.rel (%p270) target = $region40
      $region39: #{revival_dnn_forward.1} parent=11 // pred_region
        _
      $region40: #{revival_dnn_forward.1} parent=11 // pred_fallthru
        _
      // Predicated region
      $region41: #{revival_dnn_forward.1} parent=11 // pred_check
        %p273 = pneg %p211
      $region42: #{revival_dnn_forward.1} parent=11 // pred_check_branch
        %275 = sbr.rel (%p273) target = $region44
      $region43: #{revival_dnn_forward.1} parent=11 // pred_region
        _
      $region44: #{revival_dnn_forward.1} parent=11 // pred_fallthru
        _
    $region12: #{revival_dnn_forward.1} parent=5 // pred_fallthru
      _
    %p276 = scmp.lt.s32.totalorder %s17, 2
    // Predicated region
    $region45: #{revival_dnn_forward.1} parent=5 // pred_check
      %p277 = pneg %p276
    $region46: #{revival_dnn_forward.1} parent=5 // pred_check_branch
      %279 = sbr.rel (%p277) target = $region48
    $region47: #{revival_dnn_forward.1} parent=5 // pred_region
      // Predicated region
      $region49: #{revival_dnn_forward.1} parent=47 // pred_check
        %p280 = pneg %p37
      $region50: #{revival_dnn_forward.1} parent=47 // pred_check_branch
        %282 = sbr.rel (%p280) target = $region52
      $region51: #{revival_dnn_forward.1} parent=47 // pred_region
        %s283 = smul.u32 4, %s17
        %p284 = scmp.lt.s32.totalorder %s283, 7
        %s285 = scalar_select %p284, %s283, 7
        %s286 = smul.addr %s285, 4
        %s287 = scalar_lea.vmem %s0, %s286
        %s288 = smul.u32 4, %s17
      $region52: #{revival_dnn_forward.1} parent=47 // pred_fallthru
        _
    $region48: #{revival_dnn_forward.1} parent=5 // pred_fallthru
      _
    %p289 = scmp.le.s32.totalorder 1, %s17
    %p290 = scmp.lt.s32.totalorder %s17, 3
    %p291 = pnand %p289, %p290
    %p292 = pneg %p291
    // Predicated region
    $region53: #{revival_dnn_forward.1} parent=5 // pred_check
      _
    $region54: #{revival_dnn_forward.1} parent=5 // pred_check_branch
      %294 = sbr.rel (%p291) target = $region56
    $region55: #{revival_dnn_forward.1} parent=5 // pred_region
      %s295 = ssub.s32 %s17, 1
      %s296 = smul.u32 4, %s22
      %p297 = scmp.lt.s32.totalorder %s296, 7
      %s298 = scalar_select %p297, %s296, 7
      %s299 = smul.addr %s298, 4
      %s300 = scalar_lea.vmem %s0, %s299
      %p301 = pneg %p43
      %p302 = pneg %p40
      %p303 = pneg %p64
      %p304 = pneg %p61
      %p305 = pneg %p85
      %p306 = pneg %p82
      %p307 = pneg %p106
      %p308 = pneg %p103
      %p309 = pneg %p127
      %p310 = pneg %p124
      %p311 = pneg %p148
      %p312 = pneg %p145
      %p313 = pneg %p169
      %p314 = pneg %p166
      %p315 = pneg %p190
      %p316 = pneg %p187
      %p317 = pneg %p211
      %p318 = pneg %p208
      %p319 = pneg %p237
      %p320 = pneg %p234
      %s321 = smul.u32 4, %s22
      %p322 = scmp.lt.s32.totalorder %s321, 7
      %s323 = scalar_select %p322, %s321, 7
      %s324 = scalar_lea.vmem %s9, %s323
      %s325 = smul.u32 4, %s22
      %p326 = scmp.lt.s32.totalorder %s325, 7
      %s327 = scalar_select %p326, %s325, 7
      %s328 = smul.addr %s327, 4
      %s329 = scalar_lea.vmem %s0, %s328
      %s330 = smul.u32 4, %s22
      %s331 = smul.u32 4, %s22
      %p332 = scmp.lt.s32.totalorder %s331, 7
      %s333 = scalar_select %p332, %s331, 7
      %s334 = scalar_lea.vmem %s9, %s333
      %s335 = smul.u32 4, %s22
      %v337 = vld [vmem:[%s329] sm:$0xff]
      %v338 = vld [vmem:[%s329 + $0x8] sm:$0xff]
      %v339 = vld [vmem:[%s1] sm:$0xf]
      %v340 = vld [vmem:[%s1 + $0x4] sm:$0xf]
      %v341 = vld [vmem:[%s1 + $0x8] sm:$0xf]
      %v342 = vld [vmem:[%s1 + $0xc] sm:$0xf]
      %v343 = vld [vmem:[%s1 + $0x10] sm:$0xf]
      %v344 = vld [vmem:[%s1 + $0x14] sm:$0xf]
      %v345 = vld [vmem:[%s1 + $0x18] sm:$0xf]
      %v346 = vld [vmem:[%s1 + $0x1c] sm:$0xf]
      %v347 = vld [vmem:[%s1 + $0x20] sm:$0xf]
      %v348 = vld [vmem:[%s1 + $0x24] sm:$0xf]
      %v349 = vld [vmem:[%s1 + $0x28] sm:$0xf]
      %v350 = vld [vmem:[%s1 + $0x2c] sm:$0xf]
      %v351 = vld [vmem:[%s1 + $0x30] sm:$0xf]
      %v352 = vld [vmem:[%s1 + $0x34] sm:$0xf]
      %v353 = vld [vmem:[%s1 + $0x38] sm:$0xf]
      %v354 = vld [vmem:[%s1 + $0x3c] sm:$0xf]
      %v355 = vld [vmem:[%s1 + $0x40] sm:$0xf]
      %v356 = vld [vmem:[%s1 + $0x44] sm:$0xf]
      %v357 = vld [vmem:[%s1 + $0x48] sm:$0xf]
      %v358 = vld [vmem:[%s1 + $0x4c] sm:$0xf]
      %v359 = vld [vmem:[%s1 + $0x50] sm:$0xf]
      %v360 = vld [vmem:[%s1 + $0x54] sm:$0xf]
      %v361 = vld [vmem:[%s1 + $0x58] sm:$0xf]
      %v362 = vld [vmem:[%s1 + $0x5c] sm:$0xf]
      %v363 = vld [vmem:[%s1 + $0x60] sm:$0xf]
      %v364 = vld [vmem:[%s1 + $0x64] sm:$0xf]
      %v365 = vld [vmem:[%s1 + $0x68] sm:$0xf]
      %v366 = vld [vmem:[%s1 + $0x6c] sm:$0xf]
      %v367 = vld [vmem:[%s1 + $0x70] sm:$0xf]
      %v368 = vld [vmem:[%s1 + $0x74] sm:$0xf]
      %v369 = vld [vmem:[%s1 + $0x78] sm:$0xf]
      %v370 = vld [vmem:[%s1 + $0x7c] sm:$0xf]
      %v371 = vld [vmem:[%s1 + $0x80] sm:$0xf]
      %v372 = vld [vmem:[%s1 + $0x84] sm:$0xf]
      %v373 = vld [vmem:[%s1 + $0x88] sm:$0xf]
      %v374 = vld [vmem:[%s1 + $0x8c] sm:$0xf]
      %v375 = vld [vmem:[%s1 + $0x90] sm:$0xf]
      %v376 = vld [vmem:[%s1 + $0x94] sm:$0xf]
      %v377 = vld [vmem:[%s1 + $0x98] sm:$0xf]
      %v378 = vld [vmem:[%s1 + $0x9c] sm:$0xf]
      %v379 = vld [vmem:[%s1 + $0xa0] sm:$0xf]
      %v380 = vld [vmem:[%s1 + $0xa4] sm:$0xf]
      %v381 = vld [vmem:[%s1 + $0xa8] sm:$0xf]
      %v382 = vld [vmem:[%s1 + $0xac] sm:$0xf]
      %v383 = vld [vmem:[%s1 + $0xb0] sm:$0xf]
      %v384 = vld [vmem:[%s1 + $0xb4] sm:$0xf]
      %v385 = vld [vmem:[%s1 + $0xb8] sm:$0xf]
      %v386 = vld [vmem:[%s1 + $0xbc] sm:$0xf]
      %v387 = vld [vmem:[%s1 + $0xc0] sm:$0xf]
      %v388 = vld [vmem:[%s1 + $0xc4] sm:$0xf]
      %v389 = vld [vmem:[%s1 + $0xc8] sm:$0xf]
      %v390 = vld [vmem:[%s1 + $0xcc] sm:$0xf]
      %v391 = vld [vmem:[%s1 + $0xd0] sm:$0xf]
      %v392 = vld [vmem:[%s1 + $0xd4] sm:$0xf]
      %v393 = vld [vmem:[%s1 + $0xd8] sm:$0xf]
      %v394 = vld [vmem:[%s1 + $0xdc] sm:$0xf]
      %v395 = vld [vmem:[%s1 + $0xe0] sm:$0xf]
      %v396 = vld [vmem:[%s1 + $0xe4] sm:$0xf]
      %v397 = vld [vmem:[%s1 + $0xe8] sm:$0xf]
      %v398 = vld [vmem:[%s1 + $0xec] sm:$0xf]
      %v399 = vld [vmem:[%s1 + $0xf0] sm:$0xf]
      %v400 = vld [vmem:[%s1 + $0xf4] sm:$0xf]
      %v401 = vld [vmem:[%s1 + $0xf8] sm:$0xf]
      %v402 = vld [vmem:[%s1 + $0xfc] sm:$0xf]
      %v403 = vld [vmem:[%s2] sm:$0xff]
      %v404 = vld [vmem:[%s2 + $0x8] sm:$0xff]
      %v405 = vld [vmem:[%s2 + $0x10] sm:$0xff]
      %v406 = vld [vmem:[%s2 + $0x18] sm:$0xff]
      %v407 = vld [vmem:[%s2 + $0x20] sm:$0xff]
      %v408 = vld [vmem:[%s2 + $0x28] sm:$0xff]
      %v409 = vld [vmem:[%s2 + $0x30] sm:$0xff]
      %v410 = vld [vmem:[%s2 + $0x38] sm:$0xff]
      %v411 = vld [vmem:[%s2 + $0x40] sm:$0xff]
      %v412 = vld [vmem:[%s2 + $0x48] sm:$0xff]
      %v413 = vld [vmem:[%s2 + $0x50] sm:$0xff]
      %v414 = vld [vmem:[%s2 + $0x58] sm:$0xff]
      %v415 = vld [vmem:[%s2 + $0x60] sm:$0xff]
      %v416 = vld [vmem:[%s2 + $0x68] sm:$0xff]
      %v417 = vld [vmem:[%s2 + $0x70] sm:$0xff]
      %v418 = vld [vmem:[%s2 + $0x78] sm:$0xff]
      %v419 = vld [vmem:[%s2 + $0x80] sm:$0xff]
      %v420 = vld [vmem:[%s2 + $0x88] sm:$0xff]
      %v421 = vld [vmem:[%s2 + $0x90] sm:$0xff]
      %v422 = vld [vmem:[%s2 + $0x98] sm:$0xff]
      %v423 = vld [vmem:[%s2 + $0xa0] sm:$0xff]
      %v424 = vld [vmem:[%s2 + $0xa8] sm:$0xff]
      %v425 = vld [vmem:[%s2 + $0xb0] sm:$0xff]
      %v426 = vld [vmem:[%s2 + $0xb8] sm:$0xff]
      %v427 = vld [vmem:[%s2 + $0xc0] sm:$0xff]
      %v428 = vld [vmem:[%s2 + $0xc8] sm:$0xff]
      %v429 = vld [vmem:[%s2 + $0xd0] sm:$0xff]
      %v430 = vld [vmem:[%s2 + $0xd8] sm:$0xff]
      %v431 = vld [vmem:[%s2 + $0xe0] sm:$0xff]
      %v432 = vld [vmem:[%s2 + $0xe8] sm:$0xff]
      %v433 = vld [vmem:[%s2 + $0xf0] sm:$0xff]
      %v434 = vld [vmem:[%s2 + $0xf8] sm:$0xff]
      %v435 = vld [vmem:[%s2 + $0x100] sm:$0xff]
      %v436 = vld [vmem:[%s2 + $0x108] sm:$0xff]
      %v437 = vld [vmem:[%s2 + $0x110] sm:$0xff]
      %v438 = vld [vmem:[%s2 + $0x118] sm:$0xff]
      %v439 = vld [vmem:[%s2 + $0x120] sm:$0xff]
      %v440 = vld [vmem:[%s2 + $0x128] sm:$0xff]
      %v441 = vld [vmem:[%s2 + $0x130] sm:$0xff]
      %v442 = vld [vmem:[%s2 + $0x138] sm:$0xff]
      %v443 = vld [vmem:[%s2 + $0x140] sm:$0xff]
      %v444 = vld [vmem:[%s2 + $0x148] sm:$0xff]
      %v445 = vld [vmem:[%s2 + $0x150] sm:$0xff]
      %v446 = vld [vmem:[%s2 + $0x158] sm:$0xff]
      %v447 = vld [vmem:[%s2 + $0x160] sm:$0xff]
      %v448 = vld [vmem:[%s2 + $0x168] sm:$0xff]
      %v449 = vld [vmem:[%s2 + $0x170] sm:$0xff]
      %v450 = vld [vmem:[%s2 + $0x178] sm:$0xff]
      %v451 = vld [vmem:[%s2 + $0x180] sm:$0xff]
      %v452 = vld [vmem:[%s2 + $0x188] sm:$0xff]
      %v453 = vld [vmem:[%s2 + $0x190] sm:$0xff]
      %v454 = vld [vmem:[%s2 + $0x198] sm:$0xff]
      %v455 = vld [vmem:[%s2 + $0x1a0] sm:$0xff]
      %v456 = vld [vmem:[%s2 + $0x1a8] sm:$0xff]
      %v457 = vld [vmem:[%s2 + $0x1b0] sm:$0xff]
      %v458 = vld [vmem:[%s2 + $0x1b8] sm:$0xff]
      %v459 = vld [vmem:[%s2 + $0x1c0] sm:$0xff]
      %v460 = vld [vmem:[%s2 + $0x1c8] sm:$0xff]
      %v461 = vld [vmem:[%s2 + $0x1d0] sm:$0xff]
      %v462 = vld [vmem:[%s2 + $0x1d8] sm:$0xff]
      %v463 = vld [vmem:[%s2 + $0x1e0] sm:$0xff]
      %v464 = vld [vmem:[%s2 + $0x1e8] sm:$0xff]
      %v465 = vld [vmem:[%s2 + $0x1f0] sm:$0xff]
      %v466 = vld [vmem:[%s2 + $0x1f8] sm:$0xff]
      %468 = vset.pattern.permute.xlu0 0
      %469 = vperm.xlu0 %468, %v403
      %v470 = vpop.permute.xlu0 %469
      %473 = vset.pattern.permute.xlu0 0
      %474 = vperm.xlu0 %473, %v404
      %v475 = vpop.permute.xlu0 %474
      %478 = vset.pattern.permute.xlu0 0
      %479 = vperm.xlu0 %478, %v405
      %v480 = vpop.permute.xlu0 %479
      %483 = vset.pattern.permute.xlu0 0
      %484 = vperm.xlu0 %483, %v406
      %v485 = vpop.permute.xlu0 %484
      %488 = vset.pattern.permute.xlu0 0
      %489 = vperm.xlu0 %488, %v407
      %v490 = vpop.permute.xlu0 %489
      %493 = vset.pattern.permute.xlu0 0
      %494 = vperm.xlu0 %493, %v408
      %v495 = vpop.permute.xlu0 %494
      %498 = vset.pattern.permute.xlu0 0
      %499 = vperm.xlu0 %498, %v409
      %v500 = vpop.permute.xlu0 %499
      %503 = vset.pattern.permute.xlu0 0
      %504 = vperm.xlu0 %503, %v410
      %v505 = vpop.permute.xlu0 %504
      %508 = vset.pattern.permute.xlu0 0
      %509 = vperm.xlu0 %508, %v411
      %v510 = vpop.permute.xlu0 %509
      %513 = vset.pattern.permute.xlu0 0
      %514 = vperm.xlu0 %513, %v412
      %v515 = vpop.permute.xlu0 %514
      %518 = vset.pattern.permute.xlu0 0
      %519 = vperm.xlu0 %518, %v413
      %v520 = vpop.permute.xlu0 %519
      %523 = vset.pattern.permute.xlu0 0
      %524 = vperm.xlu0 %523, %v414
      %v525 = vpop.permute.xlu0 %524
      %528 = vset.pattern.permute.xlu0 0
      %529 = vperm.xlu0 %528, %v415
      %v530 = vpop.permute.xlu0 %529
      %533 = vset.pattern.permute.xlu0 0
      %534 = vperm.xlu0 %533, %v416
      %v535 = vpop.permute.xlu0 %534
      %538 = vset.pattern.permute.xlu0 0
      %539 = vperm.xlu0 %538, %v417
      %v540 = vpop.permute.xlu0 %539
      %543 = vset.pattern.permute.xlu0 0
      %544 = vperm.xlu0 %543, %v418
      %v545 = vpop.permute.xlu0 %544
      %548 = vset.pattern.permute.xlu0 0
      %549 = vperm.xlu0 %548, %v419
      %v550 = vpop.permute.xlu0 %549
      %553 = vset.pattern.permute.xlu0 0
      %554 = vperm.xlu0 %553, %v420
      %v555 = vpop.permute.xlu0 %554
      %558 = vset.pattern.permute.xlu0 0
      %559 = vperm.xlu0 %558, %v421
      %v560 = vpop.permute.xlu0 %559
      %563 = vset.pattern.permute.xlu0 0
      %564 = vperm.xlu0 %563, %v422
      %v565 = vpop.permute.xlu0 %564
      %568 = vset.pattern.permute.xlu0 0
      %569 = vperm.xlu0 %568, %v423
      %v570 = vpop.permute.xlu0 %569
      %573 = vset.pattern.permute.xlu0 0
      %574 = vperm.xlu0 %573, %v424
      %v575 = vpop.permute.xlu0 %574
      %578 = vset.pattern.permute.xlu0 0
      %579 = vperm.xlu0 %578, %v425
      %v580 = vpop.permute.xlu0 %579
      %583 = vset.pattern.permute.xlu0 0
      %584 = vperm.xlu0 %583, %v426
      %v585 = vpop.permute.xlu0 %584
      %588 = vset.pattern.permute.xlu0 0
      %589 = vperm.xlu0 %588, %v427
      %v590 = vpop.permute.xlu0 %589
      %593 = vset.pattern.permute.xlu0 0
      %594 = vperm.xlu0 %593, %v428
      %v595 = vpop.permute.xlu0 %594
      %598 = vset.pattern.permute.xlu0 0
      %599 = vperm.xlu0 %598, %v429
      %v600 = vpop.permute.xlu0 %599
      %603 = vset.pattern.permute.xlu0 0
      %604 = vperm.xlu0 %603, %v430
      %v605 = vpop.permute.xlu0 %604
      %608 = vset.pattern.permute.xlu0 0
      %609 = vperm.xlu0 %608, %v431
      %v610 = vpop.permute.xlu0 %609
      %613 = vset.pattern.permute.xlu0 0
      %614 = vperm.xlu0 %613, %v432
      %v615 = vpop.permute.xlu0 %614
      %618 = vset.pattern.permute.xlu0 0
      %619 = vperm.xlu0 %618, %v433
      %v620 = vpop.permute.xlu0 %619
      %623 = vset.pattern.permute.xlu0 0
      %624 = vperm.xlu0 %623, %v434
      %v625 = vpop.permute.xlu0 %624
      %628 = vset.pattern.permute.xlu0 0
      %629 = vperm.xlu0 %628, %v435
      %v630 = vpop.permute.xlu0 %629
      %633 = vset.pattern.permute.xlu0 0
      %634 = vperm.xlu0 %633, %v436
      %v635 = vpop.permute.xlu0 %634
      %638 = vset.pattern.permute.xlu0 0
      %639 = vperm.xlu0 %638, %v437
      %v640 = vpop.permute.xlu0 %639
      %643 = vset.pattern.permute.xlu0 0
      %644 = vperm.xlu0 %643, %v438
      %v645 = vpop.permute.xlu0 %644
      %648 = vset.pattern.permute.xlu0 0
      %649 = vperm.xlu0 %648, %v439
      %v650 = vpop.permute.xlu0 %649
      %653 = vset.pattern.permute.xlu0 0
      %654 = vperm.xlu0 %653, %v440
      %v655 = vpop.permute.xlu0 %654
      %658 = vset.pattern.permute.xlu0 0
      %659 = vperm.xlu0 %658, %v441
      %v660 = vpop.permute.xlu0 %659
      %663 = vset.pattern.permute.xlu0 0
      %664 = vperm.xlu0 %663, %v442
      %v665 = vpop.permute.xlu0 %664
      %668 = vset.pattern.permute.xlu0 0
      %669 = vperm.xlu0 %668, %v443
      %v670 = vpop.permute.xlu0 %669
      %673 = vset.pattern.permute.xlu0 0
      %674 = vperm.xlu0 %673, %v444
      %v675 = vpop.permute.xlu0 %674
      %678 = vset.pattern.permute.xlu0 0
      %679 = vperm.xlu0 %678, %v445
      %v680 = vpop.permute.xlu0 %679
      %683 = vset.pattern.permute.xlu0 0
      %684 = vperm.xlu0 %683, %v446
      %v685 = vpop.permute.xlu0 %684
      %688 = vset.pattern.permute.xlu0 0
      %689 = vperm.xlu0 %688, %v447
      %v690 = vpop.permute.xlu0 %689
      %693 = vset.pattern.permute.xlu0 0
      %694 = vperm.xlu0 %693, %v448
      %v695 = vpop.permute.xlu0 %694
      %698 = vset.pattern.permute.xlu0 0
      %699 = vperm.xlu0 %698, %v449
      %v700 = vpop.permute.xlu0 %699
      %703 = vset.pattern.permute.xlu0 0
      %704 = vperm.xlu0 %703, %v450
      %v705 = vpop.permute.xlu0 %704
      %708 = vset.pattern.permute.xlu0 0
      %709 = vperm.xlu0 %708, %v451
      %v710 = vpop.permute.xlu0 %709
      %713 = vset.pattern.permute.xlu0 0
      %714 = vperm.xlu0 %713, %v452
      %v715 = vpop.permute.xlu0 %714
      %718 = vset.pattern.permute.xlu0 0
      %719 = vperm.xlu0 %718, %v453
      %v720 = vpop.permute.xlu0 %719
      %723 = vset.pattern.permute.xlu0 0
      %724 = vperm.xlu0 %723, %v454
      %v725 = vpop.permute.xlu0 %724
      %728 = vset.pattern.permute.xlu0 0
      %729 = vperm.xlu0 %728, %v455
      %v730 = vpop.permute.xlu0 %729
      %733 = vset.pattern.permute.xlu0 0
      %734 = vperm.xlu0 %733, %v456
      %v735 = vpop.permute.xlu0 %734
      %738 = vset.pattern.permute.xlu0 0
      %739 = vperm.xlu0 %738, %v457
      %v740 = vpop.permute.xlu0 %739
      %743 = vset.pattern.permute.xlu0 0
      %744 = vperm.xlu0 %743, %v458
      %v745 = vpop.permute.xlu0 %744
      %748 = vset.pattern.permute.xlu0 0
      %749 = vperm.xlu0 %748, %v459
      %v750 = vpop.permute.xlu0 %749
      %753 = vset.pattern.permute.xlu0 0
      %754 = vperm.xlu0 %753, %v460
      %v755 = vpop.permute.xlu0 %754
      %758 = vset.pattern.permute.xlu0 0
      %759 = vperm.xlu0 %758, %v461
      %v760 = vpop.permute.xlu0 %759
      %763 = vset.pattern.permute.xlu0 0
      %764 = vperm.xlu0 %763, %v462
      %v765 = vpop.permute.xlu0 %764
      %768 = vset.pattern.permute.xlu0 0
      %769 = vperm.xlu0 %768, %v463
      %v770 = vpop.permute.xlu0 %769
      %773 = vset.pattern.permute.xlu0 0
      %774 = vperm.xlu0 %773, %v464
      %v775 = vpop.permute.xlu0 %774
      %778 = vset.pattern.permute.xlu0 0
      %779 = vperm.xlu0 %778, %v465
      %v780 = vpop.permute.xlu0 %779
      %783 = vset.pattern.permute.xlu0 0
      %784 = vperm.xlu0 %783, %v466
      %v785 = vpop.permute.xlu0 %784
      %v851 = vunpack.c.l.b16 %v339
      %v852 = vunpack.c.l.b16 %v340
      %v853 = vunpack.c.l.b16 %v341
      %v854 = vunpack.c.l.b16 %v342
      %v855 = vunpack.c.l.b16 %v343
      %v856 = vunpack.c.l.b16 %v344
      %v857 = vunpack.c.l.b16 %v345
      %v858 = vunpack.c.l.b16 %v346
      %v859 = vunpack.c.l.b16 %v347
      %v860 = vunpack.c.l.b16 %v348
      %v861 = vunpack.c.l.b16 %v349
      %v862 = vunpack.c.l.b16 %v350
      %v863 = vunpack.c.l.b16 %v351
      %v864 = vunpack.c.l.b16 %v352
      %v865 = vunpack.c.l.b16 %v353
      %v866 = vunpack.c.l.b16 %v354
      %v867 = vunpack.c.l.b16 %v355
      %v868 = vunpack.c.l.b16 %v356
      %v869 = vunpack.c.l.b16 %v357
      %v870 = vunpack.c.l.b16 %v358
      %v871 = vunpack.c.l.b16 %v359
      %v872 = vunpack.c.l.b16 %v360
      %v873 = vunpack.c.l.b16 %v361
      %v874 = vunpack.c.l.b16 %v362
      %v875 = vunpack.c.l.b16 %v363
      %v876 = vunpack.c.l.b16 %v364
      %v877 = vunpack.c.l.b16 %v365
      %v878 = vunpack.c.l.b16 %v366
      %v879 = vunpack.c.l.b16 %v367
      %v880 = vunpack.c.l.b16 %v368
      %v881 = vunpack.c.l.b16 %v369
      %v882 = vunpack.c.l.b16 %v370
      %v883 = vunpack.c.l.b16 %v371
      %v884 = vunpack.c.l.b16 %v372
      %v885 = vunpack.c.l.b16 %v373
      %v886 = vunpack.c.l.b16 %v374
      %v887 = vunpack.c.l.b16 %v375
      %v888 = vunpack.c.l.b16 %v376
      %v889 = vunpack.c.l.b16 %v377
      %v890 = vunpack.c.l.b16 %v378
      %v891 = vunpack.c.l.b16 %v379
      %v892 = vunpack.c.l.b16 %v380
      %v893 = vunpack.c.l.b16 %v381
      %v894 = vunpack.c.l.b16 %v382
      %v895 = vunpack.c.l.b16 %v383
      %v896 = vunpack.c.l.b16 %v384
      %v897 = vunpack.c.l.b16 %v385
      %v898 = vunpack.c.l.b16 %v386
      %v899 = vunpack.c.l.b16 %v387
      %v900 = vunpack.c.l.b16 %v388
      %v901 = vunpack.c.l.b16 %v389
      %v902 = vunpack.c.l.b16 %v390
      %v903 = vunpack.c.l.b16 %v391
      %v904 = vunpack.c.l.b16 %v392
      %v905 = vunpack.c.l.b16 %v393
      %v906 = vunpack.c.l.b16 %v394
      %v907 = vunpack.c.l.b16 %v395
      %v908 = vunpack.c.l.b16 %v396
      %v909 = vunpack.c.l.b16 %v397
      %v910 = vunpack.c.l.b16 %v398
      %v911 = vunpack.c.l.b16 %v399
      %v912 = vunpack.c.l.b16 %v400
      %v913 = vunpack.c.l.b16 %v401
      %v914 = vunpack.c.l.b16 %v402
      %v915 = vpack.c.b16 %v852, %v851
      %v916 = vpack.c.b16 %v854, %v853
      %v917 = vpack.c.b16 %v856, %v855
      %v918 = vpack.c.b16 %v858, %v857
      %v919 = vpack.c.b16 %v860, %v859
      %v920 = vpack.c.b16 %v862, %v861
      %v921 = vpack.c.b16 %v864, %v863
      %v922 = vpack.c.b16 %v866, %v865
      %v923 = vpack.c.b16 %v868, %v867
      %v924 = vpack.c.b16 %v870, %v869
      %v925 = vpack.c.b16 %v872, %v871
      %v926 = vpack.c.b16 %v874, %v873
      %v927 = vpack.c.b16 %v876, %v875
      %v928 = vpack.c.b16 %v878, %v877
      %v929 = vpack.c.b16 %v880, %v879
      %v930 = vpack.c.b16 %v882, %v881
      %v931 = vpack.c.b16 %v884, %v883
      %v932 = vpack.c.b16 %v886, %v885
      %v933 = vpack.c.b16 %v888, %v887
      %v934 = vpack.c.b16 %v890, %v889
      %v935 = vpack.c.b16 %v892, %v891
      %v936 = vpack.c.b16 %v894, %v893
      %v937 = vpack.c.b16 %v896, %v895
      %v938 = vpack.c.b16 %v898, %v897
      %v939 = vpack.c.b16 %v900, %v899
      %v940 = vpack.c.b16 %v902, %v901
      %v941 = vpack.c.b16 %v904, %v903
      %v942 = vpack.c.b16 %v906, %v905
      %v943 = vpack.c.b16 %v908, %v907
      %v944 = vpack.c.b16 %v910, %v909
      %v945 = vpack.c.b16 %v912, %v911
      %v946 = vpack.c.b16 %v914, %v913
      %v949 = vunpack.c.l.b16 %v337
      %v950 = vunpack.c.h.b16 %v337
      %v951 = vunpack.c.l.b16 %v338
      %v952 = vunpack.c.h.b16 %v338
      %v953 = vpack.c.b16 %v949, %v949
      %v954 = vpack.c.b16 %v950, %v950
      %v955 = vpack.c.b16 %v951, %v951
      %v956 = vpack.c.b16 %v952, %v952
      %vm957 = vcmask 64512
      %v959 = vsel %vm957, %v915, 0
      %v962 = vsel %vm957, %v916, 0
      %v965 = vsel %vm957, %v917, 0
      %v968 = vsel %vm957, %v918, 0
      %v971 = vsel %vm957, %v919, 0
      %v974 = vsel %vm957, %v920, 0
      %v977 = vsel %vm957, %v921, 0
      %v980 = vsel %vm957, %v922, 0
      %v983 = vsel %vm957, %v923, 0
      %v986 = vsel %vm957, %v924, 0
      %v989 = vsel %vm957, %v925, 0
      %v992 = vsel %vm957, %v926, 0
      %v995 = vsel %vm957, %v927, 0
      %v998 = vsel %vm957, %v928, 0
      %v1001 = vsel %vm957, %v929, 0
      %v1004 = vsel %vm957, %v930, 0
      %v1007 = vsel %vm957, %v931, 0
      %v1010 = vsel %vm957, %v932, 0
      %v1013 = vsel %vm957, %v933, 0
      %v1016 = vsel %vm957, %v934, 0
      %v1019 = vsel %vm957, %v935, 0
      %v1022 = vsel %vm957, %v936, 0
      %v1025 = vsel %vm957, %v937, 0
      %v1028 = vsel %vm957, %v938, 0
      %v1031 = vsel %vm957, %v939, 0
      %v1034 = vsel %vm957, %v940, 0
      %v1037 = vsel %vm957, %v941, 0
      %v1040 = vsel %vm957, %v942, 0
      %v1043 = vsel %vm957, %v943, 0
      %v1046 = vsel %vm957, %v944, 0
      %v1049 = vsel %vm957, %v945, 0
      %v1052 = vsel %vm957, %v946, 0
      %vm1054 = vcmask 1043456
      %v1056 = vsel %vm1054, %v953, 0
      %v1059 = vsel %vm1054, %v954, 0
      %v1062 = vsel %vm1054, %v955, 0
      %v1065 = vsel %vm1054, %v956, 0
      %1067 = vmatprep.subr.bf16.mxu0 %v1059
      %1068 = vmatpush1.bf16.msra.mxu0 %v1056
      %1069 = vmatprep.subr.bf16.mxu0 0
      %1070 = vmatpush1.bf16.msra.mxu0 0
      %1071 = vmatprep.subr.bf16.mxu0 0
      %1072 = vmatpush1.bf16.msra.mxu0 0
      %1073 = vmatprep.subr.bf16.mxu0 0
      %1074 = vmatpush1.bf16.msra.mxu0 0
      %1075 = vmatprep.subr.bf16.mxu0 0
      %1076 = vmatpush1.bf16.msra.mxu0 0
      %1077 = vmatprep.subr.bf16.mxu0 0
      %1078 = vmatpush1.bf16.msra.mxu0 0
      %1079 = vmatprep.subr.bf16.mxu0 0
      %1080 = vmatpush1.bf16.msra.mxu0 0
      %1081 = vmatprep.subr.bf16.mxu0 0
      %1082 = vmatpush1.bf16.msra.mxu0 0
      %1083 = vmatprep.subr.bf16.mxu0 0
      %1084 = vmatpush1.bf16.msra.mxu0 0
      %1085 = vmatprep.subr.bf16.mxu0 0
      %1086 = vmatpush1.bf16.msra.mxu0 0
      %1087 = vmatprep.subr.bf16.mxu0 0
      %1088 = vmatpush1.bf16.msra.mxu0 0
      %1089 = vmatprep.subr.bf16.mxu0 0
      %1090 = vmatpush1.bf16.msra.mxu0 0
      %1091 = vmatprep.subr.bf16.mxu0 0
      %1092 = vmatpush1.bf16.msra.mxu0 0
      %1093 = vmatprep.subr.bf16.mxu0 0
      %1094 = vmatpush1.bf16.msra.mxu0 0
      %1095 = vmatprep.subr.bf16.mxu0 0
      %1096 = vmatpush1.bf16.msra.mxu0 0
      %1097 = vmatprep.subr.bf16.mxu0 0
      %1098 = vmatpush1.bf16.msra.mxu0 0
      %1099 = vmatprep.mubr.bf16.mxu0 0
      %1100 = vmatmul.mubr.bf16.gmra.mrb[0].mxu0 %v959
      %v1101 = vpop.f32.mrb[0].mxu0
      %v1102 = vadd.f32 %v470, %v1101
      %v1103 = vpop.f32.mrb[0].mxu0
      %v1104 = vadd.f32 %v470, %v1103
      %v1105 = vpop.f32.mrb[0].mxu0
      %v1106 = vadd.f32 %v475, %v1105
      %v1107 = vpop.f32.mrb[0].mxu0
      %v1108 = vadd.f32 %v475, %v1107
      %1109 = vmatprep.mubr.bf16.mxu0 0
      %1110 = vmatmul.mubr.bf16.gmra.mrb[0].mxu0 %v962
      %v1111 = vpop.f32.mrb[0].mxu0
      %v1112 = vadd.f32 %v480, %v1111
      %v1113 = vpop.f32.mrb[0].mxu0
      %v1114 = vadd.f32 %v480, %v1113
      %v1115 = vpop.f32.mrb[0].mxu0
      %v1116 = vadd.f32 %v485, %v1115
      %v1117 = vpop.f32.mrb[0].mxu0
      %v1118 = vadd.f32 %v485, %v1117
      %1119 = vmatprep.mubr.bf16.mxu0 0
      %1120 = vmatmul.mubr.bf16.gmra.mrb[0].mxu0 %v965
      %v1121 = vpop.f32.mrb[0].mxu0
      %v1122 = vadd.f32 %v490, %v1121
      %v1123 = vpop.f32.mrb[0].mxu0
      %v1124 = vadd.f32 %v490, %v1123
      %v1125 = vpop.f32.mrb[0].mxu0
      %v1126 = vadd.f32 %v495, %v1125
      %v1127 = vpop.f32.mrb[0].mxu0
      %v1128 = vadd.f32 %v495, %v1127
      %1129 = vmatprep.mubr.bf16.mxu0 0
      %1130 = vmatmul.mubr.bf16.gmra.mrb[0].mxu0 %v968
      %v1131 = vpop.f32.mrb[0].mxu0
      %v1132 = vadd.f32 %v500, %v1131
      %v1133 = vpop.f32.mrb[0].mxu0
      %v1134 = vadd.f32 %v500, %v1133
      %v1135 = vpop.f32.mrb[0].mxu0
      %v1136 = vadd.f32 %v505, %v1135
      %v1137 = vpop.f32.mrb[0].mxu0
      %v1138 = vadd.f32 %v505, %v1137
      %1139 = vmatprep.mubr.bf16.mxu0 0
      %1140 = vmatmul.mubr.bf16.gmra.mrb[0].mxu0 %v971
      %v1141 = vpop.f32.mrb[0].mxu0
      %v1142 = vadd.f32 %v510, %v1141
      %v1143 = vpop.f32.mrb[0].mxu0
      %v1144 = vadd.f32 %v510, %v1143
      %v1145 = vpop.f32.mrb[0].mxu0
      %v1146 = vadd.f32 %v515, %v1145
      %v1147 = vpop.f32.mrb[0].mxu0
      %v1148 = vadd.f32 %v515, %v1147
      %1149 = vmatprep.mubr.bf16.mxu0 0
      %1150 = vmatmul.mubr.bf16.gmra.mrb[0].mxu0 %v974
      %v1151 = vpop.f32.mrb[0].mxu0
      %v1152 = vadd.f32 %v520, %v1151
      %v1153 = vpop.f32.mrb[0].mxu0
      %v1154 = vadd.f32 %v520, %v1153
      %v1155 = vpop.f32.mrb[0].mxu0
      %v1156 = vadd.f32 %v525, %v1155
      %v1157 = vpop.f32.mrb[0].mxu0
      %v1158 = vadd.f32 %v525, %v1157
      %1159 = vmatprep.mubr.bf16.mxu0 0
      %1160 = vmatmul.mubr.bf16.gmra.mrb[0].mxu0 %v977
      %v1161 = vpop.f32.mrb[0].mxu0
      %v1162 = vadd.f32 %v530, %v1161
      %v1163 = vpop.f32.mrb[0].mxu0
      %v1164 = vadd.f32 %v530, %v1163
      %v1165 = vpop.f32.mrb[0].mxu0
      %v1166 = vadd.f32 %v535, %v1165
      %v1167 = vpop.f32.mrb[0].mxu0
      %v1168 = vadd.f32 %v535, %v1167
      %1169 = vmatprep.mubr.bf16.mxu0 0
      %1170 = vmatmul.mubr.bf16.gmra.mrb[0].mxu0 %v980
      %v1171 = vpop.f32.mrb[0].mxu0
      %v1172 = vadd.f32 %v540, %v1171
      %v1173 = vpop.f32.mrb[0].mxu0
      %v1174 = vadd.f32 %v540, %v1173
      %v1175 = vpop.f32.mrb[0].mxu0
      %v1176 = vadd.f32 %v545, %v1175
      %v1177 = vpop.f32.mrb[0].mxu0
      %v1178 = vadd.f32 %v545, %v1177
      %1179 = vmatprep.mubr.bf16.mxu0 0
      %1180 = vmatmul.mubr.bf16.gmra.mrb[0].mxu0 %v983
      %v1181 = vpop.f32.mrb[0].mxu0
      %v1182 = vadd.f32 %v550, %v1181
      %v1183 = vpop.f32.mrb[0].mxu0
      %v1184 = vadd.f32 %v550, %v1183
      %v1185 = vpop.f32.mrb[0].mxu0
      %v1186 = vadd.f32 %v555, %v1185
      %v1187 = vpop.f32.mrb[0].mxu0
      %v1188 = vadd.f32 %v555, %v1187
      %1189 = vmatprep.mubr.bf16.mxu0 0
      %1190 = vmatmul.mubr.bf16.gmra.mrb[0].mxu0 %v986
      %v1191 = vpop.f32.mrb[0].mxu0
      %v1192 = vadd.f32 %v560, %v1191
      %v1193 = vpop.f32.mrb[0].mxu0
      %v1194 = vadd.f32 %v560, %v1193
      %v1195 = vpop.f32.mrb[0].mxu0
      %v1196 = vadd.f32 %v565, %v1195
      %v1197 = vpop.f32.mrb[0].mxu0
      %v1198 = vadd.f32 %v565, %v1197
      %1199 = vmatprep.mubr.bf16.mxu0 0
      %1200 = vmatmul.mubr.bf16.gmra.mrb[0].mxu0 %v989
      %v1201 = vpop.f32.mrb[0].mxu0
      %v1202 = vadd.f32 %v570, %v1201
      %v1203 = vpop.f32.mrb[0].mxu0
      %v1204 = vadd.f32 %v570, %v1203
      %v1205 = vpop.f32.mrb[0].mxu0
      %v1206 = vadd.f32 %v575, %v1205
      %v1207 = vpop.f32.mrb[0].mxu0
      %v1208 = vadd.f32 %v575, %v1207
      %1209 = vmatprep.mubr.bf16.mxu0 0
      %1210 = vmatmul.mubr.bf16.gmra.mrb[0].mxu0 %v992
      %v1211 = vpop.f32.mrb[0].mxu0
      %v1212 = vadd.f32 %v580, %v1211
      %v1213 = vpop.f32.mrb[0].mxu0
      %v1214 = vadd.f32 %v580, %v1213
      %v1215 = vpop.f32.mrb[0].mxu0
      %v1216 = vadd.f32 %v585, %v1215
      %v1217 = vpop.f32.mrb[0].mxu0
      %v1218 = vadd.f32 %v585, %v1217
      %1219 = vmatprep.mubr.bf16.mxu0 0
      %1220 = vmatmul.mubr.bf16.gmra.mrb[0].mxu0 %v995
      %v1221 = vpop.f32.mrb[0].mxu0
      %v1222 = vadd.f32 %v590, %v1221
      %v1223 = vpop.f32.mrb[0].mxu0
      %v1224 = vadd.f32 %v590, %v1223
      %v1225 = vpop.f32.mrb[0].mxu0
      %v1226 = vadd.f32 %v595, %v1225
      %v1227 = vpop.f32.mrb[0].mxu0
      %v1228 = vadd.f32 %v595, %v1227
      %1229 = vmatprep.mubr.bf16.mxu0 0
      %1230 = vmatmul.mubr.bf16.gmra.mrb[0].mxu0 %v998
      %v1231 = vpop.f32.mrb[0].mxu0
      %v1232 = vadd.f32 %v600, %v1231
      %v1233 = vpop.f32.mrb[0].mxu0
      %v1234 = vadd.f32 %v600, %v1233
      %v1235 = vpop.f32.mrb[0].mxu0
      %v1236 = vadd.f32 %v605, %v1235
      %v1237 = vpop.f32.mrb[0].mxu0
      %v1238 = vadd.f32 %v605, %v1237
      %1239 = vmatprep.mubr.bf16.mxu0 0
      %1240 = vmatmul.mubr.bf16.gmra.mrb[0].mxu0 %v1001
      %v1241 = vpop.f32.mrb[0].mxu0
      %v1242 = vadd.f32 %v610, %v1241
      %v1243 = vpop.f32.mrb[0].mxu0
      %v1244 = vadd.f32 %v610, %v1243
      %v1245 = vpop.f32.mrb[0].mxu0
      %v1246 = vadd.f32 %v615, %v1245
      %v1247 = vpop.f32.mrb[0].mxu0
      %v1248 = vadd.f32 %v615, %v1247
      %1249 = vmatprep.mubr.bf16.mxu0 0
      %1250 = vmatmul.mubr.bf16.gmra.mrb[0].mxu0 %v1004
      %v1251 = vpop.f32.mrb[0].mxu0
      %v1252 = vadd.f32 %v620, %v1251
      %v1253 = vpop.f32.mrb[0].mxu0
      %v1254 = vadd.f32 %v620, %v1253
      %v1255 = vpop.f32.mrb[0].mxu0
      %v1256 = vadd.f32 %v625, %v1255
      %v1257 = vpop.f32.mrb[0].mxu0
      %v1258 = vadd.f32 %v625, %v1257
      %1259 = vmatprep.mubr.bf16.mxu0 0
      %1260 = vmatmul.mubr.bf16.gmra.mrb[0].mxu0 %v1007
      %v1261 = vpop.f32.mrb[0].mxu0
      %v1262 = vadd.f32 %v630, %v1261
      %v1263 = vpop.f32.mrb[0].mxu0
      %v1264 = vadd.f32 %v630, %v1263
      %v1265 = vpop.f32.mrb[0].mxu0
      %v1266 = vadd.f32 %v635, %v1265
      %v1267 = vpop.f32.mrb[0].mxu0
      %v1268 = vadd.f32 %v635, %v1267
      %1269 = vmatprep.mubr.bf16.mxu0 0
      %1270 = vmatmul.mubr.bf16.gmra.mrb[0].mxu0 %v1010
      %v1271 = vpop.f32.mrb[0].mxu0
      %v1272 = vadd.f32 %v640, %v1271
      %v1273 = vpop.f32.mrb[0].mxu0
      %v1274 = vadd.f32 %v640, %v1273
      %v1275 = vpop.f32.mrb[0].mxu0
      %v1276 = vadd.f32 %v645, %v1275
      %v1277 = vpop.f32.mrb[0].mxu0
      %v1278 = vadd.f32 %v645, %v1277
      %1279 = vmatprep.mubr.bf16.mxu0 0
      %1280 = vmatmul.mubr.bf16.gmra.mrb[0].mxu0 %v1013
      %v1281 = vpop.f32.mrb[0].mxu0
      %v1282 = vadd.f32 %v650, %v1281
      %v1283 = vpop.f32.mrb[0].mxu0
      %v1284 = vadd.f32 %v650, %v1283
      %v1285 = vpop.f32.mrb[0].mxu0
      %v1286 = vadd.f32 %v655, %v1285
      %v1287 = vpop.f32.mrb[0].mxu0
      %v1288 = vadd.f32 %v655, %v1287
      %1289 = vmatprep.mubr.bf16.mxu0 0
      %1290 = vmatmul.mubr.bf16.gmra.mrb[0].mxu0 %v1016
      %v1291 = vpop.f32.mrb[0].mxu0
      %v1292 = vadd.f32 %v660, %v1291
      %v1293 = vpop.f32.mrb[0].mxu0
      %v1294 = vadd.f32 %v660, %v1293
      %v1295 = vpop.f32.mrb[0].mxu0
      %v1296 = vadd.f32 %v665, %v1295
      %v1297 = vpop.f32.mrb[0].mxu0
      %v1298 = vadd.f32 %v665, %v1297
      %1299 = vmatprep.mubr.bf16.mxu0 0
      %1300 = vmatmul.mubr.bf16.gmra.mrb[0].mxu0 %v1019
      %v1301 = vpop.f32.mrb[0].mxu0
      %v1302 = vadd.f32 %v670, %v1301
      %v1303 = vpop.f32.mrb[0].mxu0
      %v1304 = vadd.f32 %v670, %v1303
      %v1305 = vpop.f32.mrb[0].mxu0
      %v1306 = vadd.f32 %v675, %v1305
      %v1307 = vpop.f32.mrb[0].mxu0
      %v1308 = vadd.f32 %v675, %v1307
      %1309 = vmatprep.mubr.bf16.mxu0 0
      %1310 = vmatmul.mubr.bf16.gmra.mrb[0].mxu0 %v1022
      %v1311 = vpop.f32.mrb[0].mxu0
      %v1312 = vadd.f32 %v680, %v1311
      %v1313 = vpop.f32.mrb[0].mxu0
      %v1314 = vadd.f32 %v680, %v1313
      %v1315 = vpop.f32.mrb[0].mxu0
      %v1316 = vadd.f32 %v685, %v1315
      %v1317 = vpop.f32.mrb[0].mxu0
      %v1318 = vadd.f32 %v685, %v1317
      %1319 = vmatprep.mubr.bf16.mxu0 0
      %1320 = vmatmul.mubr.bf16.gmra.mrb[0].mxu0 %v1025
      %v1321 = vpop.f32.mrb[0].mxu0
      %v1322 = vadd.f32 %v690, %v1321
      %v1323 = vpop.f32.mrb[0].mxu0
      %v1324 = vadd.f32 %v690, %v1323
      %v1325 = vpop.f32.mrb[0].mxu0
      %v1326 = vadd.f32 %v695, %v1325
      %v1327 = vpop.f32.mrb[0].mxu0
      %v1328 = vadd.f32 %v695, %v1327
      %1329 = vmatprep.mubr.bf16.mxu0 0
      %1330 = vmatmul.mubr.bf16.gmra.mrb[0].mxu0 %v1028
      %v1331 = vpop.f32.mrb[0].mxu0
      %v1332 = vadd.f32 %v700, %v1331
      %v1333 = vpop.f32.mrb[0].mxu0
      %v1334 = vadd.f32 %v700, %v1333
      %v1335 = vpop.f32.mrb[0].mxu0
      %v1336 = vadd.f32 %v705, %v1335
      %v1337 = vpop.f32.mrb[0].mxu0
      %v1338 = vadd.f32 %v705, %v1337
      %1339 = vmatprep.mubr.bf16.mxu0 0
      %1340 = vmatmul.mubr.bf16.gmra.mrb[0].mxu0 %v1031
      %v1341 = vpop.f32.mrb[0].mxu0
      %v1342 = vadd.f32 %v710, %v1341
      %v1343 = vpop.f32.mrb[0].mxu0
      %v1344 = vadd.f32 %v710, %v1343
      %v1345 = vpop.f32.mrb[0].mxu0
      %v1346 = vadd.f32 %v715, %v1345
      %v1347 = vpop.f32.mrb[0].mxu0
      %v1348 = vadd.f32 %v715, %v1347
      %1349 = vmatprep.mubr.bf16.mxu0 0
      %1350 = vmatmul.mubr.bf16.gmra.mrb[0].mxu0 %v1034
      %v1351 = vpop.f32.mrb[0].mxu0
      %v1352 = vadd.f32 %v720, %v1351
      %v1353 = vpop.f32.mrb[0].mxu0
      %v1354 = vadd.f32 %v720, %v1353
      %v1355 = vpop.f32.mrb[0].mxu0
      %v1356 = vadd.f32 %v725, %v1355
      %v1357 = vpop.f32.mrb[0].mxu0
      %v1358 = vadd.f32 %v725, %v1357
      %1359 = vmatprep.mubr.bf16.mxu0 0
      %1360 = vmatmul.mubr.bf16.gmra.mrb[0].mxu0 %v1037
      %v1361 = vpop.f32.mrb[0].mxu0
      %v1362 = vadd.f32 %v730, %v1361
      %v1363 = vpop.f32.mrb[0].mxu0
      %v1364 = vadd.f32 %v730, %v1363
      %v1365 = vpop.f32.mrb[0].mxu0
      %v1366 = vadd.f32 %v735, %v1365
      %v1367 = vpop.f32.mrb[0].mxu0
      %v1368 = vadd.f32 %v735, %v1367
      %1369 = vmatprep.mubr.bf16.mxu0 0
      %1370 = vmatmul.mubr.bf16.gmra.mrb[0].mxu0 %v1040
      %v1371 = vpop.f32.mrb[0].mxu0
      %v1372 = vadd.f32 %v740, %v1371
      %v1373 = vpop.f32.mrb[0].mxu0
      %v1374 = vadd.f32 %v740, %v1373
      %v1375 = vpop.f32.mrb[0].mxu0
      %v1376 = vadd.f32 %v745, %v1375
      %v1377 = vpop.f32.mrb[0].mxu0
      %v1378 = vadd.f32 %v745, %v1377
      %1379 = vmatprep.mubr.bf16.mxu0 0
      %1380 = vmatmul.mubr.bf16.gmra.mrb[0].mxu0 %v1043
      %v1381 = vpop.f32.mrb[0].mxu0
      %v1382 = vadd.f32 %v750, %v1381
      %v1383 = vpop.f32.mrb[0].mxu0
      %v1384 = vadd.f32 %v750, %v1383
      %v1385 = vpop.f32.mrb[0].mxu0
      %v1386 = vadd.f32 %v755, %v1385
      %v1387 = vpop.f32.mrb[0].mxu0
      %v1388 = vadd.f32 %v755, %v1387
      %1389 = vmatprep.mubr.bf16.mxu0 0
      %1390 = vmatmul.mubr.bf16.gmra.mrb[0].mxu0 %v1046
      %v1391 = vpop.f32.mrb[0].mxu0
      %v1392 = vadd.f32 %v760, %v1391
      %v1393 = vpop.f32.mrb[0].mxu0
      %v1394 = vadd.f32 %v760, %v1393
      %v1395 = vpop.f32.mrb[0].mxu0
      %v1396 = vadd.f32 %v765, %v1395
      %v1397 = vpop.f32.mrb[0].mxu0
      %v1398 = vadd.f32 %v765, %v1397
      %1399 = vmatprep.mubr.bf16.mxu0 0
      %1400 = vmatmul.mubr.bf16.gmra.mrb[0].mxu0 %v1049
      %v1401 = vpop.f32.mrb[0].mxu0
      %v1402 = vadd.f32 %v770, %v1401
      %v1403 = vpop.f32.mrb[0].mxu0
      %v1404 = vadd.f32 %v770, %v1403
      %v1405 = vpop.f32.mrb[0].mxu0
      %v1406 = vadd.f32 %v775, %v1405
      %v1407 = vpop.f32.mrb[0].mxu0
      %v1408 = vadd.f32 %v775, %v1407
      %1409 = vmatprep.mubr.bf16.mxu0 0
      %1410 = vmatmul.mubr.bf16.gmra.mrb[0].mxu0 %v1052
      %v1411 = vpop.f32.mrb[0].mxu0
      %v1412 = vadd.f32 %v780, %v1411
      %v1413 = vpop.f32.mrb[0].mxu0
      %v1414 = vadd.f32 %v780, %v1413
      %v1415 = vpop.f32.mrb[0].mxu0
      %v1416 = vadd.f32 %v785, %v1415
      %v1417 = vpop.f32.mrb[0].mxu0
      %v1418 = vadd.f32 %v785, %v1417
      %1419 = vdwg.mxu0
      %1420 = vmatprep.subr.bf16.mxu0 %v1065
      %1421 = vmatpush1.bf16.msra.mxu0 %v1062
      %1422 = vmatprep.subr.bf16.mxu0 0
      %1423 = vmatpush1.bf16.msra.mxu0 0
      %1424 = vmatprep.subr.bf16.mxu0 0
      %1425 = vmatpush1.bf16.msra.mxu0 0
      %1426 = vmatprep.subr.bf16.mxu0 0
      %1427 = vmatpush1.bf16.msra.mxu0 0
      %1428 = vmatprep.subr.bf16.mxu0 0
      %1429 = vmatpush1.bf16.msra.mxu0 0
      %1430 = vmatprep.subr.bf16.mxu0 0
      %1431 = vmatpush1.bf16.msra.mxu0 0
      %1432 = vmatprep.subr.bf16.mxu0 0
      %1433 = vmatpush1.bf16.msra.mxu0 0
      %1434 = vmatprep.subr.bf16.mxu0 0
      %1435 = vmatpush1.bf16.msra.mxu0 0
      %1436 = vmatprep.subr.bf16.mxu0 0
      %1437 = vmatpush1.bf16.msra.mxu0 0
      %1438 = vmatprep.subr.bf16.mxu0 0
      %1439 = vmatpush1.bf16.msra.mxu0 0
      %1440 = vmatprep.subr.bf16.mxu0 0
      %1441 = vmatpush1.bf16.msra.mxu0 0
      %1442 = vmatprep.subr.bf16.mxu0 0
      %1443 = vmatpush1.bf16.msra.mxu0 0
      %1444 = vmatprep.subr.bf16.mxu0 0
      %1445 = vmatpush1.bf16.msra.mxu0 0
      %1446 = vmatprep.subr.bf16.mxu0 0
      %1447 = vmatpush1.bf16.msra.mxu0 0
      %1448 = vmatprep.subr.bf16.mxu0 0
      %1449 = vmatpush1.bf16.msra.mxu0 0
      %1450 = vmatprep.subr.bf16.mxu0 0
      %1451 = vmatpush1.bf16.msra.mxu0 0
      %1452 = vmatprep.mubr.bf16.mxu0 0
      %1453 = vmatmul.mubr.bf16.gmra.mrb[0].mxu0 %v959
      %v1454 = vpop.f32.mrb[0].mxu0
      %v1455 = vadd.f32 %v470, %v1454
      %v1456 = vpop.f32.mrb[0].mxu0
      %v1457 = vadd.f32 %v470, %v1456
      %v1458 = vpop.f32.mrb[0].mxu0
      %v1459 = vadd.f32 %v475, %v1458
      %v1460 = vpop.f32.mrb[0].mxu0
      %v1461 = vadd.f32 %v475, %v1460
      %1462 = vmatprep.mubr.bf16.mxu0 0
      %1463 = vmatmul.mubr.bf16.gmra.mrb[0].mxu0 %v962
      %v1464 = vpop.f32.mrb[0].mxu0
      %v1465 = vadd.f32 %v480, %v1464
      %v1466 = vpop.f32.mrb[0].mxu0
      %v1467 = vadd.f32 %v480, %v1466
      %v1468 = vpop.f32.mrb[0].mxu0
      %v1469 = vadd.f32 %v485, %v1468
      %v1470 = vpop.f32.mrb[0].mxu0
      %v1471 = vadd.f32 %v485, %v1470
      %1472 = vmatprep.mubr.bf16.mxu0 0
      %1473 = vmatmul.mubr.bf16.gmra.mrb[0].mxu0 %v965
      %v1474 = vpop.f32.mrb[0].mxu0
      %v1475 = vadd.f32 %v490, %v1474
      %v1476 = vpop.f32.mrb[0].mxu0
      %v1477 = vadd.f32 %v490, %v1476
      %v1478 = vpop.f32.mrb[0].mxu0
      %v1479 = vadd.f32 %v495, %v1478
      %v1480 = vpop.f32.mrb[0].mxu0
      %v1481 = vadd.f32 %v495, %v1480
      %1482 = vmatprep.mubr.bf16.mxu0 0
      %1483 = vmatmul.mubr.bf16.gmra.mrb[0].mxu0 %v968
      %v1484 = vpop.f32.mrb[0].mxu0
      %v1485 = vadd.f32 %v500, %v1484
      %v1486 = vpop.f32.mrb[0].mxu0
      %v1487 = vadd.f32 %v500, %v1486
      %v1488 = vpop.f32.mrb[0].mxu0
      %v1489 = vadd.f32 %v505, %v1488
      %v1490 = vpop.f32.mrb[0].mxu0
      %v1491 = vadd.f32 %v505, %v1490
      %1492 = vmatprep.mubr.bf16.mxu0 0
      %1493 = vmatmul.mubr.bf16.gmra.mrb[0].mxu0 %v971
      %v1494 = vpop.f32.mrb[0].mxu0
      %v1495 = vadd.f32 %v510, %v1494
      %v1496 = vpop.f32.mrb[0].mxu0
      %v1497 = vadd.f32 %v510, %v1496
      %v1498 = vpop.f32.mrb[0].mxu0
      %v1499 = vadd.f32 %v515, %v1498
      %v1500 = vpop.f32.mrb[0].mxu0
      %v1501 = vadd.f32 %v515, %v1500
      %1502 = vmatprep.mubr.bf16.mxu0 0
      %1503 = vmatmul.mubr.bf16.gmra.mrb[0].mxu0 %v974
      %v1504 = vpop.f32.mrb[0].mxu0
      %v1505 = vadd.f32 %v520, %v1504
      %v1506 = vpop.f32.mrb[0].mxu0
      %v1507 = vadd.f32 %v520, %v1506
      %v1508 = vpop.f32.mrb[0].mxu0
      %v1509 = vadd.f32 %v525, %v1508
      %v1510 = vpop.f32.mrb[0].mxu0
      %v1511 = vadd.f32 %v525, %v1510
      %1512 = vmatprep.mubr.bf16.mxu0 0
      %1513 = vmatmul.mubr.bf16.gmra.mrb[0].mxu0 %v977
      %v1514 = vpop.f32.mrb[0].mxu0
      %v1515 = vadd.f32 %v530, %v1514
      %v1516 = vpop.f32.mrb[0].mxu0
      %v1517 = vadd.f32 %v530, %v1516
      %v1518 = vpop.f32.mrb[0].mxu0
      %v1519 = vadd.f32 %v535, %v1518
      %v1520 = vpop.f32.mrb[0].mxu0
      %v1521 = vadd.f32 %v535, %v1520
      %1522 = vmatprep.mubr.bf16.mxu0 0
      %1523 = vmatmul.mubr.bf16.gmra.mrb[0].mxu0 %v980
      %v1524 = vpop.f32.mrb[0].mxu0
      %v1525 = vadd.f32 %v540, %v1524
      %v1526 = vpop.f32.mrb[0].mxu0
      %v1527 = vadd.f32 %v540, %v1526
      %v1528 = vpop.f32.mrb[0].mxu0
      %v1529 = vadd.f32 %v545, %v1528
      %v1530 = vpop.f32.mrb[0].mxu0
      %v1531 = vadd.f32 %v545, %v1530
      %1532 = vmatprep.mubr.bf16.mxu0 0
      %1533 = vmatmul.mubr.bf16.gmra.mrb[0].mxu0 %v983
      %v1534 = vpop.f32.mrb[0].mxu0
      %v1535 = vadd.f32 %v550, %v1534
      %v1536 = vpop.f32.mrb[0].mxu0
      %v1537 = vadd.f32 %v550, %v1536
      %v1538 = vpop.f32.mrb[0].mxu0
      %v1539 = vadd.f32 %v555, %v1538
      %v1540 = vpop.f32.mrb[0].mxu0
      %v1541 = vadd.f32 %v555, %v1540
      %1542 = vmatprep.mubr.bf16.mxu0 0
      %1543 = vmatmul.mubr.bf16.gmra.mrb[0].mxu0 %v986
      %v1544 = vpop.f32.mrb[0].mxu0
      %v1545 = vadd.f32 %v560, %v1544
      %v1546 = vpop.f32.mrb[0].mxu0
      %v1547 = vadd.f32 %v560, %v1546
      %v1548 = vpop.f32.mrb[0].mxu0
      %v1549 = vadd.f32 %v565, %v1548
      %v1550 = vpop.f32.mrb[0].mxu0
      %v1551 = vadd.f32 %v565, %v1550
      %1552 = vmatprep.mubr.bf16.mxu0 0
      %1553 = vmatmul.mubr.bf16.gmra.mrb[0].mxu0 %v989
      %v1554 = vpop.f32.mrb[0].mxu0
      %v1555 = vadd.f32 %v570, %v1554
      %v1556 = vpop.f32.mrb[0].mxu0
      %v1557 = vadd.f32 %v570, %v1556
      %v1558 = vpop.f32.mrb[0].mxu0
      %v1559 = vadd.f32 %v575, %v1558
      %v1560 = vpop.f32.mrb[0].mxu0
      %v1561 = vadd.f32 %v575, %v1560
      %1562 = vmatprep.mubr.bf16.mxu0 0
      %1563 = vmatmul.mubr.bf16.gmra.mrb[0].mxu0 %v992
      %v1564 = vpop.f32.mrb[0].mxu0
      %v1565 = vadd.f32 %v580, %v1564
      %v1566 = vpop.f32.mrb[0].mxu0
      %v1567 = vadd.f32 %v580, %v1566
      %v1568 = vpop.f32.mrb[0].mxu0
      %v1569 = vadd.f32 %v585, %v1568
      %v1570 = vpop.f32.mrb[0].mxu0
      %v1571 = vadd.f32 %v585, %v1570
      %1572 = vmatprep.mubr.bf16.mxu0 0
      %1573 = vmatmul.mubr.bf16.gmra.mrb[0].mxu0 %v995
      %v1574 = vpop.f32.mrb[0].mxu0
      %v1575 = vadd.f32 %v590, %v1574
      %v1576 = vpop.f32.mrb[0].mxu0
      %v1577 = vadd.f32 %v590, %v1576
      %v1578 = vpop.f32.mrb[0].mxu0
      %v1579 = vadd.f32 %v595, %v1578
      %v1580 = vpop.f32.mrb[0].mxu0
      %v1581 = vadd.f32 %v595, %v1580
      %1582 = vmatprep.mubr.bf16.mxu0 0
      %1583 = vmatmul.mubr.bf16.gmra.mrb[0].mxu0 %v998
      %v1584 = vpop.f32.mrb[0].mxu0
      %v1585 = vadd.f32 %v600, %v1584
      %v1586 = vpop.f32.mrb[0].mxu0
      %v1587 = vadd.f32 %v600, %v1586
      %v1588 = vpop.f32.mrb[0].mxu0
      %v1589 = vadd.f32 %v605, %v1588
      %v1590 = vpop.f32.mrb[0].mxu0
      %v1591 = vadd.f32 %v605, %v1590
      %1592 = vmatprep.mubr.bf16.mxu0 0
      %1593 = vmatmul.mubr.bf16.gmra.mrb[0].mxu0 %v1001
      %v1594 = vpop.f32.mrb[0].mxu0
      %v1595 = vadd.f32 %v610, %v1594
      %v1596 = vpop.f32.mrb[0].mxu0
      %v1597 = vadd.f32 %v610, %v1596
      %v1598 = vpop.f32.mrb[0].mxu0
      %v1599 = vadd.f32 %v615, %v1598
      %v1600 = vpop.f32.mrb[0].mxu0
      %v1601 = vadd.f32 %v615, %v1600
      %1602 = vmatprep.mubr.bf16.mxu0 0
      %1603 = vmatmul.mubr.bf16.gmra.mrb[0].mxu0 %v1004
      %v1604 = vpop.f32.mrb[0].mxu0
      %v1605 = vadd.f32 %v620, %v1604
      %v1606 = vpop.f32.mrb[0].mxu0
      %v1607 = vadd.f32 %v620, %v1606
      %v1608 = vpop.f32.mrb[0].mxu0
      %v1609 = vadd.f32 %v625, %v1608
      %v1610 = vpop.f32.mrb[0].mxu0
      %v1611 = vadd.f32 %v625, %v1610
      %1612 = vmatprep.mubr.bf16.mxu0 0
      %1613 = vmatmul.mubr.bf16.gmra.mrb[0].mxu0 %v1007
      %v1614 = vpop.f32.mrb[0].mxu0
      %v1615 = vadd.f32 %v630, %v1614
      %v1616 = vpop.f32.mrb[0].mxu0
      %v1617 = vadd.f32 %v630, %v1616
      %v1618 = vpop.f32.mrb[0].mxu0
      %v1619 = vadd.f32 %v635, %v1618
      %v1620 = vpop.f32.mrb[0].mxu0
      %v1621 = vadd.f32 %v635, %v1620
      %1622 = vmatprep.mubr.bf16.mxu0 0
      %1623 = vmatmul.mubr.bf16.gmra.mrb[0].mxu0 %v1010
      %v1624 = vpop.f32.mrb[0].mxu0
      %v1625 = vadd.f32 %v640, %v1624
      %v1626 = vpop.f32.mrb[0].mxu0
      %v1627 = vadd.f32 %v640, %v1626
      %v1628 = vpop.f32.mrb[0].mxu0
      %v1629 = vadd.f32 %v645, %v1628
      %v1630 = vpop.f32.mrb[0].mxu0
      %v1631 = vadd.f32 %v645, %v1630
      %1632 = vmatprep.mubr.bf16.mxu0 0
      %1633 = vmatmul.mubr.bf16.gmra.mrb[0].mxu0 %v1013
      %v1634 = vpop.f32.mrb[0].mxu0
      %v1635 = vadd.f32 %v650, %v1634
      %v1636 = vpop.f32.mrb[0].mxu0
      %v1637 = vadd.f32 %v650, %v1636
      %v1638 = vpop.f32.mrb[0].mxu0
      %v1639 = vadd.f32 %v655, %v1638
      %v1640 = vpop.f32.mrb[0].mxu0
      %v1641 = vadd.f32 %v655, %v1640
      %1642 = vmatprep.mubr.bf16.mxu0 0
      %1643 = vmatmul.mubr.bf16.gmra.mrb[0].mxu0 %v1016
      %v1644 = vpop.f32.mrb[0].mxu0
      %v1645 = vadd.f32 %v660, %v1644
      %v1646 = vpop.f32.mrb[0].mxu0
      %v1647 = vadd.f32 %v660, %v1646
      %v1648 = vpop.f32.mrb[0].mxu0
      %v1649 = vadd.f32 %v665, %v1648
      %v1650 = vpop.f32.mrb[0].mxu0
      %v1651 = vadd.f32 %v665, %v1650
      %1652 = vmatprep.mubr.bf16.mxu0 0
      %1653 = vmatmul.mubr.bf16.gmra.mrb[0].mxu0 %v1019
      %v1654 = vpop.f32.mrb[0].mxu0
      %v1655 = vadd.f32 %v670, %v1654
      %v1656 = vpop.f32.mrb[0].mxu0
      %v1657 = vadd.f32 %v670, %v1656
      %v1658 = vpop.f32.mrb[0].mxu0
      %v1659 = vadd.f32 %v675, %v1658
      %v1660 = vpop.f32.mrb[0].mxu0
      %v1661 = vadd.f32 %v675, %v1660
      %1662 = vmatprep.mubr.bf16.mxu0 0
      %1663 = vmatmul.mubr.bf16.gmra.mrb[0].mxu0 %v1022
      %v1664 = vpop.f32.mrb[0].mxu0
      %v1665 = vadd.f32 %v680, %v1664
      %v1666 = vpop.f32.mrb[0].mxu0
      %v1667 = vadd.f32 %v680, %v1666
      %v1668 = vpop.f32.mrb[0].mxu0
      %v1669 = vadd.f32 %v685, %v1668
      %v1670 = vpop.f32.mrb[0].mxu0
      %v1671 = vadd.f32 %v685, %v1670
      %1672 = vmatprep.mubr.bf16.mxu0 0
      %1673 = vmatmul.mubr.bf16.gmra.mrb[0].mxu0 %v1025
      %v1674 = vpop.f32.mrb[0].mxu0
      %v1675 = vadd.f32 %v690, %v1674
      %v1676 = vpop.f32.mrb[0].mxu0
      %v1677 = vadd.f32 %v690, %v1676
      %v1678 = vpop.f32.mrb[0].mxu0
      %v1679 = vadd.f32 %v695, %v1678
      %v1680 = vpop.f32.mrb[0].mxu0
      %v1681 = vadd.f32 %v695, %v1680
      %1682 = vmatprep.mubr.bf16.mxu0 0
      %1683 = vmatmul.mubr.bf16.gmra.mrb[0].mxu0 %v1028
      %v1684 = vpop.f32.mrb[0].mxu0
      %v1685 = vadd.f32 %v700, %v1684
      %v1686 = vpop.f32.mrb[0].mxu0
      %v1687 = vadd.f32 %v700, %v1686
      %v1688 = vpop.f32.mrb[0].mxu0
      %v1689 = vadd.f32 %v705, %v1688
      %v1690 = vpop.f32.mrb[0].mxu0
      %v1691 = vadd.f32 %v705, %v1690
      %1692 = vmatprep.mubr.bf16.mxu0 0
      %1693 = vmatmul.mubr.bf16.gmra.mrb[0].mxu0 %v1031
      %v1694 = vpop.f32.mrb[0].mxu0
      %v1695 = vadd.f32 %v710, %v1694
      %v1696 = vpop.f32.mrb[0].mxu0
      %v1697 = vadd.f32 %v710, %v1696
      %v1698 = vpop.f32.mrb[0].mxu0
      %v1699 = vadd.f32 %v715, %v1698
      %v1700 = vpop.f32.mrb[0].mxu0
      %v1701 = vadd.f32 %v715, %v1700
      %1702 = vmatprep.mubr.bf16.mxu0 0
      %1703 = vmatmul.mubr.bf16.gmra.mrb[0].mxu0 %v1034
      %v1704 = vpop.f32.mrb[0].mxu0
      %v1705 = vadd.f32 %v720, %v1704
      %v1706 = vpop.f32.mrb[0].mxu0
      %v1707 = vadd.f32 %v720, %v1706
      %v1708 = vpop.f32.mrb[0].mxu0
      %v1709 = vadd.f32 %v725, %v1708
      %v1710 = vpop.f32.mrb[0].mxu0
      %v1711 = vadd.f32 %v725, %v1710
      %1712 = vmatprep.mubr.bf16.mxu0 0
      %1713 = vmatmul.mubr.bf16.gmra.mrb[0].mxu0 %v1037
      %v1714 = vpop.f32.mrb[0].mxu0
      %v1715 = vadd.f32 %v730, %v1714
      %v1716 = vpop.f32.mrb[0].mxu0
      %v1717 = vadd.f32 %v730, %v1716
      %v1718 = vpop.f32.mrb[0].mxu0
      %v1719 = vadd.f32 %v735, %v1718
      %v1720 = vpop.f32.mrb[0].mxu0
      %v1721 = vadd.f32 %v735, %v1720
      %1722 = vmatprep.mubr.bf16.mxu0 0
      %1723 = vmatmul.mubr.bf16.gmra.mrb[0].mxu0 %v1040
      %v1724 = vpop.f32.mrb[0].mxu0
      %v1725 = vadd.f32 %v740, %v1724
      %v1726 = vpop.f32.mrb[0].mxu0
      %v1727 = vadd.f32 %v740, %v1726
      %v1728 = vpop.f32.mrb[0].mxu0
      %v1729 = vadd.f32 %v745, %v1728
      %v1730 = vpop.f32.mrb[0].mxu0
      %v1731 = vadd.f32 %v745, %v1730
      %1732 = vmatprep.mubr.bf16.mxu0 0
      %1733 = vmatmul.mubr.bf16.gmra.mrb[0].mxu0 %v1043
      %v1734 = vpop.f32.mrb[0].mxu0
      %v1735 = vadd.f32 %v750, %v1734
      %v1736 = vpop.f32.mrb[0].mxu0
      %v1737 = vadd.f32 %v750, %v1736
      %v1738 = vpop.f32.mrb[0].mxu0
      %v1739 = vadd.f32 %v755, %v1738
      %v1740 = vpop.f32.mrb[0].mxu0
      %v1741 = vadd.f32 %v755, %v1740
      %1742 = vmatprep.mubr.bf16.mxu0 0
      %1743 = vmatmul.mubr.bf16.gmra.mrb[0].mxu0 %v1046
      %v1744 = vpop.f32.mrb[0].mxu0
      %v1745 = vadd.f32 %v760, %v1744
      %v1746 = vpop.f32.mrb[0].mxu0
      %v1747 = vadd.f32 %v760, %v1746
      %v1748 = vpop.f32.mrb[0].mxu0
      %v1749 = vadd.f32 %v765, %v1748
      %v1750 = vpop.f32.mrb[0].mxu0
      %v1751 = vadd.f32 %v765, %v1750
      %1752 = vmatprep.mubr.bf16.mxu0 0
      %1753 = vmatmul.mubr.bf16.gmra.mrb[0].mxu0 %v1049
      %v1754 = vpop.f32.mrb[0].mxu0
      %v1755 = vadd.f32 %v770, %v1754
      %v1756 = vpop.f32.mrb[0].mxu0
      %v1757 = vadd.f32 %v770, %v1756
      %v1758 = vpop.f32.mrb[0].mxu0
      %v1759 = vadd.f32 %v775, %v1758
      %v1760 = vpop.f32.mrb[0].mxu0
      %v1761 = vadd.f32 %v775, %v1760
      %1762 = vmatprep.mubr.bf16.mxu0 0
      %1763 = vmatmul.mubr.bf16.gmra.mrb[0].mxu0 %v1052
      %v1764 = vpop.f32.mrb[0].mxu0
      %v1765 = vadd.f32 %v780, %v1764
      %v1766 = vpop.f32.mrb[0].mxu0
      %v1767 = vadd.f32 %v780, %v1766
      %v1768 = vpop.f32.mrb[0].mxu0
      %v1769 = vadd.f32 %v785, %v1768
      %v1770 = vpop.f32.mrb[0].mxu0
      %v1771 = vadd.f32 %v785, %v1770
      %1772 = vdwg.mxu0
      %v1773 = vmax.f32 %v1102, 0.0
      %v1774 = vmax.f32 %v1104, 0.0
      %v1775 = vmax.f32 %v1455, 0.0
      %v1776 = vmax.f32 %v1457, 0.0
      %v1777 = vmax.f32 %v1106, 0.0
      %v1778 = vmax.f32 %v1108, 0.0
      %v1779 = vmax.f32 %v1459, 0.0
      %v1780 = vmax.f32 %v1461, 0.0
      %v1781 = vmax.f32 %v1112, 0.0
      %v1782 = vmax.f32 %v1114, 0.0
      %v1783 = vmax.f32 %v1465, 0.0
      %v1784 = vmax.f32 %v1467, 0.0
      %v1785 = vmax.f32 %v1116, 0.0
      %v1786 = vmax.f32 %v1118, 0.0
      %v1787 = vmax.f32 %v1469, 0.0
      %v1788 = vmax.f32 %v1471, 0.0
      %v1789 = vmax.f32 %v1122, 0.0
      %v1790 = vmax.f32 %v1124, 0.0
      %v1791 = vmax.f32 %v1475, 0.0
      %v1792 = vmax.f32 %v1477, 0.0
      %v1793 = vmax.f32 %v1126, 0.0
      %v1794 = vmax.f32 %v1128, 0.0
      %v1795 = vmax.f32 %v1479, 0.0
      %v1796 = vmax.f32 %v1481, 0.0
      %v1797 = vmax.f32 %v1132, 0.0
      %v1798 = vmax.f32 %v1134, 0.0
      %v1799 = vmax.f32 %v1485, 0.0
      %v1800 = vmax.f32 %v1487, 0.0
      %v1801 = vmax.f32 %v1136, 0.0
      %v1802 = vmax.f32 %v1138, 0.0
      %v1803 = vmax.f32 %v1489, 0.0
      %v1804 = vmax.f32 %v1491, 0.0
      %v1805 = vmax.f32 %v1142, 0.0
      %v1806 = vmax.f32 %v1144, 0.0
      %v1807 = vmax.f32 %v1495, 0.0
      %v1808 = vmax.f32 %v1497, 0.0
      %v1809 = vmax.f32 %v1146, 0.0
      %v1810 = vmax.f32 %v1148, 0.0
      %v1811 = vmax.f32 %v1499, 0.0
      %v1812 = vmax.f32 %v1501, 0.0
      %v1813 = vmax.f32 %v1152, 0.0
      %v1814 = vmax.f32 %v1154, 0.0
      %v1815 = vmax.f32 %v1505, 0.0
      %v1816 = vmax.f32 %v1507, 0.0
      %v1817 = vmax.f32 %v1156, 0.0
      %v1818 = vmax.f32 %v1158, 0.0
      %v1819 = vmax.f32 %v1509, 0.0
      %v1820 = vmax.f32 %v1511, 0.0
      %v1821 = vmax.f32 %v1162, 0.0
      %v1822 = vmax.f32 %v1164, 0.0
      %v1823 = vmax.f32 %v1515, 0.0
      %v1824 = vmax.f32 %v1517, 0.0
      %v1825 = vmax.f32 %v1166, 0.0
      %v1826 = vmax.f32 %v1168, 0.0
      %v1827 = vmax.f32 %v1519, 0.0
      %v1828 = vmax.f32 %v1521, 0.0
      %v1829 = vmax.f32 %v1172, 0.0
      %v1830 = vmax.f32 %v1174, 0.0
      %v1831 = vmax.f32 %v1525, 0.0
      %v1832 = vmax.f32 %v1527, 0.0
      %v1833 = vmax.f32 %v1176, 0.0
      %v1834 = vmax.f32 %v1178, 0.0
      %v1835 = vmax.f32 %v1529, 0.0
      %v1836 = vmax.f32 %v1531, 0.0
      %v1837 = vmax.f32 %v1182, 0.0
      %v1838 = vmax.f32 %v1184, 0.0
      %v1839 = vmax.f32 %v1535, 0.0
      %v1840 = vmax.f32 %v1537, 0.0
      %v1841 = vmax.f32 %v1186, 0.0
      %v1842 = vmax.f32 %v1188, 0.0
      %v1843 = vmax.f32 %v1539, 0.0
      %v1844 = vmax.f32 %v1541, 0.0
      %v1845 = vmax.f32 %v1192, 0.0
      %v1846 = vmax.f32 %v1194, 0.0
      %v1847 = vmax.f32 %v1545, 0.0
      %v1848 = vmax.f32 %v1547, 0.0
      %v1849 = vmax.f32 %v1196, 0.0
      %v1850 = vmax.f32 %v1198, 0.0
      %v1851 = vmax.f32 %v1549, 0.0
      %v1852 = vmax.f32 %v1551, 0.0
      %v1853 = vmax.f32 %v1202, 0.0
      %v1854 = vmax.f32 %v1204, 0.0
      %v1855 = vmax.f32 %v1555, 0.0
      %v1856 = vmax.f32 %v1557, 0.0
      %v1857 = vmax.f32 %v1206, 0.0
      %v1858 = vmax.f32 %v1208, 0.0
      %v1859 = vmax.f32 %v1559, 0.0
      %v1860 = vmax.f32 %v1561, 0.0
      %v1861 = vmax.f32 %v1212, 0.0
      %v1862 = vmax.f32 %v1214, 0.0
      %v1863 = vmax.f32 %v1565, 0.0
      %v1864 = vmax.f32 %v1567, 0.0
      %v1865 = vmax.f32 %v1216, 0.0
      %v1866 = vmax.f32 %v1218, 0.0
      %v1867 = vmax.f32 %v1569, 0.0
      %v1868 = vmax.f32 %v1571, 0.0
      %v1869 = vmax.f32 %v1222, 0.0
      %v1870 = vmax.f32 %v1224, 0.0
      %v1871 = vmax.f32 %v1575, 0.0
      %v1872 = vmax.f32 %v1577, 0.0
      %v1873 = vmax.f32 %v1226, 0.0
      %v1874 = vmax.f32 %v1228, 0.0
      %v1875 = vmax.f32 %v1579, 0.0
      %v1876 = vmax.f32 %v1581, 0.0
      %v1877 = vmax.f32 %v1232, 0.0
      %v1878 = vmax.f32 %v1234, 0.0
      %v1879 = vmax.f32 %v1585, 0.0
      %v1880 = vmax.f32 %v1587, 0.0
      %v1881 = vmax.f32 %v1236, 0.0
      %v1882 = vmax.f32 %v1238, 0.0
      %v1883 = vmax.f32 %v1589, 0.0
      %v1884 = vmax.f32 %v1591, 0.0
      %v1885 = vmax.f32 %v1242, 0.0
      %v1886 = vmax.f32 %v1244, 0.0
      %v1887 = vmax.f32 %v1595, 0.0
      %v1888 = vmax.f32 %v1597, 0.0
      %v1889 = vmax.f32 %v1246, 0.0
      %v1890 = vmax.f32 %v1248, 0.0
      %v1891 = vmax.f32 %v1599, 0.0
      %v1892 = vmax.f32 %v1601, 0.0
      %v1893 = vmax.f32 %v1252, 0.0
      %v1894 = vmax.f32 %v1254, 0.0
      %v1895 = vmax.f32 %v1605, 0.0
      %v1896 = vmax.f32 %v1607, 0.0
      %v1897 = vmax.f32 %v1256, 0.0
      %v1898 = vmax.f32 %v1258, 0.0
      %v1899 = vmax.f32 %v1609, 0.0
      %v1900 = vmax.f32 %v1611, 0.0
      %v1901 = vmax.f32 %v1262, 0.0
      %v1902 = vmax.f32 %v1264, 0.0
      %v1903 = vmax.f32 %v1615, 0.0
      %v1904 = vmax.f32 %v1617, 0.0
      %v1905 = vmax.f32 %v1266, 0.0
      %v1906 = vmax.f32 %v1268, 0.0
      %v1907 = vmax.f32 %v1619, 0.0
      %v1908 = vmax.f32 %v1621, 0.0
      %v1909 = vmax.f32 %v1272, 0.0
      %v1910 = vmax.f32 %v1274, 0.0
      %v1911 = vmax.f32 %v1625, 0.0
      %v1912 = vmax.f32 %v1627, 0.0
      %v1913 = vmax.f32 %v1276, 0.0
      %v1914 = vmax.f32 %v1278, 0.0
      %v1915 = vmax.f32 %v1629, 0.0
      %v1916 = vmax.f32 %v1631, 0.0
      %v1917 = vmax.f32 %v1282, 0.0
      %v1918 = vmax.f32 %v1284, 0.0
      %v1919 = vmax.f32 %v1635, 0.0
      %v1920 = vmax.f32 %v1637, 0.0
      %v1921 = vmax.f32 %v1286, 0.0
      %v1922 = vmax.f32 %v1288, 0.0
      %v1923 = vmax.f32 %v1639, 0.0
      %v1924 = vmax.f32 %v1641, 0.0
      %v1925 = vmax.f32 %v1292, 0.0
      %v1926 = vmax.f32 %v1294, 0.0
      %v1927 = vmax.f32 %v1645, 0.0
      %v1928 = vmax.f32 %v1647, 0.0
      %v1929 = vmax.f32 %v1296, 0.0
      %v1930 = vmax.f32 %v1298, 0.0
      %v1931 = vmax.f32 %v1649, 0.0
      %v1932 = vmax.f32 %v1651, 0.0
      %v1933 = vmax.f32 %v1302, 0.0
      %v1934 = vmax.f32 %v1304, 0.0
      %v1935 = vmax.f32 %v1655, 0.0
      %v1936 = vmax.f32 %v1657, 0.0
      %v1937 = vmax.f32 %v1306, 0.0
      %v1938 = vmax.f32 %v1308, 0.0
      %v1939 = vmax.f32 %v1659, 0.0
      %v1940 = vmax.f32 %v1661, 0.0
      %v1941 = vmax.f32 %v1312, 0.0
      %v1942 = vmax.f32 %v1314, 0.0
      %v1943 = vmax.f32 %v1665, 0.0
      %v1944 = vmax.f32 %v1667, 0.0
      %v1945 = vmax.f32 %v1316, 0.0
      %v1946 = vmax.f32 %v1318, 0.0
      %v1947 = vmax.f32 %v1669, 0.0
      %v1948 = vmax.f32 %v1671, 0.0
      %v1949 = vmax.f32 %v1322, 0.0
      %v1950 = vmax.f32 %v1324, 0.0
      %v1951 = vmax.f32 %v1675, 0.0
      %v1952 = vmax.f32 %v1677, 0.0
      %v1953 = vmax.f32 %v1326, 0.0
      %v1954 = vmax.f32 %v1328, 0.0
      %v1955 = vmax.f32 %v1679, 0.0
      %v1956 = vmax.f32 %v1681, 0.0
      %v1957 = vmax.f32 %v1332, 0.0
      %v1958 = vmax.f32 %v1334, 0.0
      %v1959 = vmax.f32 %v1685, 0.0
      %v1960 = vmax.f32 %v1687, 0.0
      %v1961 = vmax.f32 %v1336, 0.0
      %v1962 = vmax.f32 %v1338, 0.0
      %v1963 = vmax.f32 %v1689, 0.0
      %v1964 = vmax.f32 %v1691, 0.0
      %v1965 = vmax.f32 %v1342, 0.0
      %v1966 = vmax.f32 %v1344, 0.0
      %v1967 = vmax.f32 %v1695, 0.0
      %v1968 = vmax.f32 %v1697, 0.0
      %v1969 = vmax.f32 %v1346, 0.0
      %v1970 = vmax.f32 %v1348, 0.0
      %v1971 = vmax.f32 %v1699, 0.0
      %v1972 = vmax.f32 %v1701, 0.0
      %v1973 = vmax.f32 %v1352, 0.0
      %v1974 = vmax.f32 %v1354, 0.0
      %v1975 = vmax.f32 %v1705, 0.0
      %v1976 = vmax.f32 %v1707, 0.0
      %v1977 = vmax.f32 %v1356, 0.0
      %v1978 = vmax.f32 %v1358, 0.0
      %v1979 = vmax.f32 %v1709, 0.0
      %v1980 = vmax.f32 %v1711, 0.0
      %v1981 = vmax.f32 %v1362, 0.0
      %v1982 = vmax.f32 %v1364, 0.0
      %v1983 = vmax.f32 %v1715, 0.0
      %v1984 = vmax.f32 %v1717, 0.0
      %v1985 = vmax.f32 %v1366, 0.0
      %v1986 = vmax.f32 %v1368, 0.0
      %v1987 = vmax.f32 %v1719, 0.0
      %v1988 = vmax.f32 %v1721, 0.0
      %v1989 = vmax.f32 %v1372, 0.0
      %v1990 = vmax.f32 %v1374, 0.0
      %v1991 = vmax.f32 %v1725, 0.0
      %v1992 = vmax.f32 %v1727, 0.0
      %v1993 = vmax.f32 %v1376, 0.0
      %v1994 = vmax.f32 %v1378, 0.0
      %v1995 = vmax.f32 %v1729, 0.0
      %v1996 = vmax.f32 %v1731, 0.0
      %v1997 = vmax.f32 %v1382, 0.0
      %v1998 = vmax.f32 %v1384, 0.0
      %v1999 = vmax.f32 %v1735, 0.0
      %v2000 = vmax.f32 %v1737, 0.0
      %v2001 = vmax.f32 %v1386, 0.0
      %v2002 = vmax.f32 %v1388, 0.0
      %v2003 = vmax.f32 %v1739, 0.0
      %v2004 = vmax.f32 %v1741, 0.0
      %v2005 = vmax.f32 %v1392, 0.0
      %v2006 = vmax.f32 %v1394, 0.0
      %v2007 = vmax.f32 %v1745, 0.0
      %v2008 = vmax.f32 %v1747, 0.0
      %v2009 = vmax.f32 %v1396, 0.0
      %v2010 = vmax.f32 %v1398, 0.0
      %v2011 = vmax.f32 %v1749, 0.0
      %v2012 = vmax.f32 %v1751, 0.0
      %v2013 = vmax.f32 %v1402, 0.0
      %v2014 = vmax.f32 %v1404, 0.0
      %v2015 = vmax.f32 %v1755, 0.0
      %v2016 = vmax.f32 %v1757, 0.0
      %v2017 = vmax.f32 %v1406, 0.0
      %v2018 = vmax.f32 %v1408, 0.0
      %v2019 = vmax.f32 %v1759, 0.0
      %v2020 = vmax.f32 %v1761, 0.0
      %v2021 = vmax.f32 %v1412, 0.0
      %v2022 = vmax.f32 %v1414, 0.0
      %v2023 = vmax.f32 %v1765, 0.0
      %v2024 = vmax.f32 %v1767, 0.0
      %v2025 = vmax.f32 %v1416, 0.0
      %v2026 = vmax.f32 %v1418, 0.0
      %v2027 = vmax.f32 %v1769, 0.0
      %v2028 = vmax.f32 %v1771, 0.0
      %v2029 = vld [vmem:[%s3] sm:$0xff]
      %v2030 = vld [vmem:[%s3 + $0x8] sm:$0xff]
      %v2031 = vld [vmem:[%s3 + $0x10] sm:$0xff]
      %v2032 = vld [vmem:[%s3 + $0x18] sm:$0xff]
      %v2033 = vld [vmem:[%s3 + $0x20] sm:$0xff]
      %v2034 = vld [vmem:[%s3 + $0x28] sm:$0xff]
      %v2035 = vld [vmem:[%s3 + $0x30] sm:$0xff]
      %v2036 = vld [vmem:[%s3 + $0x38] sm:$0xff]
      %v2037 = vld [vmem:[%s3 + $0x40] sm:$0xff]
      %v2038 = vld [vmem:[%s3 + $0x48] sm:$0xff]
      %v2039 = vld [vmem:[%s3 + $0x50] sm:$0xff]
      %v2040 = vld [vmem:[%s3 + $0x58] sm:$0xff]
      %v2041 = vld [vmem:[%s3 + $0x60] sm:$0xff]
      %v2042 = vld [vmem:[%s3 + $0x68] sm:$0xff]
      %v2043 = vld [vmem:[%s3 + $0x70] sm:$0xff]
      %v2044 = vld [vmem:[%s3 + $0x78] sm:$0xff]
      %v2045 = vld [vmem:[%s3 + $0x80] sm:$0xff]
      %v2046 = vld [vmem:[%s3 + $0x88] sm:$0xff]
      %v2047 = vld [vmem:[%s3 + $0x90] sm:$0xff]
      %v2048 = vld [vmem:[%s3 + $0x98] sm:$0xff]
      %v2049 = vld [vmem:[%s3 + $0xa0] sm:$0xff]
      %v2050 = vld [vmem:[%s3 + $0xa8] sm:$0xff]
      %v2051 = vld [vmem:[%s3 + $0xb0] sm:$0xff]
      %v2052 = vld [vmem:[%s3 + $0xb8] sm:$0xff]
      %v2053 = vld [vmem:[%s3 + $0xc0] sm:$0xff]
      %v2054 = vld [vmem:[%s3 + $0xc8] sm:$0xff]
      %v2055 = vld [vmem:[%s3 + $0xd0] sm:$0xff]
      %v2056 = vld [vmem:[%s3 + $0xd8] sm:$0xff]
      %v2057 = vld [vmem:[%s3 + $0xe0] sm:$0xff]
      %v2058 = vld [vmem:[%s3 + $0xe8] sm:$0xff]
      %v2059 = vld [vmem:[%s3 + $0xf0] sm:$0xff]
      %v2060 = vld [vmem:[%s3 + $0xf8] sm:$0xff]
      %v2061 = vld [vmem:[%s3 + $0x100] sm:$0xff]
      %v2062 = vld [vmem:[%s3 + $0x108] sm:$0xff]
      %v2063 = vld [vmem:[%s3 + $0x110] sm:$0xff]
      %v2064 = vld [vmem:[%s3 + $0x118] sm:$0xff]
      %v2065 = vld [vmem:[%s3 + $0x120] sm:$0xff]
      %v2066 = vld [vmem:[%s3 + $0x128] sm:$0xff]
      %v2067 = vld [vmem:[%s3 + $0x130] sm:$0xff]
      %v2068 = vld [vmem:[%s3 + $0x138] sm:$0xff]
      %v2069 = vld [vmem:[%s3 + $0x140] sm:$0xff]
      %v2070 = vld [vmem:[%s3 + $0x148] sm:$0xff]
      %v2071 = vld [vmem:[%s3 + $0x150] sm:$0xff]
      %v2072 = vld [vmem:[%s3 + $0x158] sm:$0xff]
      %v2073 = vld [vmem:[%s3 + $0x160] sm:$0xff]
      %v2074 = vld [vmem:[%s3 + $0x168] sm:$0xff]
      %v2075 = vld [vmem:[%s3 + $0x170] sm:$0xff]
      %v2076 = vld [vmem:[%s3 + $0x178] sm:$0xff]
      %v2077 = vld [vmem:[%s3 + $0x180] sm:$0xff]
      %v2078 = vld [vmem:[%s3 + $0x188] sm:$0xff]
      %v2079 = vld [vmem:[%s3 + $0x190] sm:$0xff]
      %v2080 = vld [vmem:[%s3 + $0x198] sm:$0xff]
      %v2081 = vld [vmem:[%s3 + $0x1a0] sm:$0xff]
      %v2082 = vld [vmem:[%s3 + $0x1a8] sm:$0xff]
      %v2083 = vld [vmem:[%s3 + $0x1b0] sm:$0xff]
      %v2084 = vld [vmem:[%s3 + $0x1b8] sm:$0xff]
      %v2085 = vld [vmem:[%s3 + $0x1c0] sm:$0xff]
      %v2086 = vld [vmem:[%s3 + $0x1c8] sm:$0xff]
      %v2087 = vld [vmem:[%s3 + $0x1d0] sm:$0xff]
      %v2088 = vld [vmem:[%s3 + $0x1d8] sm:$0xff]
      %v2089 = vld [vmem:[%s3 + $0x1e0] sm:$0xff]
      %v2090 = vld [vmem:[%s3 + $0x1e8] sm:$0xff]
      %v2091 = vld [vmem:[%s3 + $0x1f0] sm:$0xff]
      %v2092 = vld [vmem:[%s3 + $0x1f8] sm:$0xff]
      %v2093 = vpack.c.bf16 %v1777, %v1773
      %v2094 = vpack.c.bf16 %v1778, %v1774
      %v2095 = vpack.c.bf16 %v1779, %v1775
      %v2096 = vpack.c.bf16 %v1780, %v1776
      %v2097 = vpack.c.bf16 %v1785, %v1781
      %v2098 = vpack.c.bf16 %v1786, %v1782
      %v2099 = vpack.c.bf16 %v1787, %v1783
      %v2100 = vpack.c.bf16 %v1788, %v1784
      %v2101 = vpack.c.bf16 %v1793, %v1789
      %v2102 = vpack.c.bf16 %v1794, %v1790
      %v2103 = vpack.c.bf16 %v1795, %v1791
      %v2104 = vpack.c.bf16 %v1796, %v1792
      %v2105 = vpack.c.bf16 %v1801, %v1797
      %v2106 = vpack.c.bf16 %v1802, %v1798
      %v2107 = vpack.c.bf16 %v1803, %v1799
      %v2108 = vpack.c.bf16 %v1804, %v1800
      %v2109 = vpack.c.bf16 %v1809, %v1805
      %v2110 = vpack.c.bf16 %v1810, %v1806
      %v2111 = vpack.c.bf16 %v1811, %v1807
      %v2112 = vpack.c.bf16 %v1812, %v1808
      %v2113 = vpack.c.bf16 %v1817, %v1813
      %v2114 = vpack.c.bf16 %v1818, %v1814
      %v2115 = vpack.c.bf16 %v1819, %v1815
      %v2116 = vpack.c.bf16 %v1820, %v1816
      %v2117 = vpack.c.bf16 %v1825, %v1821
      %v2118 = vpack.c.bf16 %v1826, %v1822
      %v2119 = vpack.c.bf16 %v1827, %v1823
      %v2120 = vpack.c.bf16 %v1828, %v1824
      %v2121 = vpack.c.bf16 %v1833, %v1829
      %v2122 = vpack.c.bf16 %v1834, %v1830
      %v2123 = vpack.c.bf16 %v1835, %v1831
      %v2124 = vpack.c.bf16 %v1836, %v1832
      %v2125 = vpack.c.bf16 %v1841, %v1837
      %v2126 = vpack.c.bf16 %v1842, %v1838
      %v2127 = vpack.c.bf16 %v1843, %v1839
      %v2128 = vpack.c.bf16 %v1844, %v1840
      %v2129 = vpack.c.bf16 %v1849, %v1845
      %v2130 = vpack.c.bf16 %v1850, %v1846
      %v2131 = vpack.c.bf16 %v1851, %v1847
      %v2132 = vpack.c.bf16 %v1852, %v1848
      %v2133 = vpack.c.bf16 %v1857, %v1853
      %v2134 = vpack.c.bf16 %v1858, %v1854
      %v2135 = vpack.c.bf16 %v1859, %v1855
      %v2136 = vpack.c.bf16 %v1860, %v1856
      %v2137 = vpack.c.bf16 %v1865, %v1861
      %v2138 = vpack.c.bf16 %v1866, %v1862
      %v2139 = vpack.c.bf16 %v1867, %v1863
      %v2140 = vpack.c.bf16 %v1868, %v1864
      %v2141 = vpack.c.bf16 %v1873, %v1869
      %v2142 = vpack.c.bf16 %v1874, %v1870
      %v2143 = vpack.c.bf16 %v1875, %v1871
      %v2144 = vpack.c.bf16 %v1876, %v1872
      %v2145 = vpack.c.bf16 %v1881, %v1877
      %v2146 = vpack.c.bf16 %v1882, %v1878
      %v2147 = vpack.c.bf16 %v1883, %v1879
      %v2148 = vpack.c.bf16 %v1884, %v1880
      %v2149 = vpack.c.bf16 %v1889, %v1885
      %v2150 = vpack.c.bf16 %v1890, %v1886
      %v2151 = vpack.c.bf16 %v1891, %v1887
      %v2152 = vpack.c.bf16 %v1892, %v1888
      %v2153 = vpack.c.bf16 %v1897, %v1893
      %v2154 = vpack.c.bf16 %v1898, %v1894
      %v2155 = vpack.c.bf16 %v1899, %v1895
      %v2156 = vpack.c.bf16 %v1900, %v1896
      %v2157 = vpack.c.bf16 %v1905, %v1901
      %v2158 = vpack.c.bf16 %v1906, %v1902
      %v2159 = vpack.c.bf16 %v1907, %v1903
      %v2160 = vpack.c.bf16 %v1908, %v1904
      %v2161 = vpack.c.bf16 %v1913, %v1909
      %v2162 = vpack.c.bf16 %v1914, %v1910
      %v2163 = vpack.c.bf16 %v1915, %v1911
      %v2164 = vpack.c.bf16 %v1916, %v1912
      %v2165 = vpack.c.bf16 %v1921, %v1917
      %v2166 = vpack.c.bf16 %v1922, %v1918
      %v2167 = vpack.c.bf16 %v1923, %v1919
      %v2168 = vpack.c.bf16 %v1924, %v1920
      %v2169 = vpack.c.bf16 %v1929, %v1925
      %v2170 = vpack.c.bf16 %v1930, %v1926
      %v2171 = vpack.c.bf16 %v1931, %v1927
      %v2172 = vpack.c.bf16 %v1932, %v1928
      %v2173 = vpack.c.bf16 %v1937, %v1933
      %v2174 = vpack.c.bf16 %v1938, %v1934
      %v2175 = vpack.c.bf16 %v1939, %v1935
      %v2176 = vpack.c.bf16 %v1940, %v1936
      %v2177 = vpack.c.bf16 %v1945, %v1941
      %v2178 = vpack.c.bf16 %v1946, %v1942
      %v2179 = vpack.c.bf16 %v1947, %v1943
      %v2180 = vpack.c.bf16 %v1948, %v1944
      %v2181 = vpack.c.bf16 %v1953, %v1949
      %v2182 = vpack.c.bf16 %v1954, %v1950
      %v2183 = vpack.c.bf16 %v1955, %v1951
      %v2184 = vpack.c.bf16 %v1956, %v1952
      %v2185 = vpack.c.bf16 %v1961, %v1957
      %v2186 = vpack.c.bf16 %v1962, %v1958
      %v2187 = vpack.c.bf16 %v1963, %v1959
      %v2188 = vpack.c.bf16 %v1964, %v1960
      %v2189 = vpack.c.bf16 %v1969, %v1965
      %v2190 = vpack.c.bf16 %v1970, %v1966
      %v2191 = vpack.c.bf16 %v1971, %v1967
      %v2192 = vpack.c.bf16 %v1972, %v1968
      %v2193 = vpack.c.bf16 %v1977, %v1973
      %v2194 = vpack.c.bf16 %v1978, %v1974
      %v2195 = vpack.c.bf16 %v1979, %v1975
      %v2196 = vpack.c.bf16 %v1980, %v1976
      %v2197 = vpack.c.bf16 %v1985, %v1981
      %v2198 = vpack.c.bf16 %v1986, %v1982
      %v2199 = vpack.c.bf16 %v1987, %v1983
      %v2200 = vpack.c.bf16 %v1988, %v1984
      %v2201 = vpack.c.bf16 %v1993, %v1989
      %v2202 = vpack.c.bf16 %v1994, %v1990
      %v2203 = vpack.c.bf16 %v1995, %v1991
      %v2204 = vpack.c.bf16 %v1996, %v1992
      %v2205 = vpack.c.bf16 %v2001, %v1997
      %v2206 = vpack.c.bf16 %v2002, %v1998
      %v2207 = vpack.c.bf16 %v2003, %v1999
      %v2208 = vpack.c.bf16 %v2004, %v2000
      %v2209 = vpack.c.bf16 %v2009, %v2005
      %v2210 = vpack.c.bf16 %v2010, %v2006
      %v2211 = vpack.c.bf16 %v2011, %v2007
      %v2212 = vpack.c.bf16 %v2012, %v2008
      %v2213 = vpack.c.bf16 %v2017, %v2013
      %v2214 = vpack.c.bf16 %v2018, %v2014
      %v2215 = vpack.c.bf16 %v2019, %v2015
      %v2216 = vpack.c.bf16 %v2020, %v2016
      %v2217 = vpack.c.bf16 %v2025, %v2021
      %v2218 = vpack.c.bf16 %v2026, %v2022
      %v2219 = vpack.c.bf16 %v2027, %v2023
      %v2220 = vpack.c.bf16 %v2028, %v2024
      %v2221 = vld [vmem:[%s4] sm:$0xff]
      %v2222 = vld [vmem:[%s4 + $0x8] sm:$0xff]
      %v2223 = vld [vmem:[%s4 + $0x10] sm:$0xff]
      %v2224 = vld [vmem:[%s4 + $0x18] sm:$0xff]
      %v2225 = vld [vmem:[%s4 + $0x20] sm:$0xff]
      %v2226 = vld [vmem:[%s4 + $0x28] sm:$0xff]
      %v2227 = vld [vmem:[%s4 + $0x30] sm:$0xff]
      %v2228 = vld [vmem:[%s4 + $0x38] sm:$0xff]
      %v2229 = vld [vmem:[%s4 + $0x40] sm:$0xff]
      %v2230 = vld [vmem:[%s4 + $0x48] sm:$0xff]
      %v2231 = vld [vmem:[%s4 + $0x50] sm:$0xff]
      %v2232 = vld [vmem:[%s4 + $0x58] sm:$0xff]
      %v2233 = vld [vmem:[%s4 + $0x60] sm:$0xff]
      %v2234 = vld [vmem:[%s4 + $0x68] sm:$0xff]
      %v2235 = vld [vmem:[%s4 + $0x70] sm:$0xff]
      %v2236 = vld [vmem:[%s4 + $0x78] sm:$0xff]
      %v2237 = vld [vmem:[%s4 + $0x80] sm:$0xff]
      %v2238 = vld [vmem:[%s4 + $0x88] sm:$0xff]
      %v2239 = vld [vmem:[%s4 + $0x90] sm:$0xff]
      %v2240 = vld [vmem:[%s4 + $0x98] sm:$0xff]
      %v2241 = vld [vmem:[%s4 + $0xa0] sm:$0xff]
      %v2242 = vld [vmem:[%s4 + $0xa8] sm:$0xff]
      %v2243 = vld [vmem:[%s4 + $0xb0] sm:$0xff]
      %v2244 = vld [vmem:[%s4 + $0xb8] sm:$0xff]
      %v2245 = vld [vmem:[%s4 + $0xc0] sm:$0xff]
      %v2246 = vld [vmem:[%s4 + $0xc8] sm:$0xff]
      %v2247 = vld [vmem:[%s4 + $0xd0] sm:$0xff]
      %v2248 = vld [vmem:[%s4 + $0xd8] sm:$0xff]
      %v2249 = vld [vmem:[%s4 + $0xe0] sm:$0xff]
      %v2250 = vld [vmem:[%s4 + $0xe8] sm:$0xff]
      %v2251 = vld [vmem:[%s4 + $0xf0] sm:$0xff]
      %v2252 = vld [vmem:[%s4 + $0xf8] sm:$0xff]
      %2254 = vset.pattern.permute.xlu0 0
      %2255 = vperm.xlu0 %2254, %v2221
      %v2256 = vpop.permute.xlu0 %2255
      %2259 = vset.pattern.permute.xlu0 0
      %2260 = vperm.xlu0 %2259, %v2222
      %v2261 = vpop.permute.xlu0 %2260
      %2264 = vset.pattern.permute.xlu0 0
      %2265 = vperm.xlu0 %2264, %v2223
      %v2266 = vpop.permute.xlu0 %2265
      %2269 = vset.pattern.permute.xlu0 0
      %2270 = vperm.xlu0 %2269, %v2224
      %v2271 = vpop.permute.xlu0 %2270
      %2274 = vset.pattern.permute.xlu0 0
      %2275 = vperm.xlu0 %2274, %v2225
      %v2276 = vpop.permute.xlu0 %2275
      %2279 = vset.pattern.permute.xlu0 0
      %2280 = vperm.xlu0 %2279, %v2226
      %v2281 = vpop.permute.xlu0 %2280
      %2284 = vset.pattern.permute.xlu0 0
      %2285 = vperm.xlu0 %2284, %v2227
      %v2286 = vpop.permute.xlu0 %2285
      %2289 = vset.pattern.permute.xlu0 0
      %2290 = vperm.xlu0 %2289, %v2228
      %v2291 = vpop.permute.xlu0 %2290
      %2294 = vset.pattern.permute.xlu0 0
      %2295 = vperm.xlu0 %2294, %v2229
      %v2296 = vpop.permute.xlu0 %2295
      %2299 = vset.pattern.permute.xlu0 0
      %2300 = vperm.xlu0 %2299, %v2230
      %v2301 = vpop.permute.xlu0 %2300
      %2304 = vset.pattern.permute.xlu0 0
      %2305 = vperm.xlu0 %2304, %v2231
      %v2306 = vpop.permute.xlu0 %2305
      %2309 = vset.pattern.permute.xlu0 0
      %2310 = vperm.xlu0 %2309, %v2232
      %v2311 = vpop.permute.xlu0 %2310
      %2314 = vset.pattern.permute.xlu0 0
      %2315 = vperm.xlu0 %2314, %v2233
      %v2316 = vpop.permute.xlu0 %2315
      %2319 = vset.pattern.permute.xlu0 0
      %2320 = vperm.xlu0 %2319, %v2234
      %v2321 = vpop.permute.xlu0 %2320
      %2324 = vset.pattern.permute.xlu0 0
      %2325 = vperm.xlu0 %2324, %v2235
      %v2326 = vpop.permute.xlu0 %2325
      %2329 = vset.pattern.permute.xlu0 0
      %2330 = vperm.xlu0 %2329, %v2236
      %v2331 = vpop.permute.xlu0 %2330
      %2334 = vset.pattern.permute.xlu0 0
      %2335 = vperm.xlu0 %2334, %v2237
      %v2336 = vpop.permute.xlu0 %2335
      %2339 = vset.pattern.permute.xlu0 0
      %2340 = vperm.xlu0 %2339, %v2238
      %v2341 = vpop.permute.xlu0 %2340
      %2344 = vset.pattern.permute.xlu0 0
      %2345 = vperm.xlu0 %2344, %v2239
      %v2346 = vpop.permute.xlu0 %2345
      %2349 = vset.pattern.permute.xlu0 0
      %2350 = vperm.xlu0 %2349, %v2240
      %v2351 = vpop.permute.xlu0 %2350
      %2354 = vset.pattern.permute.xlu0 0
      %2355 = vperm.xlu0 %2354, %v2241
      %v2356 = vpop.permute.xlu0 %2355
      %2359 = vset.pattern.permute.xlu0 0
      %2360 = vperm.xlu0 %2359, %v2242
      %v2361 = vpop.permute.xlu0 %2360
      %2364 = vset.pattern.permute.xlu0 0
      %2365 = vperm.xlu0 %2364, %v2243
      %v2366 = vpop.permute.xlu0 %2365
      %2369 = vset.pattern.permute.xlu0 0
      %2370 = vperm.xlu0 %2369, %v2244
      %v2371 = vpop.permute.xlu0 %2370
      %2374 = vset.pattern.permute.xlu0 0
      %2375 = vperm.xlu0 %2374, %v2245
      %v2376 = vpop.permute.xlu0 %2375
      %2379 = vset.pattern.permute.xlu0 0
      %2380 = vperm.xlu0 %2379, %v2246
      %v2381 = vpop.permute.xlu0 %2380
      %2384 = vset.pattern.permute.xlu0 0
      %2385 = vperm.xlu0 %2384, %v2247
      %v2386 = vpop.permute.xlu0 %2385
      %2389 = vset.pattern.permute.xlu0 0
      %2390 = vperm.xlu0 %2389, %v2248
      %v2391 = vpop.permute.xlu0 %2390
      %2394 = vset.pattern.permute.xlu0 0
      %2395 = vperm.xlu0 %2394, %v2249
      %v2396 = vpop.permute.xlu0 %2395
      %2399 = vset.pattern.permute.xlu0 0
      %2400 = vperm.xlu0 %2399, %v2250
      %v2401 = vpop.permute.xlu0 %2400
      %2404 = vset.pattern.permute.xlu0 0
      %2405 = vperm.xlu0 %2404, %v2251
      %v2406 = vpop.permute.xlu0 %2405
      %2409 = vset.pattern.permute.xlu0 0
      %2410 = vperm.xlu0 %2409, %v2252
      %v2411 = vpop.permute.xlu0 %2410
      %v2477 = vunpack.c.l.b16 %v2029
      %v2478 = vunpack.c.h.b16 %v2029
      %v2479 = vunpack.c.l.b16 %v2030
      %v2480 = vunpack.c.h.b16 %v2030
      %v2481 = vunpack.c.l.b16 %v2031
      %v2482 = vunpack.c.h.b16 %v2031
      %v2483 = vunpack.c.l.b16 %v2032
      %v2484 = vunpack.c.h.b16 %v2032
      %v2485 = vunpack.c.l.b16 %v2033
      %v2486 = vunpack.c.h.b16 %v2033
      %v2487 = vunpack.c.l.b16 %v2034
      %v2488 = vunpack.c.h.b16 %v2034
      %v2489 = vunpack.c.l.b16 %v2035
      %v2490 = vunpack.c.h.b16 %v2035
      %v2491 = vunpack.c.l.b16 %v2036
      %v2492 = vunpack.c.h.b16 %v2036
      %v2493 = vunpack.c.l.b16 %v2037
      %v2494 = vunpack.c.h.b16 %v2037
      %v2495 = vunpack.c.l.b16 %v2038
      %v2496 = vunpack.c.h.b16 %v2038
      %v2497 = vunpack.c.l.b16 %v2039
      %v2498 = vunpack.c.h.b16 %v2039
      %v2499 = vunpack.c.l.b16 %v2040
      %v2500 = vunpack.c.h.b16 %v2040
      %v2501 = vunpack.c.l.b16 %v2041
      %v2502 = vunpack.c.h.b16 %v2041
      %v2503 = vunpack.c.l.b16 %v2042
      %v2504 = vunpack.c.h.b16 %v2042
      %v2505 = vunpack.c.l.b16 %v2043
      %v2506 = vunpack.c.h.b16 %v2043
      %v2507 = vunpack.c.l.b16 %v2044
      %v2508 = vunpack.c.h.b16 %v2044
      %v2509 = vunpack.c.l.b16 %v2045
      %v2510 = vunpack.c.h.b16 %v2045
      %v2511 = vunpack.c.l.b16 %v2046
      %v2512 = vunpack.c.h.b16 %v2046
      %v2513 = vunpack.c.l.b16 %v2047
      %v2514 = vunpack.c.h.b16 %v2047
      %v2515 = vunpack.c.l.b16 %v2048
      %v2516 = vunpack.c.h.b16 %v2048
      %v2517 = vunpack.c.l.b16 %v2049
      %v2518 = vunpack.c.h.b16 %v2049
      %v2519 = vunpack.c.l.b16 %v2050
      %v2520 = vunpack.c.h.b16 %v2050
      %v2521 = vunpack.c.l.b16 %v2051
      %v2522 = vunpack.c.h.b16 %v2051
      %v2523 = vunpack.c.l.b16 %v2052
      %v2524 = vunpack.c.h.b16 %v2052
      %v2525 = vunpack.c.l.b16 %v2053
      %v2526 = vunpack.c.h.b16 %v2053
      %v2527 = vunpack.c.l.b16 %v2054
      %v2528 = vunpack.c.h.b16 %v2054
      %v2529 = vunpack.c.l.b16 %v2055
      %v2530 = vunpack.c.h.b16 %v2055
      %v2531 = vunpack.c.l.b16 %v2056
      %v2532 = vunpack.c.h.b16 %v2056
      %v2533 = vunpack.c.l.b16 %v2057
      %v2534 = vunpack.c.h.b16 %v2057
      %v2535 = vunpack.c.l.b16 %v2058
      %v2536 = vunpack.c.h.b16 %v2058
      %v2537 = vunpack.c.l.b16 %v2059
      %v2538 = vunpack.c.h.b16 %v2059
      %v2539 = vunpack.c.l.b16 %v2060
      %v2540 = vunpack.c.h.b16 %v2060
      %v2541 = vunpack.c.l.b16 %v2061
      %v2542 = vunpack.c.h.b16 %v2061
      %v2543 = vunpack.c.l.b16 %v2062
      %v2544 = vunpack.c.h.b16 %v2062
      %v2545 = vunpack.c.l.b16 %v2063
      %v2546 = vunpack.c.h.b16 %v2063
      %v2547 = vunpack.c.l.b16 %v2064
      %v2548 = vunpack.c.h.b16 %v2064
      %v2549 = vunpack.c.l.b16 %v2065
      %v2550 = vunpack.c.h.b16 %v2065
      %v2551 = vunpack.c.l.b16 %v2066
      %v2552 = vunpack.c.h.b16 %v2066
      %v2553 = vunpack.c.l.b16 %v2067
      %v2554 = vunpack.c.h.b16 %v2067
      %v2555 = vunpack.c.l.b16 %v2068
      %v2556 = vunpack.c.h.b16 %v2068
      %v2557 = vunpack.c.l.b16 %v2069
      %v2558 = vunpack.c.h.b16 %v2069
      %v2559 = vunpack.c.l.b16 %v2070
      %v2560 = vunpack.c.h.b16 %v2070
      %v2561 = vunpack.c.l.b16 %v2071
      %v2562 = vunpack.c.h.b16 %v2071
      %v2563 = vunpack.c.l.b16 %v2072
      %v2564 = vunpack.c.h.b16 %v2072
      %v2565 = vunpack.c.l.b16 %v2073
      %v2566 = vunpack.c.h.b16 %v2073
      %v2567 = vunpack.c.l.b16 %v2074
      %v2568 = vunpack.c.h.b16 %v2074
      %v2569 = vunpack.c.l.b16 %v2075
      %v2570 = vunpack.c.h.b16 %v2075
      %v2571 = vunpack.c.l.b16 %v2076
      %v2572 = vunpack.c.h.b16 %v2076
      %v2573 = vunpack.c.l.b16 %v2077
      %v2574 = vunpack.c.h.b16 %v2077
      %v2575 = vunpack.c.l.b16 %v2078
      %v2576 = vunpack.c.h.b16 %v2078
      %v2577 = vunpack.c.l.b16 %v2079
      %v2578 = vunpack.c.h.b16 %v2079
      %v2579 = vunpack.c.l.b16 %v2080
      %v2580 = vunpack.c.h.b16 %v2080
      %v2581 = vunpack.c.l.b16 %v2081
      %v2582 = vunpack.c.h.b16 %v2081
      %v2583 = vunpack.c.l.b16 %v2082
      %v2584 = vunpack.c.h.b16 %v2082
      %v2585 = vunpack.c.l.b16 %v2083
      %v2586 = vunpack.c.h.b16 %v2083
      %v2587 = vunpack.c.l.b16 %v2084
      %v2588 = vunpack.c.h.b16 %v2084
      %v2589 = vunpack.c.l.b16 %v2085
      %v2590 = vunpack.c.h.b16 %v2085
      %v2591 = vunpack.c.l.b16 %v2086
      %v2592 = vunpack.c.h.b16 %v2086
      %v2593 = vunpack.c.l.b16 %v2087
      %v2594 = vunpack.c.h.b16 %v2087
      %v2595 = vunpack.c.l.b16 %v2088
      %v2596 = vunpack.c.h.b16 %v2088
      %v2597 = vunpack.c.l.b16 %v2089
      %v2598 = vunpack.c.h.b16 %v2089
      %v2599 = vunpack.c.l.b16 %v2090
      %v2600 = vunpack.c.h.b16 %v2090
      %v2601 = vunpack.c.l.b16 %v2091
      %v2602 = vunpack.c.h.b16 %v2091
      %v2603 = vunpack.c.l.b16 %v2092
      %v2604 = vunpack.c.h.b16 %v2092
      %v2605 = vpack.c.b16 %v2481, %v2477
      %v2606 = vpack.c.b16 %v2482, %v2478
      %v2607 = vpack.c.b16 %v2483, %v2479
      %v2608 = vpack.c.b16 %v2484, %v2480
      %v2609 = vpack.c.b16 %v2489, %v2485
      %v2610 = vpack.c.b16 %v2490, %v2486
      %v2611 = vpack.c.b16 %v2491, %v2487
      %v2612 = vpack.c.b16 %v2492, %v2488
      %v2613 = vpack.c.b16 %v2497, %v2493
      %v2614 = vpack.c.b16 %v2498, %v2494
      %v2615 = vpack.c.b16 %v2499, %v2495
      %v2616 = vpack.c.b16 %v2500, %v2496
      %v2617 = vpack.c.b16 %v2505, %v2501
      %v2618 = vpack.c.b16 %v2506, %v2502
      %v2619 = vpack.c.b16 %v2507, %v2503
      %v2620 = vpack.c.b16 %v2508, %v2504
      %v2621 = vpack.c.b16 %v2513, %v2509
      %v2622 = vpack.c.b16 %v2514, %v2510
      %v2623 = vpack.c.b16 %v2515, %v2511
      %v2624 = vpack.c.b16 %v2516, %v2512
      %v2625 = vpack.c.b16 %v2521, %v2517
      %v2626 = vpack.c.b16 %v2522, %v2518
      %v2627 = vpack.c.b16 %v2523, %v2519
      %v2628 = vpack.c.b16 %v2524, %v2520
      %v2629 = vpack.c.b16 %v2529, %v2525
      %v2630 = vpack.c.b16 %v2530, %v2526
      %v2631 = vpack.c.b16 %v2531, %v2527
      %v2632 = vpack.c.b16 %v2532, %v2528
      %v2633 = vpack.c.b16 %v2537, %v2533
      %v2634 = vpack.c.b16 %v2538, %v2534
      %v2635 = vpack.c.b16 %v2539, %v2535
      %v2636 = vpack.c.b16 %v2540, %v2536
      %v2637 = vpack.c.b16 %v2545, %v2541
      %v2638 = vpack.c.b16 %v2546, %v2542
      %v2639 = vpack.c.b16 %v2547, %v2543
      %v2640 = vpack.c.b16 %v2548, %v2544
      %v2641 = vpack.c.b16 %v2553, %v2549
      %v2642 = vpack.c.b16 %v2554, %v2550
      %v2643 = vpack.c.b16 %v2555, %v2551
      %v2644 = vpack.c.b16 %v2556, %v2552
      %v2645 = vpack.c.b16 %v2561, %v2557
      %v2646 = vpack.c.b16 %v2562, %v2558
      %v2647 = vpack.c.b16 %v2563, %v2559
      %v2648 = vpack.c.b16 %v2564, %v2560
      %v2649 = vpack.c.b16 %v2569, %v2565
      %v2650 = vpack.c.b16 %v2570, %v2566
      %v2651 = vpack.c.b16 %v2571, %v2567
      %v2652 = vpack.c.b16 %v2572, %v2568
      %v2653 = vpack.c.b16 %v2577, %v2573
      %v2654 = vpack.c.b16 %v2578, %v2574
      %v2655 = vpack.c.b16 %v2579, %v2575
      %v2656 = vpack.c.b16 %v2580, %v2576
      %v2657 = vpack.c.b16 %v2585, %v2581
      %v2658 = vpack.c.b16 %v2586, %v2582
      %v2659 = vpack.c.b16 %v2587, %v2583
      %v2660 = vpack.c.b16 %v2588, %v2584
      %v2661 = vpack.c.b16 %v2593, %v2589
      %v2662 = vpack.c.b16 %v2594, %v2590
      %v2663 = vpack.c.b16 %v2595, %v2591
      %v2664 = vpack.c.b16 %v2596, %v2592
      %v2665 = vpack.c.b16 %v2601, %v2597
      %v2666 = vpack.c.b16 %v2602, %v2598
      %v2667 = vpack.c.b16 %v2603, %v2599
      %v2668 = vpack.c.b16 %v2604, %v2600
      %2733 = vmatprep.subr.bf16.mxu0 %v2094
      %2734 = vmatpush1.bf16.msra.mxu0 %v2093
      %2735 = vmatprep.subr.bf16.mxu0 %v2098
      %2736 = vmatpush1.bf16.msra.mxu0 %v2097
      %2737 = vmatprep.subr.bf16.mxu0 %v2102
      %2738 = vmatpush1.bf16.msra.mxu0 %v2101
      %2739 = vmatprep.subr.bf16.mxu0 %v2106
      %2740 = vmatpush1.bf16.msra.mxu0 %v2105
      %2741 = vmatprep.subr.bf16.mxu0 %v2110
      %2742 = vmatpush1.bf16.msra.mxu0 %v2109
      %2743 = vmatprep.subr.bf16.mxu0 %v2114
      %2744 = vmatpush1.bf16.msra.mxu0 %v2113
      %2745 = vmatprep.subr.bf16.mxu0 %v2118
      %2746 = vmatpush1.bf16.msra.mxu0 %v2117
      %2747 = vmatprep.subr.bf16.mxu0 %v2122
      %2748 = vmatpush1.bf16.msra.mxu0 %v2121
      %2749 = vmatprep.subr.bf16.mxu0 %v2126
      %2750 = vmatpush1.bf16.msra.mxu0 %v2125
      %2751 = vmatprep.subr.bf16.mxu0 %v2130
      %2752 = vmatpush1.bf16.msra.mxu0 %v2129
      %2753 = vmatprep.subr.bf16.mxu0 %v2134
      %2754 = vmatpush1.bf16.msra.mxu0 %v2133
      %2755 = vmatprep.subr.bf16.mxu0 %v2138
      %2756 = vmatpush1.bf16.msra.mxu0 %v2137
      %2757 = vmatprep.subr.bf16.mxu0 %v2142
      %2758 = vmatpush1.bf16.msra.mxu0 %v2141
      %2759 = vmatprep.subr.bf16.mxu0 %v2146
      %2760 = vmatpush1.bf16.msra.mxu0 %v2145
      %2761 = vmatprep.subr.bf16.mxu0 %v2150
      %2762 = vmatpush1.bf16.msra.mxu0 %v2149
      %2763 = vmatprep.subr.bf16.mxu0 %v2154
      %2764 = vmatpush1.bf16.msra.mxu0 %v2153
      %2765 = vmatprep.mubr.bf16.mxu0 %v2606
      %2766 = vmatmul.mubr.bf16.gmra.mrb[0].mxu0 %v2605
      %v2767 = vpop.f32.mrb[0].mxu0
      %v2768 = vadd.f32 %v2256, %v2767
      %v2769 = vpop.f32.mrb[0].mxu0
      %v2770 = vadd.f32 %v2256, %v2769
      %v2771 = vpop.f32.mrb[0].mxu0
      %v2772 = vadd.f32 %v2261, %v2771
      %v2773 = vpop.f32.mrb[0].mxu0
      %v2774 = vadd.f32 %v2261, %v2773
      %2775 = vmatprep.mubr.bf16.mxu0 %v2610
      %2776 = vmatmul.mubr.bf16.gmra.mrb[0].mxu0 %v2609
      %v2777 = vpop.f32.mrb[0].mxu0
      %v2778 = vadd.f32 %v2266, %v2777
      %v2779 = vpop.f32.mrb[0].mxu0
      %v2780 = vadd.f32 %v2266, %v2779
      %v2781 = vpop.f32.mrb[0].mxu0
      %v2782 = vadd.f32 %v2271, %v2781
      %v2783 = vpop.f32.mrb[0].mxu0
      %v2784 = vadd.f32 %v2271, %v2783
      %2785 = vmatprep.mubr.bf16.mxu0 %v2614
      %2786 = vmatmul.mubr.bf16.gmra.mrb[0].mxu0 %v2613
      %v2787 = vpop.f32.mrb[0].mxu0
      %v2788 = vadd.f32 %v2276, %v2787
      %v2789 = vpop.f32.mrb[0].mxu0
      %v2790 = vadd.f32 %v2276, %v2789
      %v2791 = vpop.f32.mrb[0].mxu0
      %v2792 = vadd.f32 %v2281, %v2791
      %v2793 = vpop.f32.mrb[0].mxu0
      %v2794 = vadd.f32 %v2281, %v2793
      %2795 = vmatprep.mubr.bf16.mxu0 %v2618
      %2796 = vmatmul.mubr.bf16.gmra.mrb[0].mxu0 %v2617
      %v2797 = vpop.f32.mrb[0].mxu0
      %v2798 = vadd.f32 %v2286, %v2797
      %v2799 = vpop.f32.mrb[0].mxu0
      %v2800 = vadd.f32 %v2286, %v2799
      %v2801 = vpop.f32.mrb[0].mxu0
      %v2802 = vadd.f32 %v2291, %v2801
      %v2803 = vpop.f32.mrb[0].mxu0
      %v2804 = vadd.f32 %v2291, %v2803
      %2805 = vmatprep.mubr.bf16.mxu0 %v2622
      %2806 = vmatmul.mubr.bf16.gmra.mrb[0].mxu0 %v2621
      %v2807 = vpop.f32.mrb[0].mxu0
      %v2808 = vadd.f32 %v2296, %v2807
      %v2809 = vpop.f32.mrb[0].mxu0
      %v2810 = vadd.f32 %v2296, %v2809
      %v2811 = vpop.f32.mrb[0].mxu0
      %v2812 = vadd.f32 %v2301, %v2811
      %v2813 = vpop.f32.mrb[0].mxu0
      %v2814 = vadd.f32 %v2301, %v2813
      %2815 = vmatprep.mubr.bf16.mxu0 %v2626
      %2816 = vmatmul.mubr.bf16.gmra.mrb[0].mxu0 %v2625
      %v2817 = vpop.f32.mrb[0].mxu0
      %v2818 = vadd.f32 %v2306, %v2817
      %v2819 = vpop.f32.mrb[0].mxu0
      %v2820 = vadd.f32 %v2306, %v2819
      %v2821 = vpop.f32.mrb[0].mxu0
      %v2822 = vadd.f32 %v2311, %v2821
      %v2823 = vpop.f32.mrb[0].mxu0
      %v2824 = vadd.f32 %v2311, %v2823
      %2825 = vmatprep.mubr.bf16.mxu0 %v2630
      %2826 = vmatmul.mubr.bf16.gmra.mrb[0].mxu0 %v2629
      %v2827 = vpop.f32.mrb[0].mxu0
      %v2828 = vadd.f32 %v2316, %v2827
      %v2829 = vpop.f32.mrb[0].mxu0
      %v2830 = vadd.f32 %v2316, %v2829
      %v2831 = vpop.f32.mrb[0].mxu0
      %v2832 = vadd.f32 %v2321, %v2831
      %v2833 = vpop.f32.mrb[0].mxu0
      %v2834 = vadd.f32 %v2321, %v2833
      %2835 = vmatprep.mubr.bf16.mxu0 %v2634
      %2836 = vmatmul.mubr.bf16.gmra.mrb[0].mxu0 %v2633
      %v2837 = vpop.f32.mrb[0].mxu0
      %v2838 = vadd.f32 %v2326, %v2837
      %v2839 = vpop.f32.mrb[0].mxu0
      %v2840 = vadd.f32 %v2326, %v2839
      %v2841 = vpop.f32.mrb[0].mxu0
      %v2842 = vadd.f32 %v2331, %v2841
      %v2843 = vpop.f32.mrb[0].mxu0
      %v2844 = vadd.f32 %v2331, %v2843
      %2845 = vmatprep.mubr.bf16.mxu0 %v2638
      %2846 = vmatmul.mubr.bf16.gmra.mrb[0].mxu0 %v2637
      %v2847 = vpop.f32.mrb[0].mxu0
      %v2848 = vadd.f32 %v2336, %v2847
      %v2849 = vpop.f32.mrb[0].mxu0
      %v2850 = vadd.f32 %v2336, %v2849
      %v2851 = vpop.f32.mrb[0].mxu0
      %v2852 = vadd.f32 %v2341, %v2851
      %v2853 = vpop.f32.mrb[0].mxu0
      %v2854 = vadd.f32 %v2341, %v2853
      %2855 = vmatprep.mubr.bf16.mxu0 %v2642
      %2856 = vmatmul.mubr.bf16.gmra.mrb[0].mxu0 %v2641
      %v2857 = vpop.f32.mrb[0].mxu0
      %v2858 = vadd.f32 %v2346, %v2857
      %v2859 = vpop.f32.mrb[0].mxu0
      %v2860 = vadd.f32 %v2346, %v2859
      %v2861 = vpop.f32.mrb[0].mxu0
      %v2862 = vadd.f32 %v2351, %v2861
      %v2863 = vpop.f32.mrb[0].mxu0
      %v2864 = vadd.f32 %v2351, %v2863
      %2865 = vmatprep.mubr.bf16.mxu0 %v2646
      %2866 = vmatmul.mubr.bf16.gmra.mrb[0].mxu0 %v2645
      %v2867 = vpop.f32.mrb[0].mxu0
      %v2868 = vadd.f32 %v2356, %v2867
      %v2869 = vpop.f32.mrb[0].mxu0
      %v2870 = vadd.f32 %v2356, %v2869
      %v2871 = vpop.f32.mrb[0].mxu0
      %v2872 = vadd.f32 %v2361, %v2871
      %v2873 = vpop.f32.mrb[0].mxu0
      %v2874 = vadd.f32 %v2361, %v2873
      %2875 = vmatprep.mubr.bf16.mxu0 %v2650
      %2876 = vmatmul.mubr.bf16.gmra.mrb[0].mxu0 %v2649
      %v2877 = vpop.f32.mrb[0].mxu0
      %v2878 = vadd.f32 %v2366, %v2877
      %v2879 = vpop.f32.mrb[0].mxu0
      %v2880 = vadd.f32 %v2366, %v2879
      %v2881 = vpop.f32.mrb[0].mxu0
      %v2882 = vadd.f32 %v2371, %v2881
      %v2883 = vpop.f32.mrb[0].mxu0
      %v2884 = vadd.f32 %v2371, %v2883
      %2885 = vmatprep.mubr.bf16.mxu0 %v2654
      %2886 = vmatmul.mubr.bf16.gmra.mrb[0].mxu0 %v2653
      %v2887 = vpop.f32.mrb[0].mxu0
      %v2888 = vadd.f32 %v2376, %v2887
      %v2889 = vpop.f32.mrb[0].mxu0
      %v2890 = vadd.f32 %v2376, %v2889
      %v2891 = vpop.f32.mrb[0].mxu0
      %v2892 = vadd.f32 %v2381, %v2891
      %v2893 = vpop.f32.mrb[0].mxu0
      %v2894 = vadd.f32 %v2381, %v2893
      %2895 = vmatprep.mubr.bf16.mxu0 %v2658
      %2896 = vmatmul.mubr.bf16.gmra.mrb[0].mxu0 %v2657
      %v2897 = vpop.f32.mrb[0].mxu0
      %v2898 = vadd.f32 %v2386, %v2897
      %v2899 = vpop.f32.mrb[0].mxu0
      %v2900 = vadd.f32 %v2386, %v2899
      %v2901 = vpop.f32.mrb[0].mxu0
      %v2902 = vadd.f32 %v2391, %v2901
      %v2903 = vpop.f32.mrb[0].mxu0
      %v2904 = vadd.f32 %v2391, %v2903
      %2905 = vmatprep.mubr.bf16.mxu0 %v2662
      %2906 = vmatmul.mubr.bf16.gmra.mrb[0].mxu0 %v2661
      %v2907 = vpop.f32.mrb[0].mxu0
      %v2908 = vadd.f32 %v2396, %v2907
      %v2909 = vpop.f32.mrb[0].mxu0
      %v2910 = vadd.f32 %v2396, %v2909
      %v2911 = vpop.f32.mrb[0].mxu0
      %v2912 = vadd.f32 %v2401, %v2911
      %v2913 = vpop.f32.mrb[0].mxu0
      %v2914 = vadd.f32 %v2401, %v2913
      %2915 = vmatprep.mubr.bf16.mxu0 %v2666
      %2916 = vmatmul.mubr.bf16.gmra.mrb[0].mxu0 %v2665
      %v2917 = vpop.f32.mrb[0].mxu0
      %v2918 = vadd.f32 %v2406, %v2917
      %v2919 = vpop.f32.mrb[0].mxu0
      %v2920 = vadd.f32 %v2406, %v2919
      %v2921 = vpop.f32.mrb[0].mxu0
      %v2922 = vadd.f32 %v2411, %v2921
      %v2923 = vpop.f32.mrb[0].mxu0
      %v2924 = vadd.f32 %v2411, %v2923
      %2925 = vdwg.mxu0
      %2926 = vmatprep.subr.bf16.mxu0 %v2158
      %2927 = vmatpush1.bf16.msra.mxu0 %v2157
      %2928 = vmatprep.subr.bf16.mxu0 %v2162
      %2929 = vmatpush1.bf16.msra.mxu0 %v2161
      %2930 = vmatprep.subr.bf16.mxu0 %v2166
      %2931 = vmatpush1.bf16.msra.mxu0 %v2165
      %2932 = vmatprep.subr.bf16.mxu0 %v2170
      %2933 = vmatpush1.bf16.msra.mxu0 %v2169
      %2934 = vmatprep.subr.bf16.mxu0 %v2174
      %2935 = vmatpush1.bf16.msra.mxu0 %v2173
      %2936 = vmatprep.subr.bf16.mxu0 %v2178
      %2937 = vmatpush1.bf16.msra.mxu0 %v2177
      %2938 = vmatprep.subr.bf16.mxu0 %v2182
      %2939 = vmatpush1.bf16.msra.mxu0 %v2181
      %2940 = vmatprep.subr.bf16.mxu0 %v2186
      %2941 = vmatpush1.bf16.msra.mxu0 %v2185
      %2942 = vmatprep.subr.bf16.mxu0 %v2190
      %2943 = vmatpush1.bf16.msra.mxu0 %v2189
      %2944 = vmatprep.subr.bf16.mxu0 %v2194
      %2945 = vmatpush1.bf16.msra.mxu0 %v2193
      %2946 = vmatprep.subr.bf16.mxu0 %v2198
      %2947 = vmatpush1.bf16.msra.mxu0 %v2197
      %2948 = vmatprep.subr.bf16.mxu0 %v2202
      %2949 = vmatpush1.bf16.msra.mxu0 %v2201
      %2950 = vmatprep.subr.bf16.mxu0 %v2206
      %2951 = vmatpush1.bf16.msra.mxu0 %v2205
      %2952 = vmatprep.subr.bf16.mxu0 %v2210
      %2953 = vmatpush1.bf16.msra.mxu0 %v2209
      %2954 = vmatprep.subr.bf16.mxu0 %v2214
      %2955 = vmatpush1.bf16.msra.mxu0 %v2213
      %2956 = vmatprep.subr.bf16.mxu0 %v2218
      %2957 = vmatpush1.bf16.msra.mxu0 %v2217
      %2958 = vmatprep.mubr.bf16.mxu0 %v2608
      %2959 = vmatmul.mubr.bf16.gmra.mrb[0].mxu0 %v2607
      %v2960 = vpop.f32.mrb[0].mxu0
      %v2961 = vadd.f32 %v2768, %v2960
      %v2962 = vpop.f32.mrb[0].mxu0
      %v2963 = vadd.f32 %v2770, %v2962
      %v2964 = vpop.f32.mrb[0].mxu0
      %v2965 = vadd.f32 %v2772, %v2964
      %v2966 = vpop.f32.mrb[0].mxu0
      %v2967 = vadd.f32 %v2774, %v2966
      %2968 = vmatprep.mubr.bf16.mxu0 %v2612
      %2969 = vmatmul.mubr.bf16.gmra.mrb[0].mxu0 %v2611
      %v2970 = vpop.f32.mrb[0].mxu0
      %v2971 = vadd.f32 %v2778, %v2970
      %v2972 = vpop.f32.mrb[0].mxu0
      %v2973 = vadd.f32 %v2780, %v2972
      %v2974 = vpop.f32.mrb[0].mxu0
      %v2975 = vadd.f32 %v2782, %v2974
      %v2976 = vpop.f32.mrb[0].mxu0
      %v2977 = vadd.f32 %v2784, %v2976
      %2978 = vmatprep.mubr.bf16.mxu0 %v2616
      %2979 = vmatmul.mubr.bf16.gmra.mrb[0].mxu0 %v2615
      %v2980 = vpop.f32.mrb[0].mxu0
      %v2981 = vadd.f32 %v2788, %v2980
      %v2982 = vpop.f32.mrb[0].mxu0
      %v2983 = vadd.f32 %v2790, %v2982
      %v2984 = vpop.f32.mrb[0].mxu0
      %v2985 = vadd.f32 %v2792, %v2984
      %v2986 = vpop.f32.mrb[0].mxu0
      %v2987 = vadd.f32 %v2794, %v2986
      %2988 = vmatprep.mubr.bf16.mxu0 %v2620
      %2989 = vmatmul.mubr.bf16.gmra.mrb[0].mxu0 %v2619
      %v2990 = vpop.f32.mrb[0].mxu0
      %v2991 = vadd.f32 %v2798, %v2990
      %v2992 = vpop.f32.mrb[0].mxu0
      %v2993 = vadd.f32 %v2800, %v2992
      %v2994 = vpop.f32.mrb[0].mxu0
      %v2995 = vadd.f32 %v2802, %v2994
      %v2996 = vpop.f32.mrb[0].mxu0
      %v2997 = vadd.f32 %v2804, %v2996
      %2998 = vmatprep.mubr.bf16.mxu0 %v2624
      %2999 = vmatmul.mubr.bf16.gmra.mrb[0].mxu0 %v2623
      %v3000 = vpop.f32.mrb[0].mxu0
      %v3001 = vadd.f32 %v2808, %v3000
      %v3002 = vpop.f32.mrb[0].mxu0
      %v3003 = vadd.f32 %v2810, %v3002
      %v3004 = vpop.f32.mrb[0].mxu0
      %v3005 = vadd.f32 %v2812, %v3004
      %v3006 = vpop.f32.mrb[0].mxu0
      %v3007 = vadd.f32 %v2814, %v3006
      %3008 = vmatprep.mubr.bf16.mxu0 %v2628
      %3009 = vmatmul.mubr.bf16.gmra.mrb[0].mxu0 %v2627
      %v3010 = vpop.f32.mrb[0].mxu0
      %v3011 = vadd.f32 %v2818, %v3010
      %v3012 = vpop.f32.mrb[0].mxu0
      %v3013 = vadd.f32 %v2820, %v3012
      %v3014 = vpop.f32.mrb[0].mxu0
      %v3015 = vadd.f32 %v2822, %v3014
      %v3016 = vpop.f32.mrb[0].mxu0
      %v3017 = vadd.f32 %v2824, %v3016
      %3018 = vmatprep.mubr.bf16.mxu0 %v2632
      %3019 = vmatmul.mubr.bf16.gmra.mrb[0].mxu0 %v2631
      %v3020 = vpop.f32.mrb[0].mxu0
      %v3021 = vadd.f32 %v2828, %v3020
      %v3022 = vpop.f32.mrb[0].mxu0
      %v3023 = vadd.f32 %v2830, %v3022
      %v3024 = vpop.f32.mrb[0].mxu0
      %v3025 = vadd.f32 %v2832, %v3024
      %v3026 = vpop.f32.mrb[0].mxu0
      %v3027 = vadd.f32 %v2834, %v3026
      %3028 = vmatprep.mubr.bf16.mxu0 %v2636
      %3029 = vmatmul.mubr.bf16.gmra.mrb[0].mxu0 %v2635
      %v3030 = vpop.f32.mrb[0].mxu0
      %v3031 = vadd.f32 %v2838, %v3030
      %v3032 = vpop.f32.mrb[0].mxu0
      %v3033 = vadd.f32 %v2840, %v3032
      %v3034 = vpop.f32.mrb[0].mxu0
      %v3035 = vadd.f32 %v2842, %v3034
      %v3036 = vpop.f32.mrb[0].mxu0
      %v3037 = vadd.f32 %v2844, %v3036
      %3038 = vmatprep.mubr.bf16.mxu0 %v2640
      %3039 = vmatmul.mubr.bf16.gmra.mrb[0].mxu0 %v2639
      %v3040 = vpop.f32.mrb[0].mxu0
      %v3041 = vadd.f32 %v2848, %v3040
      %v3042 = vpop.f32.mrb[0].mxu0
      %v3043 = vadd.f32 %v2850, %v3042
      %v3044 = vpop.f32.mrb[0].mxu0
      %v3045 = vadd.f32 %v2852, %v3044
      %v3046 = vpop.f32.mrb[0].mxu0
      %v3047 = vadd.f32 %v2854, %v3046
      %3048 = vmatprep.mubr.bf16.mxu0 %v2644
      %3049 = vmatmul.mubr.bf16.gmra.mrb[0].mxu0 %v2643
      %v3050 = vpop.f32.mrb[0].mxu0
      %v3051 = vadd.f32 %v2858, %v3050
      %v3052 = vpop.f32.mrb[0].mxu0
      %v3053 = vadd.f32 %v2860, %v3052
      %v3054 = vpop.f32.mrb[0].mxu0
      %v3055 = vadd.f32 %v2862, %v3054
      %v3056 = vpop.f32.mrb[0].mxu0
      %v3057 = vadd.f32 %v2864, %v3056
      %3058 = vmatprep.mubr.bf16.mxu0 %v2648
      %3059 = vmatmul.mubr.bf16.gmra.mrb[0].mxu0 %v2647
      %v3060 = vpop.f32.mrb[0].mxu0
      %v3061 = vadd.f32 %v2868, %v3060
      %v3062 = vpop.f32.mrb[0].mxu0
      %v3063 = vadd.f32 %v2870, %v3062
      %v3064 = vpop.f32.mrb[0].mxu0
      %v3065 = vadd.f32 %v2872, %v3064
      %v3066 = vpop.f32.mrb[0].mxu0
      %v3067 = vadd.f32 %v2874, %v3066
      %3068 = vmatprep.mubr.bf16.mxu0 %v2652
      %3069 = vmatmul.mubr.bf16.gmra.mrb[0].mxu0 %v2651
      %v3070 = vpop.f32.mrb[0].mxu0
      %v3071 = vadd.f32 %v2878, %v3070
      %v3072 = vpop.f32.mrb[0].mxu0
      %v3073 = vadd.f32 %v2880, %v3072
      %v3074 = vpop.f32.mrb[0].mxu0
      %v3075 = vadd.f32 %v2882, %v3074
      %v3076 = vpop.f32.mrb[0].mxu0
      %v3077 = vadd.f32 %v2884, %v3076
      %3078 = vmatprep.mubr.bf16.mxu0 %v2656
      %3079 = vmatmul.mubr.bf16.gmra.mrb[0].mxu0 %v2655
      %v3080 = vpop.f32.mrb[0].mxu0
      %v3081 = vadd.f32 %v2888, %v3080
      %v3082 = vpop.f32.mrb[0].mxu0
      %v3083 = vadd.f32 %v2890, %v3082
      %v3084 = vpop.f32.mrb[0].mxu0
      %v3085 = vadd.f32 %v2892, %v3084
      %v3086 = vpop.f32.mrb[0].mxu0
      %v3087 = vadd.f32 %v2894, %v3086
      %3088 = vmatprep.mubr.bf16.mxu0 %v2660
      %3089 = vmatmul.mubr.bf16.gmra.mrb[0].mxu0 %v2659
      %v3090 = vpop.f32.mrb[0].mxu0
      %v3091 = vadd.f32 %v2898, %v3090
      %v3092 = vpop.f32.mrb[0].mxu0
      %v3093 = vadd.f32 %v2900, %v3092
      %v3094 = vpop.f32.mrb[0].mxu0
      %v3095 = vadd.f32 %v2902, %v3094
      %v3096 = vpop.f32.mrb[0].mxu0
      %v3097 = vadd.f32 %v2904, %v3096
      %3098 = vmatprep.mubr.bf16.mxu0 %v2664
      %3099 = vmatmul.mubr.bf16.gmra.mrb[0].mxu0 %v2663
      %v3100 = vpop.f32.mrb[0].mxu0
      %v3101 = vadd.f32 %v2908, %v3100
      %v3102 = vpop.f32.mrb[0].mxu0
      %v3103 = vadd.f32 %v2910, %v3102
      %v3104 = vpop.f32.mrb[0].mxu0
      %v3105 = vadd.f32 %v2912, %v3104
      %v3106 = vpop.f32.mrb[0].mxu0
      %v3107 = vadd.f32 %v2914, %v3106
      %3108 = vmatprep.mubr.bf16.mxu0 %v2668
      %3109 = vmatmul.mubr.bf16.gmra.mrb[0].mxu0 %v2667
      %v3110 = vpop.f32.mrb[0].mxu0
      %v3111 = vadd.f32 %v2918, %v3110
      %v3112 = vpop.f32.mrb[0].mxu0
      %v3113 = vadd.f32 %v2920, %v3112
      %v3114 = vpop.f32.mrb[0].mxu0
      %v3115 = vadd.f32 %v2922, %v3114
      %v3116 = vpop.f32.mrb[0].mxu0
      %v3117 = vadd.f32 %v2924, %v3116
      %3118 = vdwg.mxu0
      %3119 = vmatprep.subr.bf16.mxu0 %v2096
      %3120 = vmatpush1.bf16.msra.mxu0 %v2095
      %3121 = vmatprep.subr.bf16.mxu0 %v2100
      %3122 = vmatpush1.bf16.msra.mxu0 %v2099
      %3123 = vmatprep.subr.bf16.mxu0 %v2104
      %3124 = vmatpush1.bf16.msra.mxu0 %v2103
      %3125 = vmatprep.subr.bf16.mxu0 %v2108
      %3126 = vmatpush1.bf16.msra.mxu0 %v2107
      %3127 = vmatprep.subr.bf16.mxu0 %v2112
      %3128 = vmatpush1.bf16.msra.mxu0 %v2111
      %3129 = vmatprep.subr.bf16.mxu0 %v2116
      %3130 = vmatpush1.bf16.msra.mxu0 %v2115
      %3131 = vmatprep.subr.bf16.mxu0 %v2120
      %3132 = vmatpush1.bf16.msra.mxu0 %v2119
      %3133 = vmatprep.subr.bf16.mxu0 %v2124
      %3134 = vmatpush1.bf16.msra.mxu0 %v2123
      %3135 = vmatprep.subr.bf16.mxu0 %v2128
      %3136 = vmatpush1.bf16.msra.mxu0 %v2127
      %3137 = vmatprep.subr.bf16.mxu0 %v2132
      %3138 = vmatpush1.bf16.msra.mxu0 %v2131
      %3139 = vmatprep.subr.bf16.mxu0 %v2136
      %3140 = vmatpush1.bf16.msra.mxu0 %v2135
      %3141 = vmatprep.subr.bf16.mxu0 %v2140
      %3142 = vmatpush1.bf16.msra.mxu0 %v2139
      %3143 = vmatprep.subr.bf16.mxu0 %v2144
      %3144 = vmatpush1.bf16.msra.mxu0 %v2143
      %3145 = vmatprep.subr.bf16.mxu0 %v2148
      %3146 = vmatpush1.bf16.msra.mxu0 %v2147
      %3147 = vmatprep.subr.bf16.mxu0 %v2152
      %3148 = vmatpush1.bf16.msra.mxu0 %v2151
      %3149 = vmatprep.subr.bf16.mxu0 %v2156
      %3150 = vmatpush1.bf16.msra.mxu0 %v2155
      %3151 = vmatprep.mubr.bf16.mxu0 %v2606
      %3152 = vmatmul.mubr.bf16.gmra.mrb[0].mxu0 %v2605
      %v3153 = vpop.f32.mrb[0].mxu0
      %v3154 = vadd.f32 %v2256, %v3153
      %v3155 = vpop.f32.mrb[0].mxu0
      %v3156 = vadd.f32 %v2256, %v3155
      %v3157 = vpop.f32.mrb[0].mxu0
      %v3158 = vadd.f32 %v2261, %v3157
      %v3159 = vpop.f32.mrb[0].mxu0
      %v3160 = vadd.f32 %v2261, %v3159
      %3161 = vmatprep.mubr.bf16.mxu0 %v2610
      %3162 = vmatmul.mubr.bf16.gmra.mrb[0].mxu0 %v2609
      %v3163 = vpop.f32.mrb[0].mxu0
      %v3164 = vadd.f32 %v2266, %v3163
      %v3165 = vpop.f32.mrb[0].mxu0
      %v3166 = vadd.f32 %v2266, %v3165
      %v3167 = vpop.f32.mrb[0].mxu0
      %v3168 = vadd.f32 %v2271, %v3167
      %v3169 = vpop.f32.mrb[0].mxu0
      %v3170 = vadd.f32 %v2271, %v3169
      %3171 = vmatprep.mubr.bf16.mxu0 %v2614
      %3172 = vmatmul.mubr.bf16.gmra.mrb[0].mxu0 %v2613
      %v3173 = vpop.f32.mrb[0].mxu0
      %v3174 = vadd.f32 %v2276, %v3173
      %v3175 = vpop.f32.mrb[0].mxu0
      %v3176 = vadd.f32 %v2276, %v3175
      %v3177 = vpop.f32.mrb[0].mxu0
      %v3178 = vadd.f32 %v2281, %v3177
      %v3179 = vpop.f32.mrb[0].mxu0
      %v3180 = vadd.f32 %v2281, %v3179
      %3181 = vmatprep.mubr.bf16.mxu0 %v2618
      %3182 = vmatmul.mubr.bf16.gmra.mrb[0].mxu0 %v2617
      %v3183 = vpop.f32.mrb[0].mxu0
      %v3184 = vadd.f32 %v2286, %v3183
      %v3185 = vpop.f32.mrb[0].mxu0
      %v3186 = vadd.f32 %v2286, %v3185
      %v3187 = vpop.f32.mrb[0].mxu0
      %v3188 = vadd.f32 %v2291, %v3187
      %v3189 = vpop.f32.mrb[0].mxu0
      %v3190 = vadd.f32 %v2291, %v3189
      %3191 = vmatprep.mubr.bf16.mxu0 %v2622
      %3192 = vmatmul.mubr.bf16.gmra.mrb[0].mxu0 %v2621
      %v3193 = vpop.f32.mrb[0].mxu0
      %v3194 = vadd.f32 %v2296, %v3193
      %v3195 = vpop.f32.mrb[0].mxu0
      %v3196 = vadd.f32 %v2296, %v3195
      %v3197 = vpop.f32.mrb[0].mxu0
      %v3198 = vadd.f32 %v2301, %v3197
      %v3199 = vpop.f32.mrb[0].mxu0
      %v3200 = vadd.f32 %v2301, %v3199
      %3201 = vmatprep.mubr.bf16.mxu0 %v2626
      %3202 = vmatmul.mubr.bf16.gmra.mrb[0].mxu0 %v2625
      %v3203 = vpop.f32.mrb[0].mxu0
      %v3204 = vadd.f32 %v2306, %v3203
      %v3205 = vpop.f32.mrb[0].mxu0
      %v3206 = vadd.f32 %v2306, %v3205
      %v3207 = vpop.f32.mrb[0].mxu0
      %v3208 = vadd.f32 %v2311, %v3207
      %v3209 = vpop.f32.mrb[0].mxu0
      %v3210 = vadd.f32 %v2311, %v3209
      %3211 = vmatprep.mubr.bf16.mxu0 %v2630
      %3212 = vmatmul.mubr.bf16.gmra.mrb[0].mxu0 %v2629
      %v3213 = vpop.f32.mrb[0].mxu0
      %v3214 = vadd.f32 %v2316, %v3213
      %v3215 = vpop.f32.mrb[0].mxu0
      %v3216 = vadd.f32 %v2316, %v3215
      %v3217 = vpop.f32.mrb[0].mxu0
      %v3218 = vadd.f32 %v2321, %v3217
      %v3219 = vpop.f32.mrb[0].mxu0
      %v3220 = vadd.f32 %v2321, %v3219
      %3221 = vmatprep.mubr.bf16.mxu0 %v2634
      %3222 = vmatmul.mubr.bf16.gmra.mrb[0].mxu0 %v2633
      %v3223 = vpop.f32.mrb[0].mxu0
      %v3224 = vadd.f32 %v2326, %v3223
      %v3225 = vpop.f32.mrb[0].mxu0
      %v3226 = vadd.f32 %v2326, %v3225
      %v3227 = vpop.f32.mrb[0].mxu0
      %v3228 = vadd.f32 %v2331, %v3227
      %v3229 = vpop.f32.mrb[0].mxu0
      %v3230 = vadd.f32 %v2331, %v3229
      %3231 = vmatprep.mubr.bf16.mxu0 %v2638
      %3232 = vmatmul.mubr.bf16.gmra.mrb[0].mxu0 %v2637
      %v3233 = vpop.f32.mrb[0].mxu0
      %v3234 = vadd.f32 %v2336, %v3233
      %v3235 = vpop.f32.mrb[0].mxu0
      %v3236 = vadd.f32 %v2336, %v3235
      %v3237 = vpop.f32.mrb[0].mxu0
      %v3238 = vadd.f32 %v2341, %v3237
      %v3239 = vpop.f32.mrb[0].mxu0
      %v3240 = vadd.f32 %v2341, %v3239
      %3241 = vmatprep.mubr.bf16.mxu0 %v2642
      %3242 = vmatmul.mubr.bf16.gmra.mrb[0].mxu0 %v2641
      %v3243 = vpop.f32.mrb[0].mxu0
      %v3244 = vadd.f32 %v2346, %v3243
      %v3245 = vpop.f32.mrb[0].mxu0
      %v3246 = vadd.f32 %v2346, %v3245
      %v3247 = vpop.f32.mrb[0].mxu0
      %v3248 = vadd.f32 %v2351, %v3247
      %v3249 = vpop.f32.mrb[0].mxu0
      %v3250 = vadd.f32 %v2351, %v3249
      %3251 = vmatprep.mubr.bf16.mxu0 %v2646
      %3252 = vmatmul.mubr.bf16.gmra.mrb[0].mxu0 %v2645
      %v3253 = vpop.f32.mrb[0].mxu0
      %v3254 = vadd.f32 %v2356, %v3253
      %v3255 = vpop.f32.mrb[0].mxu0
      %v3256 = vadd.f32 %v2356, %v3255
      %v3257 = vpop.f32.mrb[0].mxu0
      %v3258 = vadd.f32 %v2361, %v3257
      %v3259 = vpop.f32.mrb[0].mxu0
      %v3260 = vadd.f32 %v2361, %v3259
      %3261 = vmatprep.mubr.bf16.mxu0 %v2650
      %3262 = vmatmul.mubr.bf16.gmra.mrb[0].mxu0 %v2649
      %v3263 = vpop.f32.mrb[0].mxu0
      %v3264 = vadd.f32 %v2366, %v3263
      %v3265 = vpop.f32.mrb[0].mxu0
      %v3266 = vadd.f32 %v2366, %v3265
      %v3267 = vpop.f32.mrb[0].mxu0
      %v3268 = vadd.f32 %v2371, %v3267
      %v3269 = vpop.f32.mrb[0].mxu0
      %v3270 = vadd.f32 %v2371, %v3269
      %3271 = vmatprep.mubr.bf16.mxu0 %v2654
      %3272 = vmatmul.mubr.bf16.gmra.mrb[0].mxu0 %v2653
      %v3273 = vpop.f32.mrb[0].mxu0
      %v3274 = vadd.f32 %v2376, %v3273
      %v3275 = vpop.f32.mrb[0].mxu0
      %v3276 = vadd.f32 %v2376, %v3275
      %v3277 = vpop.f32.mrb[0].mxu0
      %v3278 = vadd.f32 %v2381, %v3277
      %v3279 = vpop.f32.mrb[0].mxu0
      %v3280 = vadd.f32 %v2381, %v3279
      %3281 = vmatprep.mubr.bf16.mxu0 %v2658
      %3282 = vmatmul.mubr.bf16.gmra.mrb[0].mxu0 %v2657
      %v3283 = vpop.f32.mrb[0].mxu0
      %v3284 = vadd.f32 %v2386, %v3283
      %v3285 = vpop.f32.mrb[0].mxu0
      %v3286 = vadd.f32 %v2386, %v3285
      %v3287 = vpop.f32.mrb[0].mxu0
      %v3288 = vadd.f32 %v2391, %v3287
      %v3289 = vpop.f32.mrb[0].mxu0
      %v3290 = vadd.f32 %v2391, %v3289
      %3291 = vmatprep.mubr.bf16.mxu0 %v2662
      %3292 = vmatmul.mubr.bf16.gmra.mrb[0].mxu0 %v2661
      %v3293 = vpop.f32.mrb[0].mxu0
      %v3294 = vadd.f32 %v2396, %v3293
      %v3295 = vpop.f32.mrb[0].mxu0
      %v3296 = vadd.f32 %v2396, %v3295
      %v3297 = vpop.f32.mrb[0].mxu0
      %v3298 = vadd.f32 %v2401, %v3297
      %v3299 = vpop.f32.mrb[0].mxu0
      %v3300 = vadd.f32 %v2401, %v3299
      %3301 = vmatprep.mubr.bf16.mxu0 %v2666
      %3302 = vmatmul.mubr.bf16.gmra.mrb[0].mxu0 %v2665
      %v3303 = vpop.f32.mrb[0].mxu0
      %v3304 = vadd.f32 %v2406, %v3303
      %v3305 = vpop.f32.mrb[0].mxu0
      %v3306 = vadd.f32 %v2406, %v3305
      %v3307 = vpop.f32.mrb[0].mxu0
      %v3308 = vadd.f32 %v2411, %v3307
      %v3309 = vpop.f32.mrb[0].mxu0
      %v3310 = vadd.f32 %v2411, %v3309
      %3311 = vdwg.mxu0
      %3312 = vmatprep.subr.bf16.mxu0 %v2160
      %3313 = vmatpush1.bf16.msra.mxu0 %v2159
      %3314 = vmatprep.subr.bf16.mxu0 %v2164
      %3315 = vmatpush1.bf16.msra.mxu0 %v2163
      %3316 = vmatprep.subr.bf16.mxu0 %v2168
      %3317 = vmatpush1.bf16.msra.mxu0 %v2167
      %3318 = vmatprep.subr.bf16.mxu0 %v2172
      %3319 = vmatpush1.bf16.msra.mxu0 %v2171
      %3320 = vmatprep.subr.bf16.mxu0 %v2176
      %3321 = vmatpush1.bf16.msra.mxu0 %v2175
      %3322 = vmatprep.subr.bf16.mxu0 %v2180
      %3323 = vmatpush1.bf16.msra.mxu0 %v2179
      %3324 = vmatprep.subr.bf16.mxu0 %v2184
      %3325 = vmatpush1.bf16.msra.mxu0 %v2183
      %3326 = vmatprep.subr.bf16.mxu0 %v2188
      %3327 = vmatpush1.bf16.msra.mxu0 %v2187
      %3328 = vmatprep.subr.bf16.mxu0 %v2192
      %3329 = vmatpush1.bf16.msra.mxu0 %v2191
      %3330 = vmatprep.subr.bf16.mxu0 %v2196
      %3331 = vmatpush1.bf16.msra.mxu0 %v2195
      %3332 = vmatprep.subr.bf16.mxu0 %v2200
      %3333 = vmatpush1.bf16.msra.mxu0 %v2199
      %3334 = vmatprep.subr.bf16.mxu0 %v2204
      %3335 = vmatpush1.bf16.msra.mxu0 %v2203
      %3336 = vmatprep.subr.bf16.mxu0 %v2208
      %3337 = vmatpush1.bf16.msra.mxu0 %v2207
      %3338 = vmatprep.subr.bf16.mxu0 %v2212
      %3339 = vmatpush1.bf16.msra.mxu0 %v2211
      %3340 = vmatprep.subr.bf16.mxu0 %v2216
      %3341 = vmatpush1.bf16.msra.mxu0 %v2215
      %3342 = vmatprep.subr.bf16.mxu0 %v2220
      %3343 = vmatpush1.bf16.msra.mxu0 %v2219
      %3344 = vmatprep.mubr.bf16.mxu0 %v2608
      %3345 = vmatmul.mubr.bf16.gmra.mrb[0].mxu0 %v2607
      %v3346 = vpop.f32.mrb[0].mxu0
      %v3347 = vadd.f32 %v3154, %v3346
      %v3348 = vpop.f32.mrb[0].mxu0
      %v3349 = vadd.f32 %v3156, %v3348
      %v3350 = vpop.f32.mrb[0].mxu0
      %v3351 = vadd.f32 %v3158, %v3350
      %v3352 = vpop.f32.mrb[0].mxu0
      %v3353 = vadd.f32 %v3160, %v3352
      %3354 = vmatprep.mubr.bf16.mxu0 %v2612
      %3355 = vmatmul.mubr.bf16.gmra.mrb[0].mxu0 %v2611
      %v3356 = vpop.f32.mrb[0].mxu0
      %v3357 = vadd.f32 %v3164, %v3356
      %v3358 = vpop.f32.mrb[0].mxu0
      %v3359 = vadd.f32 %v3166, %v3358
      %v3360 = vpop.f32.mrb[0].mxu0
      %v3361 = vadd.f32 %v3168, %v3360
      %v3362 = vpop.f32.mrb[0].mxu0
      %v3363 = vadd.f32 %v3170, %v3362
      %3364 = vmatprep.mubr.bf16.mxu0 %v2616
      %3365 = vmatmul.mubr.bf16.gmra.mrb[0].mxu0 %v2615
      %v3366 = vpop.f32.mrb[0].mxu0
      %v3367 = vadd.f32 %v3174, %v3366
      %v3368 = vpop.f32.mrb[0].mxu0
      %v3369 = vadd.f32 %v3176, %v3368
      %v3370 = vpop.f32.mrb[0].mxu0
      %v3371 = vadd.f32 %v3178, %v3370
      %v3372 = vpop.f32.mrb[0].mxu0
      %v3373 = vadd.f32 %v3180, %v3372
      %3374 = vmatprep.mubr.bf16.mxu0 %v2620
      %3375 = vmatmul.mubr.bf16.gmra.mrb[0].mxu0 %v2619
      %v3376 = vpop.f32.mrb[0].mxu0
      %v3377 = vadd.f32 %v3184, %v3376
      %v3378 = vpop.f32.mrb[0].mxu0
      %v3379 = vadd.f32 %v3186, %v3378
      %v3380 = vpop.f32.mrb[0].mxu0
      %v3381 = vadd.f32 %v3188, %v3380
      %v3382 = vpop.f32.mrb[0].mxu0
      %v3383 = vadd.f32 %v3190, %v3382
      %3384 = vmatprep.mubr.bf16.mxu0 %v2624
      %3385 = vmatmul.mubr.bf16.gmra.mrb[0].mxu0 %v2623
      %v3386 = vpop.f32.mrb[0].mxu0
      %v3387 = vadd.f32 %v3194, %v3386
      %v3388 = vpop.f32.mrb[0].mxu0
      %v3389 = vadd.f32 %v3196, %v3388
      %v3390 = vpop.f32.mrb[0].mxu0
      %v3391 = vadd.f32 %v3198, %v3390
      %v3392 = vpop.f32.mrb[0].mxu0
      %v3393 = vadd.f32 %v3200, %v3392
      %3394 = vmatprep.mubr.bf16.mxu0 %v2628
      %3395 = vmatmul.mubr.bf16.gmra.mrb[0].mxu0 %v2627
      %v3396 = vpop.f32.mrb[0].mxu0
      %v3397 = vadd.f32 %v3204, %v3396
      %v3398 = vpop.f32.mrb[0].mxu0
      %v3399 = vadd.f32 %v3206, %v3398
      %v3400 = vpop.f32.mrb[0].mxu0
      %v3401 = vadd.f32 %v3208, %v3400
      %v3402 = vpop.f32.mrb[0].mxu0
      %v3403 = vadd.f32 %v3210, %v3402
      %3404 = vmatprep.mubr.bf16.mxu0 %v2632
      %3405 = vmatmul.mubr.bf16.gmra.mrb[0].mxu0 %v2631
      %v3406 = vpop.f32.mrb[0].mxu0
      %v3407 = vadd.f32 %v3214, %v3406
      %v3408 = vpop.f32.mrb[0].mxu0
      %v3409 = vadd.f32 %v3216, %v3408
      %v3410 = vpop.f32.mrb[0].mxu0
      %v3411 = vadd.f32 %v3218, %v3410
      %v3412 = vpop.f32.mrb[0].mxu0
      %v3413 = vadd.f32 %v3220, %v3412
      %3414 = vmatprep.mubr.bf16.mxu0 %v2636
      %3415 = vmatmul.mubr.bf16.gmra.mrb[0].mxu0 %v2635
      %v3416 = vpop.f32.mrb[0].mxu0
      %v3417 = vadd.f32 %v3224, %v3416
      %v3418 = vpop.f32.mrb[0].mxu0
      %v3419 = vadd.f32 %v3226, %v3418
      %v3420 = vpop.f32.mrb[0].mxu0
      %v3421 = vadd.f32 %v3228, %v3420
      %v3422 = vpop.f32.mrb[0].mxu0
      %v3423 = vadd.f32 %v3230, %v3422
      %3424 = vmatprep.mubr.bf16.mxu0 %v2640
      %3425 = vmatmul.mubr.bf16.gmra.mrb[0].mxu0 %v2639
      %v3426 = vpop.f32.mrb[0].mxu0
      %v3427 = vadd.f32 %v3234, %v3426
      %v3428 = vpop.f32.mrb[0].mxu0
      %v3429 = vadd.f32 %v3236, %v3428
      %v3430 = vpop.f32.mrb[0].mxu0
      %v3431 = vadd.f32 %v3238, %v3430
      %v3432 = vpop.f32.mrb[0].mxu0
      %v3433 = vadd.f32 %v3240, %v3432
      %3434 = vmatprep.mubr.bf16.mxu0 %v2644
      %3435 = vmatmul.mubr.bf16.gmra.mrb[0].mxu0 %v2643
      %v3436 = vpop.f32.mrb[0].mxu0
      %v3437 = vadd.f32 %v3244, %v3436
      %v3438 = vpop.f32.mrb[0].mxu0
      %v3439 = vadd.f32 %v3246, %v3438
      %v3440 = vpop.f32.mrb[0].mxu0
      %v3441 = vadd.f32 %v3248, %v3440
      %v3442 = vpop.f32.mrb[0].mxu0
      %v3443 = vadd.f32 %v3250, %v3442
      %3444 = vmatprep.mubr.bf16.mxu0 %v2648
      %3445 = vmatmul.mubr.bf16.gmra.mrb[0].mxu0 %v2647
      %v3446 = vpop.f32.mrb[0].mxu0
      %v3447 = vadd.f32 %v3254, %v3446
      %v3448 = vpop.f32.mrb[0].mxu0
      %v3449 = vadd.f32 %v3256, %v3448
      %v3450 = vpop.f32.mrb[0].mxu0
      %v3451 = vadd.f32 %v3258, %v3450
      %v3452 = vpop.f32.mrb[0].mxu0
      %v3453 = vadd.f32 %v3260, %v3452
      %3454 = vmatprep.mubr.bf16.mxu0 %v2652
      %3455 = vmatmul.mubr.bf16.gmra.mrb[0].mxu0 %v2651
      %v3456 = vpop.f32.mrb[0].mxu0
      %v3457 = vadd.f32 %v3264, %v3456
      %v3458 = vpop.f32.mrb[0].mxu0
      %v3459 = vadd.f32 %v3266, %v3458
      %v3460 = vpop.f32.mrb[0].mxu0
      %v3461 = vadd.f32 %v3268, %v3460
      %v3462 = vpop.f32.mrb[0].mxu0
      %v3463 = vadd.f32 %v3270, %v3462
      %3464 = vmatprep.mubr.bf16.mxu0 %v2656
      %3465 = vmatmul.mubr.bf16.gmra.mrb[0].mxu0 %v2655
      %v3466 = vpop.f32.mrb[0].mxu0
      %v3467 = vadd.f32 %v3274, %v3466
      %v3468 = vpop.f32.mrb[0].mxu0
      %v3469 = vadd.f32 %v3276, %v3468
      %v3470 = vpop.f32.mrb[0].mxu0
      %v3471 = vadd.f32 %v3278, %v3470
      %v3472 = vpop.f32.mrb[0].mxu0
      %v3473 = vadd.f32 %v3280, %v3472
      %3474 = vmatprep.mubr.bf16.mxu0 %v2660
      %3475 = vmatmul.mubr.bf16.gmra.mrb[0].mxu0 %v2659
      %v3476 = vpop.f32.mrb[0].mxu0
      %v3477 = vadd.f32 %v3284, %v3476
      %v3478 = vpop.f32.mrb[0].mxu0
      %v3479 = vadd.f32 %v3286, %v3478
      %v3480 = vpop.f32.mrb[0].mxu0
      %v3481 = vadd.f32 %v3288, %v3480
      %v3482 = vpop.f32.mrb[0].mxu0
      %v3483 = vadd.f32 %v3290, %v3482
      %3484 = vmatprep.mubr.bf16.mxu0 %v2664
      %3485 = vmatmul.mubr.bf16.gmra.mrb[0].mxu0 %v2663
      %v3486 = vpop.f32.mrb[0].mxu0
      %v3487 = vadd.f32 %v3294, %v3486
      %v3488 = vpop.f32.mrb[0].mxu0
      %v3489 = vadd.f32 %v3296, %v3488
      %v3490 = vpop.f32.mrb[0].mxu0
      %v3491 = vadd.f32 %v3298, %v3490
      %v3492 = vpop.f32.mrb[0].mxu0
      %v3493 = vadd.f32 %v3300, %v3492
      %3494 = vmatprep.mubr.bf16.mxu0 %v2668
      %3495 = vmatmul.mubr.bf16.gmra.mrb[0].mxu0 %v2667
      %v3496 = vpop.f32.mrb[0].mxu0
      %v3497 = vadd.f32 %v3304, %v3496
      %v3498 = vpop.f32.mrb[0].mxu0
      %v3499 = vadd.f32 %v3306, %v3498
      %v3500 = vpop.f32.mrb[0].mxu0
      %v3501 = vadd.f32 %v3308, %v3500
      %v3502 = vpop.f32.mrb[0].mxu0
      %v3503 = vadd.f32 %v3310, %v3502
      %3504 = vdwg.mxu0
      %v3505 = vmax.f32 %v2961, 0.0
      %v3506 = vmax.f32 %v2963, 0.0
      %v3507 = vmax.f32 %v3347, 0.0
      %v3508 = vmax.f32 %v3349, 0.0
      %v3509 = vmax.f32 %v2965, 0.0
      %v3510 = vmax.f32 %v2967, 0.0
      %v3511 = vmax.f32 %v3351, 0.0
      %v3512 = vmax.f32 %v3353, 0.0
      %v3513 = vmax.f32 %v2971, 0.0
      %v3514 = vmax.f32 %v2973, 0.0
      %v3515 = vmax.f32 %v3357, 0.0
      %v3516 = vmax.f32 %v3359, 0.0
      %v3517 = vmax.f32 %v2975, 0.0
      %v3518 = vmax.f32 %v2977, 0.0
      %v3519 = vmax.f32 %v3361, 0.0
      %v3520 = vmax.f32 %v3363, 0.0
      %v3521 = vmax.f32 %v2981, 0.0
      %v3522 = vmax.f32 %v2983, 0.0
      %v3523 = vmax.f32 %v3367, 0.0
      %v3524 = vmax.f32 %v3369, 0.0
      %v3525 = vmax.f32 %v2985, 0.0
      %v3526 = vmax.f32 %v2987, 0.0
      %v3527 = vmax.f32 %v3371, 0.0
      %v3528 = vmax.f32 %v3373, 0.0
      %v3529 = vmax.f32 %v2991, 0.0
      %v3530 = vmax.f32 %v2993, 0.0
      %v3531 = vmax.f32 %v3377, 0.0
      %v3532 = vmax.f32 %v3379, 0.0
      %v3533 = vmax.f32 %v2995, 0.0
      %v3534 = vmax.f32 %v2997, 0.0
      %v3535 = vmax.f32 %v3381, 0.0
      %v3536 = vmax.f32 %v3383, 0.0
      %v3537 = vmax.f32 %v3001, 0.0
      %v3538 = vmax.f32 %v3003, 0.0
      %v3539 = vmax.f32 %v3387, 0.0
      %v3540 = vmax.f32 %v3389, 0.0
      %v3541 = vmax.f32 %v3005, 0.0
      %v3542 = vmax.f32 %v3007, 0.0
      %v3543 = vmax.f32 %v3391, 0.0
      %v3544 = vmax.f32 %v3393, 0.0
      %v3545 = vmax.f32 %v3011, 0.0
      %v3546 = vmax.f32 %v3013, 0.0
      %v3547 = vmax.f32 %v3397, 0.0
      %v3548 = vmax.f32 %v3399, 0.0
      %v3549 = vmax.f32 %v3015, 0.0
      %v3550 = vmax.f32 %v3017, 0.0
      %v3551 = vmax.f32 %v3401, 0.0
      %v3552 = vmax.f32 %v3403, 0.0
      %v3553 = vmax.f32 %v3021, 0.0
      %v3554 = vmax.f32 %v3023, 0.0
      %v3555 = vmax.f32 %v3407, 0.0
      %v3556 = vmax.f32 %v3409, 0.0
      %v3557 = vmax.f32 %v3025, 0.0
      %v3558 = vmax.f32 %v3027, 0.0
      %v3559 = vmax.f32 %v3411, 0.0
      %v3560 = vmax.f32 %v3413, 0.0
      %v3561 = vmax.f32 %v3031, 0.0
      %v3562 = vmax.f32 %v3033, 0.0
      %v3563 = vmax.f32 %v3417, 0.0
      %v3564 = vmax.f32 %v3419, 0.0
      %v3565 = vmax.f32 %v3035, 0.0
      %v3566 = vmax.f32 %v3037, 0.0
      %v3567 = vmax.f32 %v3421, 0.0
      %v3568 = vmax.f32 %v3423, 0.0
      %v3569 = vmax.f32 %v3041, 0.0
      %v3570 = vmax.f32 %v3043, 0.0
      %v3571 = vmax.f32 %v3427, 0.0
      %v3572 = vmax.f32 %v3429, 0.0
      %v3573 = vmax.f32 %v3045, 0.0
      %v3574 = vmax.f32 %v3047, 0.0
      %v3575 = vmax.f32 %v3431, 0.0
      %v3576 = vmax.f32 %v3433, 0.0
      %v3577 = vmax.f32 %v3051, 0.0
      %v3578 = vmax.f32 %v3053, 0.0
      %v3579 = vmax.f32 %v3437, 0.0
      %v3580 = vmax.f32 %v3439, 0.0
      %v3581 = vmax.f32 %v3055, 0.0
      %v3582 = vmax.f32 %v3057, 0.0
      %v3583 = vmax.f32 %v3441, 0.0
      %v3584 = vmax.f32 %v3443, 0.0
      %v3585 = vmax.f32 %v3061, 0.0
      %v3586 = vmax.f32 %v3063, 0.0
      %v3587 = vmax.f32 %v3447, 0.0
      %v3588 = vmax.f32 %v3449, 0.0
      %v3589 = vmax.f32 %v3065, 0.0
      %v3590 = vmax.f32 %v3067, 0.0
      %v3591 = vmax.f32 %v3451, 0.0
      %v3592 = vmax.f32 %v3453, 0.0
      %v3593 = vmax.f32 %v3071, 0.0
      %v3594 = vmax.f32 %v3073, 0.0
      %v3595 = vmax.f32 %v3457, 0.0
      %v3596 = vmax.f32 %v3459, 0.0
      %v3597 = vmax.f32 %v3075, 0.0
      %v3598 = vmax.f32 %v3077, 0.0
      %v3599 = vmax.f32 %v3461, 0.0
      %v3600 = vmax.f32 %v3463, 0.0
      %v3601 = vmax.f32 %v3081, 0.0
      %v3602 = vmax.f32 %v3083, 0.0
      %v3603 = vmax.f32 %v3467, 0.0
      %v3604 = vmax.f32 %v3469, 0.0
      %v3605 = vmax.f32 %v3085, 0.0
      %v3606 = vmax.f32 %v3087, 0.0
      %v3607 = vmax.f32 %v3471, 0.0
      %v3608 = vmax.f32 %v3473, 0.0
      %v3609 = vmax.f32 %v3091, 0.0
      %v3610 = vmax.f32 %v3093, 0.0
      %v3611 = vmax.f32 %v3477, 0.0
      %v3612 = vmax.f32 %v3479, 0.0
      %v3613 = vmax.f32 %v3095, 0.0
      %v3614 = vmax.f32 %v3097, 0.0
      %v3615 = vmax.f32 %v3481, 0.0
      %v3616 = vmax.f32 %v3483, 0.0
      %v3617 = vmax.f32 %v3101, 0.0
      %v3618 = vmax.f32 %v3103, 0.0
      %v3619 = vmax.f32 %v3487, 0.0
      %v3620 = vmax.f32 %v3489, 0.0
      %v3621 = vmax.f32 %v3105, 0.0
      %v3622 = vmax.f32 %v3107, 0.0
      %v3623 = vmax.f32 %v3491, 0.0
      %v3624 = vmax.f32 %v3493, 0.0
      %v3625 = vmax.f32 %v3111, 0.0
      %v3626 = vmax.f32 %v3113, 0.0
      %v3627 = vmax.f32 %v3497, 0.0
      %v3628 = vmax.f32 %v3499, 0.0
      %v3629 = vmax.f32 %v3115, 0.0
      %v3630 = vmax.f32 %v3117, 0.0
      %v3631 = vmax.f32 %v3501, 0.0
      %v3632 = vmax.f32 %v3503, 0.0
      %v3633 = vld [vmem:[%s5] sm:$0xff]
      %v3634 = vld [vmem:[%s5 + $0x8] sm:$0xff]
      %v3635 = vld [vmem:[%s5 + $0x10] sm:$0xff]
      %v3636 = vld [vmem:[%s5 + $0x18] sm:$0xff]
      %v3637 = vld [vmem:[%s5 + $0x20] sm:$0xff]
      %v3638 = vld [vmem:[%s5 + $0x28] sm:$0xff]
      %v3639 = vld [vmem:[%s5 + $0x30] sm:$0xff]
      %v3640 = vld [vmem:[%s5 + $0x38] sm:$0xff]
      %v3641 = vld [vmem:[%s5 + $0x40] sm:$0xff]
      %v3642 = vld [vmem:[%s5 + $0x48] sm:$0xff]
      %v3643 = vld [vmem:[%s5 + $0x50] sm:$0xff]
      %v3644 = vld [vmem:[%s5 + $0x58] sm:$0xff]
      %v3645 = vld [vmem:[%s5 + $0x60] sm:$0xff]
      %v3646 = vld [vmem:[%s5 + $0x68] sm:$0xff]
      %v3647 = vld [vmem:[%s5 + $0x70] sm:$0xff]
      %v3648 = vld [vmem:[%s5 + $0x78] sm:$0xff]
      %v3649 = vpack.c.bf16 %v3509, %v3505
      %v3650 = vpack.c.bf16 %v3510, %v3506
      %v3651 = vpack.c.bf16 %v3511, %v3507
      %v3652 = vpack.c.bf16 %v3512, %v3508
      %v3653 = vpack.c.bf16 %v3517, %v3513
      %v3654 = vpack.c.bf16 %v3518, %v3514
      %v3655 = vpack.c.bf16 %v3519, %v3515
      %v3656 = vpack.c.bf16 %v3520, %v3516
      %v3657 = vpack.c.bf16 %v3525, %v3521
      %v3658 = vpack.c.bf16 %v3526, %v3522
      %v3659 = vpack.c.bf16 %v3527, %v3523
      %v3660 = vpack.c.bf16 %v3528, %v3524
      %v3661 = vpack.c.bf16 %v3533, %v3529
      %v3662 = vpack.c.bf16 %v3534, %v3530
      %v3663 = vpack.c.bf16 %v3535, %v3531
      %v3664 = vpack.c.bf16 %v3536, %v3532
      %v3665 = vpack.c.bf16 %v3541, %v3537
      %v3666 = vpack.c.bf16 %v3542, %v3538
      %v3667 = vpack.c.bf16 %v3543, %v3539
      %v3668 = vpack.c.bf16 %v3544, %v3540
      %v3669 = vpack.c.bf16 %v3549, %v3545
      %v3670 = vpack.c.bf16 %v3550, %v3546
      %v3671 = vpack.c.bf16 %v3551, %v3547
      %v3672 = vpack.c.bf16 %v3552, %v3548
      %v3673 = vpack.c.bf16 %v3557, %v3553
      %v3674 = vpack.c.bf16 %v3558, %v3554
      %v3675 = vpack.c.bf16 %v3559, %v3555
      %v3676 = vpack.c.bf16 %v3560, %v3556
      %v3677 = vpack.c.bf16 %v3565, %v3561
      %v3678 = vpack.c.bf16 %v3566, %v3562
      %v3679 = vpack.c.bf16 %v3567, %v3563
      %v3680 = vpack.c.bf16 %v3568, %v3564
      %v3681 = vpack.c.bf16 %v3573, %v3569
      %v3682 = vpack.c.bf16 %v3574, %v3570
      %v3683 = vpack.c.bf16 %v3575, %v3571
      %v3684 = vpack.c.bf16 %v3576, %v3572
      %v3685 = vpack.c.bf16 %v3581, %v3577
      %v3686 = vpack.c.bf16 %v3582, %v3578
      %v3687 = vpack.c.bf16 %v3583, %v3579
      %v3688 = vpack.c.bf16 %v3584, %v3580
      %v3689 = vpack.c.bf16 %v3589, %v3585
      %v3690 = vpack.c.bf16 %v3590, %v3586
      %v3691 = vpack.c.bf16 %v3591, %v3587
      %v3692 = vpack.c.bf16 %v3592, %v3588
      %v3693 = vpack.c.bf16 %v3597, %v3593
      %v3694 = vpack.c.bf16 %v3598, %v3594
      %v3695 = vpack.c.bf16 %v3599, %v3595
      %v3696 = vpack.c.bf16 %v3600, %v3596
      %v3697 = vpack.c.bf16 %v3605, %v3601
      %v3698 = vpack.c.bf16 %v3606, %v3602
      %v3699 = vpack.c.bf16 %v3607, %v3603
      %v3700 = vpack.c.bf16 %v3608, %v3604
      %v3701 = vpack.c.bf16 %v3613, %v3609
      %v3702 = vpack.c.bf16 %v3614, %v3610
      %v3703 = vpack.c.bf16 %v3615, %v3611
      %v3704 = vpack.c.bf16 %v3616, %v3612
      %v3705 = vpack.c.bf16 %v3621, %v3617
      %v3706 = vpack.c.bf16 %v3622, %v3618
      %v3707 = vpack.c.bf16 %v3623, %v3619
      %v3708 = vpack.c.bf16 %v3624, %v3620
      %v3709 = vpack.c.bf16 %v3629, %v3625
      %v3710 = vpack.c.bf16 %v3630, %v3626
      %v3711 = vpack.c.bf16 %v3631, %v3627
      %v3712 = vpack.c.bf16 %v3632, %v3628
      %v3713 = vld [vmem:[%s6] sm:$0xff]
      %v3714 = vld [vmem:[%s6 + $0x8] sm:$0xff]
      %v3715 = vld [vmem:[%s6 + $0x10] sm:$0xff]
      %v3716 = vld [vmem:[%s6 + $0x18] sm:$0xff]
      %v3717 = vld [vmem:[%s6 + $0x20] sm:$0xff]
      %v3718 = vld [vmem:[%s6 + $0x28] sm:$0xff]
      %v3719 = vld [vmem:[%s6 + $0x30] sm:$0xff]
      %v3720 = vld [vmem:[%s6 + $0x38] sm:$0xff]
      %v3721 = vld [vmem:[%s6 + $0x40] sm:$0xff]
      %v3722 = vld [vmem:[%s6 + $0x48] sm:$0xff]
      %v3723 = vld [vmem:[%s6 + $0x50] sm:$0xff]
      %v3724 = vld [vmem:[%s6 + $0x58] sm:$0xff]
      %v3725 = vld [vmem:[%s6 + $0x60] sm:$0xff]
      %v3726 = vld [vmem:[%s6 + $0x68] sm:$0xff]
      %v3727 = vld [vmem:[%s6 + $0x70] sm:$0xff]
      %v3728 = vld [vmem:[%s6 + $0x78] sm:$0xff]
      %3730 = vset.pattern.permute.xlu0 0
      %3731 = vperm.xlu0 %3730, %v3713
      %v3732 = vpop.permute.xlu0 %3731
      %3735 = vset.pattern.permute.xlu0 0
      %3736 = vperm.xlu0 %3735, %v3714
      %v3737 = vpop.permute.xlu0 %3736
      %3740 = vset.pattern.permute.xlu0 0
      %3741 = vperm.xlu0 %3740, %v3715
      %v3742 = vpop.permute.xlu0 %3741
      %3745 = vset.pattern.permute.xlu0 0
      %3746 = vperm.xlu0 %3745, %v3716
      %v3747 = vpop.permute.xlu0 %3746
      %3750 = vset.pattern.permute.xlu0 0
      %3751 = vperm.xlu0 %3750, %v3717
      %v3752 = vpop.permute.xlu0 %3751
      %3755 = vset.pattern.permute.xlu0 0
      %3756 = vperm.xlu0 %3755, %v3718
      %v3757 = vpop.permute.xlu0 %3756
      %3760 = vset.pattern.permute.xlu0 0
      %3761 = vperm.xlu0 %3760, %v3719
      %v3762 = vpop.permute.xlu0 %3761
      %3765 = vset.pattern.permute.xlu0 0
      %3766 = vperm.xlu0 %3765, %v3720
      %v3767 = vpop.permute.xlu0 %3766
      %3770 = vset.pattern.permute.xlu0 0
      %3771 = vperm.xlu0 %3770, %v3721
      %v3772 = vpop.permute.xlu0 %3771
      %3775 = vset.pattern.permute.xlu0 0
      %3776 = vperm.xlu0 %3775, %v3722
      %v3777 = vpop.permute.xlu0 %3776
      %3780 = vset.pattern.permute.xlu0 0
      %3781 = vperm.xlu0 %3780, %v3723
      %v3782 = vpop.permute.xlu0 %3781
      %3785 = vset.pattern.permute.xlu0 0
      %3786 = vperm.xlu0 %3785, %v3724
      %v3787 = vpop.permute.xlu0 %3786
      %3790 = vset.pattern.permute.xlu0 0
      %3791 = vperm.xlu0 %3790, %v3725
      %v3792 = vpop.permute.xlu0 %3791
      %3795 = vset.pattern.permute.xlu0 0
      %3796 = vperm.xlu0 %3795, %v3726
      %v3797 = vpop.permute.xlu0 %3796
      %3800 = vset.pattern.permute.xlu0 0
      %3801 = vperm.xlu0 %3800, %v3727
      %v3802 = vpop.permute.xlu0 %3801
      %3805 = vset.pattern.permute.xlu0 0
      %3806 = vperm.xlu0 %3805, %v3728
      %v3807 = vpop.permute.xlu0 %3806
      %v3825 = vunpack.c.l.b16 %v3633
      %v3826 = vunpack.c.h.b16 %v3633
      %v3827 = vunpack.c.l.b16 %v3634
      %v3828 = vunpack.c.h.b16 %v3634
      %v3829 = vunpack.c.l.b16 %v3635
      %v3830 = vunpack.c.h.b16 %v3635
      %v3831 = vunpack.c.l.b16 %v3636
      %v3832 = vunpack.c.h.b16 %v3636
      %v3833 = vunpack.c.l.b16 %v3637
      %v3834 = vunpack.c.h.b16 %v3637
      %v3835 = vunpack.c.l.b16 %v3638
      %v3836 = vunpack.c.h.b16 %v3638
      %v3837 = vunpack.c.l.b16 %v3639
      %v3838 = vunpack.c.h.b16 %v3639
      %v3839 = vunpack.c.l.b16 %v3640
      %v3840 = vunpack.c.h.b16 %v3640
      %v3841 = vunpack.c.l.b16 %v3641
      %v3842 = vunpack.c.h.b16 %v3641
      %v3843 = vunpack.c.l.b16 %v3642
      %v3844 = vunpack.c.h.b16 %v3642
      %v3845 = vunpack.c.l.b16 %v3643
      %v3846 = vunpack.c.h.b16 %v3643
      %v3847 = vunpack.c.l.b16 %v3644
      %v3848 = vunpack.c.h.b16 %v3644
      %v3849 = vunpack.c.l.b16 %v3645
      %v3850 = vunpack.c.h.b16 %v3645
      %v3851 = vunpack.c.l.b16 %v3646
      %v3852 = vunpack.c.h.b16 %v3646
      %v3853 = vunpack.c.l.b16 %v3647
      %v3854 = vunpack.c.h.b16 %v3647
      %v3855 = vunpack.c.l.b16 %v3648
      %v3856 = vunpack.c.h.b16 %v3648
      %v3857 = vpack.c.b16 %v3827, %v3825
      %v3858 = vpack.c.b16 %v3828, %v3826
      %v3859 = vpack.c.b16 %v3831, %v3829
      %v3860 = vpack.c.b16 %v3832, %v3830
      %v3861 = vpack.c.b16 %v3835, %v3833
      %v3862 = vpack.c.b16 %v3836, %v3834
      %v3863 = vpack.c.b16 %v3839, %v3837
      %v3864 = vpack.c.b16 %v3840, %v3838
      %v3865 = vpack.c.b16 %v3843, %v3841
      %v3866 = vpack.c.b16 %v3844, %v3842
      %v3867 = vpack.c.b16 %v3847, %v3845
      %v3868 = vpack.c.b16 %v3848, %v3846
      %v3869 = vpack.c.b16 %v3851, %v3849
      %v3870 = vpack.c.b16 %v3852, %v3850
      %v3871 = vpack.c.b16 %v3855, %v3853
      %v3872 = vpack.c.b16 %v3856, %v3854
      %3889 = vmatprep.subr.bf16.mxu0 %v3650
      %3890 = vmatpush1.bf16.msra.mxu0 %v3649
      %3891 = vmatprep.subr.bf16.mxu0 %v3654
      %3892 = vmatpush1.bf16.msra.mxu0 %v3653
      %3893 = vmatprep.subr.bf16.mxu0 %v3658
      %3894 = vmatpush1.bf16.msra.mxu0 %v3657
      %3895 = vmatprep.subr.bf16.mxu0 %v3662
      %3896 = vmatpush1.bf16.msra.mxu0 %v3661
      %3897 = vmatprep.subr.bf16.mxu0 %v3666
      %3898 = vmatpush1.bf16.msra.mxu0 %v3665
      %3899 = vmatprep.subr.bf16.mxu0 %v3670
      %3900 = vmatpush1.bf16.msra.mxu0 %v3669
      %3901 = vmatprep.subr.bf16.mxu0 %v3674
      %3902 = vmatpush1.bf16.msra.mxu0 %v3673
      %3903 = vmatprep.subr.bf16.mxu0 %v3678
      %3904 = vmatpush1.bf16.msra.mxu0 %v3677
      %3905 = vmatprep.subr.bf16.mxu0 %v3682
      %3906 = vmatpush1.bf16.msra.mxu0 %v3681
      %3907 = vmatprep.subr.bf16.mxu0 %v3686
      %3908 = vmatpush1.bf16.msra.mxu0 %v3685
      %3909 = vmatprep.subr.bf16.mxu0 %v3690
      %3910 = vmatpush1.bf16.msra.mxu0 %v3689
      %3911 = vmatprep.subr.bf16.mxu0 %v3694
      %3912 = vmatpush1.bf16.msra.mxu0 %v3693
      %3913 = vmatprep.subr.bf16.mxu0 %v3698
      %3914 = vmatpush1.bf16.msra.mxu0 %v3697
      %3915 = vmatprep.subr.bf16.mxu0 %v3702
      %3916 = vmatpush1.bf16.msra.mxu0 %v3701
      %3917 = vmatprep.subr.bf16.mxu0 %v3706
      %3918 = vmatpush1.bf16.msra.mxu0 %v3705
      %3919 = vmatprep.subr.bf16.mxu0 %v3710
      %3920 = vmatpush1.bf16.msra.mxu0 %v3709
      %3921 = vmatprep.mubr.bf16.mxu0 %v3858
      %3922 = vmatmul.mubr.bf16.gmra.mrb[0].mxu0 %v3857
      %v3923 = vpop.f32.mrb[0].mxu0
      %v3924 = vadd.f32 %v3732, %v3923
      %v3925 = vpop.f32.mrb[0].mxu0
      %v3926 = vadd.f32 %v3732, %v3925
      %v3927 = vpop.f32.mrb[0].mxu0
      %v3928 = vadd.f32 %v3737, %v3927
      %v3929 = vpop.f32.mrb[0].mxu0
      %v3930 = vadd.f32 %v3737, %v3929
      %3931 = vmatprep.mubr.bf16.mxu0 %v3860
      %3932 = vmatmul.mubr.bf16.gmra.mrb[0].mxu0 %v3859
      %v3933 = vpop.f32.mrb[0].mxu0
      %v3934 = vadd.f32 %v3742, %v3933
      %v3935 = vpop.f32.mrb[0].mxu0
      %v3936 = vadd.f32 %v3742, %v3935
      %v3937 = vpop.f32.mrb[0].mxu0
      %v3938 = vadd.f32 %v3747, %v3937
      %v3939 = vpop.f32.mrb[0].mxu0
      %v3940 = vadd.f32 %v3747, %v3939
      %3941 = vmatprep.mubr.bf16.mxu0 %v3862
      %3942 = vmatmul.mubr.bf16.gmra.mrb[0].mxu0 %v3861
      %v3943 = vpop.f32.mrb[0].mxu0
      %v3944 = vadd.f32 %v3752, %v3943
      %v3945 = vpop.f32.mrb[0].mxu0
      %v3946 = vadd.f32 %v3752, %v3945
      %v3947 = vpop.f32.mrb[0].mxu0
      %v3948 = vadd.f32 %v3757, %v3947
      %v3949 = vpop.f32.mrb[0].mxu0
      %v3950 = vadd.f32 %v3757, %v3949
      %3951 = vmatprep.mubr.bf16.mxu0 %v3864
      %3952 = vmatmul.mubr.bf16.gmra.mrb[0].mxu0 %v3863
      %v3953 = vpop.f32.mrb[0].mxu0
      %v3954 = vadd.f32 %v3762, %v3953
      %v3955 = vpop.f32.mrb[0].mxu0
      %v3956 = vadd.f32 %v3762, %v3955
      %v3957 = vpop.f32.mrb[0].mxu0
      %v3958 = vadd.f32 %v3767, %v3957
      %v3959 = vpop.f32.mrb[0].mxu0
      %v3960 = vadd.f32 %v3767, %v3959
      %3961 = vmatprep.mubr.bf16.mxu0 %v3866
      %3962 = vmatmul.mubr.bf16.gmra.mrb[0].mxu0 %v3865
      %v3963 = vpop.f32.mrb[0].mxu0
      %v3964 = vadd.f32 %v3772, %v3963
      %v3965 = vpop.f32.mrb[0].mxu0
      %v3966 = vadd.f32 %v3772, %v3965
      %v3967 = vpop.f32.mrb[0].mxu0
      %v3968 = vadd.f32 %v3777, %v3967
      %v3969 = vpop.f32.mrb[0].mxu0
      %v3970 = vadd.f32 %v3777, %v3969
      %3971 = vmatprep.mubr.bf16.mxu0 %v3868
      %3972 = vmatmul.mubr.bf16.gmra.mrb[0].mxu0 %v3867
      %v3973 = vpop.f32.mrb[0].mxu0
      %v3974 = vadd.f32 %v3782, %v3973
      %v3975 = vpop.f32.mrb[0].mxu0
      %v3976 = vadd.f32 %v3782, %v3975
      %v3977 = vpop.f32.mrb[0].mxu0
      %v3978 = vadd.f32 %v3787, %v3977
      %v3979 = vpop.f32.mrb[0].mxu0
      %v3980 = vadd.f32 %v3787, %v3979
      %3981 = vmatprep.mubr.bf16.mxu0 %v3870
      %3982 = vmatmul.mubr.bf16.gmra.mrb[0].mxu0 %v3869
      %v3983 = vpop.f32.mrb[0].mxu0
      %v3984 = vadd.f32 %v3792, %v3983
      %v3985 = vpop.f32.mrb[0].mxu0
      %v3986 = vadd.f32 %v3792, %v3985
      %v3987 = vpop.f32.mrb[0].mxu0
      %v3988 = vadd.f32 %v3797, %v3987
      %v3989 = vpop.f32.mrb[0].mxu0
      %v3990 = vadd.f32 %v3797, %v3989
      %3991 = vmatprep.mubr.bf16.mxu0 %v3872
      %3992 = vmatmul.mubr.bf16.gmra.mrb[0].mxu0 %v3871
      %v3993 = vpop.f32.mrb[0].mxu0
      %v3994 = vadd.f32 %v3802, %v3993
      %v3995 = vpop.f32.mrb[0].mxu0
      %v3996 = vadd.f32 %v3802, %v3995
      %v3997 = vpop.f32.mrb[0].mxu0
      %v3998 = vadd.f32 %v3807, %v3997
      %v3999 = vpop.f32.mrb[0].mxu0
      %v4000 = vadd.f32 %v3807, %v3999
      %4001 = vdwg.mxu0
      %4002 = vmatprep.subr.bf16.mxu0 %v3652
      %4003 = vmatpush1.bf16.msra.mxu0 %v3651
      %4004 = vmatprep.subr.bf16.mxu0 %v3656
      %4005 = vmatpush1.bf16.msra.mxu0 %v3655
      %4006 = vmatprep.subr.bf16.mxu0 %v3660
      %4007 = vmatpush1.bf16.msra.mxu0 %v3659
      %4008 = vmatprep.subr.bf16.mxu0 %v3664
      %4009 = vmatpush1.bf16.msra.mxu0 %v3663
      %4010 = vmatprep.subr.bf16.mxu0 %v3668
      %4011 = vmatpush1.bf16.msra.mxu0 %v3667
      %4012 = vmatprep.subr.bf16.mxu0 %v3672
      %4013 = vmatpush1.bf16.msra.mxu0 %v3671
      %4014 = vmatprep.subr.bf16.mxu0 %v3676
      %4015 = vmatpush1.bf16.msra.mxu0 %v3675
      %4016 = vmatprep.subr.bf16.mxu0 %v3680
      %4017 = vmatpush1.bf16.msra.mxu0 %v3679
      %4018 = vmatprep.subr.bf16.mxu0 %v3684
      %4019 = vmatpush1.bf16.msra.mxu0 %v3683
      %4020 = vmatprep.subr.bf16.mxu0 %v3688
      %4021 = vmatpush1.bf16.msra.mxu0 %v3687
      %4022 = vmatprep.subr.bf16.mxu0 %v3692
      %4023 = vmatpush1.bf16.msra.mxu0 %v3691
      %4024 = vmatprep.subr.bf16.mxu0 %v3696
      %4025 = vmatpush1.bf16.msra.mxu0 %v3695
      %4026 = vmatprep.subr.bf16.mxu0 %v3700
      %4027 = vmatpush1.bf16.msra.mxu0 %v3699
      %4028 = vmatprep.subr.bf16.mxu0 %v3704
      %4029 = vmatpush1.bf16.msra.mxu0 %v3703
      %4030 = vmatprep.subr.bf16.mxu0 %v3708
      %4031 = vmatpush1.bf16.msra.mxu0 %v3707
      %4032 = vmatprep.subr.bf16.mxu0 %v3712
      %4033 = vmatpush1.bf16.msra.mxu0 %v3711
      %4034 = vmatprep.mubr.bf16.mxu0 %v3858
      %4035 = vmatmul.mubr.bf16.gmra.mrb[0].mxu0 %v3857
      %v4036 = vpop.f32.mrb[0].mxu0
      %v4037 = vadd.f32 %v3732, %v4036
      %v4038 = vpop.f32.mrb[0].mxu0
      %v4039 = vadd.f32 %v3732, %v4038
      %v4040 = vpop.f32.mrb[0].mxu0
      %v4041 = vadd.f32 %v3737, %v4040
      %v4042 = vpop.f32.mrb[0].mxu0
      %v4043 = vadd.f32 %v3737, %v4042
      %4044 = vmatprep.mubr.bf16.mxu0 %v3860
      %4045 = vmatmul.mubr.bf16.gmra.mrb[0].mxu0 %v3859
      %v4046 = vpop.f32.mrb[0].mxu0
      %v4047 = vadd.f32 %v3742, %v4046
      %v4048 = vpop.f32.mrb[0].mxu0
      %v4049 = vadd.f32 %v3742, %v4048
      %v4050 = vpop.f32.mrb[0].mxu0
      %v4051 = vadd.f32 %v3747, %v4050
      %v4052 = vpop.f32.mrb[0].mxu0
      %v4053 = vadd.f32 %v3747, %v4052
      %4054 = vmatprep.mubr.bf16.mxu0 %v3862
      %4055 = vmatmul.mubr.bf16.gmra.mrb[0].mxu0 %v3861
      %v4056 = vpop.f32.mrb[0].mxu0
      %v4057 = vadd.f32 %v3752, %v4056
      %v4058 = vpop.f32.mrb[0].mxu0
      %v4059 = vadd.f32 %v3752, %v4058
      %v4060 = vpop.f32.mrb[0].mxu0
      %v4061 = vadd.f32 %v3757, %v4060
      %v4062 = vpop.f32.mrb[0].mxu0
      %v4063 = vadd.f32 %v3757, %v4062
      %4064 = vmatprep.mubr.bf16.mxu0 %v3864
      %4065 = vmatmul.mubr.bf16.gmra.mrb[0].mxu0 %v3863
      %v4066 = vpop.f32.mrb[0].mxu0
      %v4067 = vadd.f32 %v3762, %v4066
      %v4068 = vpop.f32.mrb[0].mxu0
      %v4069 = vadd.f32 %v3762, %v4068
      %v4070 = vpop.f32.mrb[0].mxu0
      %v4071 = vadd.f32 %v3767, %v4070
      %v4072 = vpop.f32.mrb[0].mxu0
      %v4073 = vadd.f32 %v3767, %v4072
      %4074 = vmatprep.mubr.bf16.mxu0 %v3866
      %4075 = vmatmul.mubr.bf16.gmra.mrb[0].mxu0 %v3865
      %v4076 = vpop.f32.mrb[0].mxu0
      %v4077 = vadd.f32 %v3772, %v4076
      %v4078 = vpop.f32.mrb[0].mxu0
      %v4079 = vadd.f32 %v3772, %v4078
      %v4080 = vpop.f32.mrb[0].mxu0
      %v4081 = vadd.f32 %v3777, %v4080
      %v4082 = vpop.f32.mrb[0].mxu0
      %v4083 = vadd.f32 %v3777, %v4082
      %4084 = vmatprep.mubr.bf16.mxu0 %v3868
      %4085 = vmatmul.mubr.bf16.gmra.mrb[0].mxu0 %v3867
      %v4086 = vpop.f32.mrb[0].mxu0
      %v4087 = vadd.f32 %v3782, %v4086
      %v4088 = vpop.f32.mrb[0].mxu0
      %v4089 = vadd.f32 %v3782, %v4088
      %v4090 = vpop.f32.mrb[0].mxu0
      %v4091 = vadd.f32 %v3787, %v4090
      %v4092 = vpop.f32.mrb[0].mxu0
      %v4093 = vadd.f32 %v3787, %v4092
      %4094 = vmatprep.mubr.bf16.mxu0 %v3870
      %4095 = vmatmul.mubr.bf16.gmra.mrb[0].mxu0 %v3869
      %v4096 = vpop.f32.mrb[0].mxu0
      %v4097 = vadd.f32 %v3792, %v4096
      %v4098 = vpop.f32.mrb[0].mxu0
      %v4099 = vadd.f32 %v3792, %v4098
      %v4100 = vpop.f32.mrb[0].mxu0
      %v4101 = vadd.f32 %v3797, %v4100
      %v4102 = vpop.f32.mrb[0].mxu0
      %v4103 = vadd.f32 %v3797, %v4102
      %4104 = vmatprep.mubr.bf16.mxu0 %v3872
      %4105 = vmatmul.mubr.bf16.gmra.mrb[0].mxu0 %v3871
      %v4106 = vpop.f32.mrb[0].mxu0
      %v4107 = vadd.f32 %v3802, %v4106
      %v4108 = vpop.f32.mrb[0].mxu0
      %v4109 = vadd.f32 %v3802, %v4108
      %v4110 = vpop.f32.mrb[0].mxu0
      %v4111 = vadd.f32 %v3807, %v4110
      %v4112 = vpop.f32.mrb[0].mxu0
      %v4113 = vadd.f32 %v3807, %v4112
      %4114 = vdwg.mxu0
      %v4115 = vmax.f32 %v3924, 0.0
      %v4116 = vmax.f32 %v3926, 0.0
      %v4117 = vmax.f32 %v4037, 0.0
      %v4118 = vmax.f32 %v4039, 0.0
      %v4119 = vmax.f32 %v3928, 0.0
      %v4120 = vmax.f32 %v3930, 0.0
      %v4121 = vmax.f32 %v4041, 0.0
      %v4122 = vmax.f32 %v4043, 0.0
      %v4123 = vmax.f32 %v3934, 0.0
      %v4124 = vmax.f32 %v3936, 0.0
      %v4125 = vmax.f32 %v4047, 0.0
      %v4126 = vmax.f32 %v4049, 0.0
      %v4127 = vmax.f32 %v3938, 0.0
      %v4128 = vmax.f32 %v3940, 0.0
      %v4129 = vmax.f32 %v4051, 0.0
      %v4130 = vmax.f32 %v4053, 0.0
      %v4131 = vmax.f32 %v3944, 0.0
      %v4132 = vmax.f32 %v3946, 0.0
      %v4133 = vmax.f32 %v4057, 0.0
      %v4134 = vmax.f32 %v4059, 0.0
      %v4135 = vmax.f32 %v3948, 0.0
      %v4136 = vmax.f32 %v3950, 0.0
      %v4137 = vmax.f32 %v4061, 0.0
      %v4138 = vmax.f32 %v4063, 0.0
      %v4139 = vmax.f32 %v3954, 0.0
      %v4140 = vmax.f32 %v3956, 0.0
      %v4141 = vmax.f32 %v4067, 0.0
      %v4142 = vmax.f32 %v4069, 0.0
      %v4143 = vmax.f32 %v3958, 0.0
      %v4144 = vmax.f32 %v3960, 0.0
      %v4145 = vmax.f32 %v4071, 0.0
      %v4146 = vmax.f32 %v4073, 0.0
      %v4147 = vmax.f32 %v3964, 0.0
      %v4148 = vmax.f32 %v3966, 0.0
      %v4149 = vmax.f32 %v4077, 0.0
      %v4150 = vmax.f32 %v4079, 0.0
      %v4151 = vmax.f32 %v3968, 0.0
      %v4152 = vmax.f32 %v3970, 0.0
      %v4153 = vmax.f32 %v4081, 0.0
      %v4154 = vmax.f32 %v4083, 0.0
      %v4155 = vmax.f32 %v3974, 0.0
      %v4156 = vmax.f32 %v3976, 0.0
      %v4157 = vmax.f32 %v4087, 0.0
      %v4158 = vmax.f32 %v4089, 0.0
      %v4159 = vmax.f32 %v3978, 0.0
      %v4160 = vmax.f32 %v3980, 0.0
      %v4161 = vmax.f32 %v4091, 0.0
      %v4162 = vmax.f32 %v4093, 0.0
      %v4163 = vmax.f32 %v3984, 0.0
      %v4164 = vmax.f32 %v3986, 0.0
      %v4165 = vmax.f32 %v4097, 0.0
      %v4166 = vmax.f32 %v4099, 0.0
      %v4167 = vmax.f32 %v3988, 0.0
      %v4168 = vmax.f32 %v3990, 0.0
      %v4169 = vmax.f32 %v4101, 0.0
      %v4170 = vmax.f32 %v4103, 0.0
      %v4171 = vmax.f32 %v3994, 0.0
      %v4172 = vmax.f32 %v3996, 0.0
      %v4173 = vmax.f32 %v4107, 0.0
      %v4174 = vmax.f32 %v4109, 0.0
      %v4175 = vmax.f32 %v3998, 0.0
      %v4176 = vmax.f32 %v4000, 0.0
      %v4177 = vmax.f32 %v4111, 0.0
      %v4178 = vmax.f32 %v4113, 0.0
      %v4179 = vld [vmem:[%s7] sm:$0xff]
      %v4180 = vld [vmem:[%s7 + $0x8] sm:$0xff]
      %v4181 = vld [vmem:[%s7 + $0x10] sm:$0xff]
      %v4182 = vld [vmem:[%s7 + $0x18] sm:$0xff]
      %v4183 = vld [vmem:[%s7 + $0x20] sm:$0xff]
      %v4184 = vld [vmem:[%s7 + $0x28] sm:$0xff]
      %v4185 = vld [vmem:[%s7 + $0x30] sm:$0xff]
      %v4186 = vld [vmem:[%s7 + $0x38] sm:$0xff]
      %v4187 = vld [vmem:[%s7 + $0x40] sm:$0xff]
      %v4188 = vld [vmem:[%s7 + $0x48] sm:$0xff]
      %v4189 = vld [vmem:[%s7 + $0x50] sm:$0xff]
      %v4190 = vld [vmem:[%s7 + $0x58] sm:$0xff]
      %v4191 = vld [vmem:[%s7 + $0x60] sm:$0xff]
      %v4192 = vld [vmem:[%s7 + $0x68] sm:$0xff]
      %v4193 = vld [vmem:[%s7 + $0x70] sm:$0xff]
      %v4194 = vld [vmem:[%s7 + $0x78] sm:$0xff]
      %4196 = vset.pattern.permute.xlu0 0
      %4197 = vperm.xlu0 %4196, %v4179
      %v4198 = vpop.permute.xlu0 %4197
      %4201 = vset.pattern.permute.xlu0 0
      %4202 = vperm.xlu0 %4201, %v4180
      %v4203 = vpop.permute.xlu0 %4202
      %4206 = vset.pattern.permute.xlu0 0
      %4207 = vperm.xlu0 %4206, %v4181
      %v4208 = vpop.permute.xlu0 %4207
      %4211 = vset.pattern.permute.xlu0 0
      %4212 = vperm.xlu0 %4211, %v4182
      %v4213 = vpop.permute.xlu0 %4212
      %4216 = vset.pattern.permute.xlu0 0
      %4217 = vperm.xlu0 %4216, %v4183
      %v4218 = vpop.permute.xlu0 %4217
      %4221 = vset.pattern.permute.xlu0 0
      %4222 = vperm.xlu0 %4221, %v4184
      %v4223 = vpop.permute.xlu0 %4222
      %4226 = vset.pattern.permute.xlu0 0
      %4227 = vperm.xlu0 %4226, %v4185
      %v4228 = vpop.permute.xlu0 %4227
      %4231 = vset.pattern.permute.xlu0 0
      %4232 = vperm.xlu0 %4231, %v4186
      %v4233 = vpop.permute.xlu0 %4232
      %4236 = vset.pattern.permute.xlu0 0
      %4237 = vperm.xlu0 %4236, %v4187
      %v4238 = vpop.permute.xlu0 %4237
      %4241 = vset.pattern.permute.xlu0 0
      %4242 = vperm.xlu0 %4241, %v4188
      %v4243 = vpop.permute.xlu0 %4242
      %4246 = vset.pattern.permute.xlu0 0
      %4247 = vperm.xlu0 %4246, %v4189
      %v4248 = vpop.permute.xlu0 %4247
      %4251 = vset.pattern.permute.xlu0 0
      %4252 = vperm.xlu0 %4251, %v4190
      %v4253 = vpop.permute.xlu0 %4252
      %4256 = vset.pattern.permute.xlu0 0
      %4257 = vperm.xlu0 %4256, %v4191
      %v4258 = vpop.permute.xlu0 %4257
      %4261 = vset.pattern.permute.xlu0 0
      %4262 = vperm.xlu0 %4261, %v4192
      %v4263 = vpop.permute.xlu0 %4262
      %4266 = vset.pattern.permute.xlu0 0
      %4267 = vperm.xlu0 %4266, %v4193
      %v4268 = vpop.permute.xlu0 %4267
      %4271 = vset.pattern.permute.xlu0 0
      %4272 = vperm.xlu0 %4271, %v4194
      %v4273 = vpop.permute.xlu0 %4272
      %v4275 = vmul.f32 %v4115, %v4198
      %v4276 = vmul.f32 %v4116, %v4198
      %v4277 = vmul.f32 %v4117, %v4198
      %v4278 = vmul.f32 %v4118, %v4198
      %v4279 = vmul.f32 %v4119, %v4203
      %v4280 = vmul.f32 %v4120, %v4203
      %v4281 = vmul.f32 %v4121, %v4203
      %v4282 = vmul.f32 %v4122, %v4203
      %v4283 = vmul.f32 %v4123, %v4208
      %v4284 = vmul.f32 %v4124, %v4208
      %v4285 = vmul.f32 %v4125, %v4208
      %v4286 = vmul.f32 %v4126, %v4208
      %v4287 = vmul.f32 %v4127, %v4213
      %v4288 = vmul.f32 %v4128, %v4213
      %v4289 = vmul.f32 %v4129, %v4213
      %v4290 = vmul.f32 %v4130, %v4213
      %v4291 = vmul.f32 %v4131, %v4218
      %v4292 = vmul.f32 %v4132, %v4218
      %v4293 = vmul.f32 %v4133, %v4218
      %v4294 = vmul.f32 %v4134, %v4218
      %v4295 = vmul.f32 %v4135, %v4223
      %v4296 = vmul.f32 %v4136, %v4223
      %v4297 = vmul.f32 %v4137, %v4223
      %v4298 = vmul.f32 %v4138, %v4223
      %v4299 = vmul.f32 %v4139, %v4228
      %v4300 = vmul.f32 %v4140, %v4228
      %v4301 = vmul.f32 %v4141, %v4228
      %v4302 = vmul.f32 %v4142, %v4228
      %v4303 = vmul.f32 %v4143, %v4233
      %v4304 = vmul.f32 %v4144, %v4233
      %v4305 = vmul.f32 %v4145, %v4233
      %v4306 = vmul.f32 %v4146, %v4233
      %v4307 = vmul.f32 %v4147, %v4238
      %v4308 = vmul.f32 %v4148, %v4238
      %v4309 = vmul.f32 %v4149, %v4238
      %v4310 = vmul.f32 %v4150, %v4238
      %v4311 = vmul.f32 %v4151, %v4243
      %v4312 = vmul.f32 %v4152, %v4243
      %v4313 = vmul.f32 %v4153, %v4243
      %v4314 = vmul.f32 %v4154, %v4243
      %v4315 = vmul.f32 %v4155, %v4248
      %v4316 = vmul.f32 %v4156, %v4248
      %v4317 = vmul.f32 %v4157, %v4248
      %v4318 = vmul.f32 %v4158, %v4248
      %v4319 = vmul.f32 %v4159, %v4253
      %v4320 = vmul.f32 %v4160, %v4253
      %v4321 = vmul.f32 %v4161, %v4253
      %v4322 = vmul.f32 %v4162, %v4253
      %v4323 = vmul.f32 %v4163, %v4258
      %v4324 = vmul.f32 %v4164, %v4258
      %v4325 = vmul.f32 %v4165, %v4258
      %v4326 = vmul.f32 %v4166, %v4258
      %v4327 = vmul.f32 %v4167, %v4263
      %v4328 = vmul.f32 %v4168, %v4263
      %v4329 = vmul.f32 %v4169, %v4263
      %v4330 = vmul.f32 %v4170, %v4263
      %v4331 = vmul.f32 %v4171, %v4268
      %v4332 = vmul.f32 %v4172, %v4268
      %v4333 = vmul.f32 %v4173, %v4268
      %v4334 = vmul.f32 %v4174, %v4268
      %v4335 = vmul.f32 %v4175, %v4273
      %v4336 = vmul.f32 %v4176, %v4273
      %v4337 = vmul.f32 %v4177, %v4273
      %v4338 = vmul.f32 %v4178, %v4273
      %v4339 = vadd.f32 %v4275, %v4279
      %v4340 = vadd.f32 %v4339, %v4283
      %v4341 = vadd.f32 %v4340, %v4287
      %v4342 = vadd.f32 %v4341, %v4291
      %v4343 = vadd.f32 %v4342, %v4295
      %v4344 = vadd.f32 %v4343, %v4299
      %v4345 = vadd.f32 %v4344, %v4303
      %v4346 = vadd.f32 %v4345, %v4307
      %v4347 = vadd.f32 %v4346, %v4311
      %v4348 = vadd.f32 %v4347, %v4315
      %v4349 = vadd.f32 %v4348, %v4319
      %v4350 = vadd.f32 %v4349, %v4323
      %v4351 = vadd.f32 %v4350, %v4327
      %v4352 = vadd.f32 %v4351, %v4331
      %v4353 = vadd.f32 %v4352, %v4335
      %v4354 = vrot.slane %v4353, 4
      %v4355 = vadd.f32 %v4353, %v4354
      %v4356 = vrot.slane %v4355, 2
      %v4357 = vadd.f32 %v4355, %v4356
      %v4358 = vrot.slane %v4357, 1
      %v4359 = vadd.f32 %v4357, %v4358
      %v4360 = vadd.f32 %v4276, %v4280
      %v4361 = vadd.f32 %v4360, %v4284
      %v4362 = vadd.f32 %v4361, %v4288
      %v4363 = vadd.f32 %v4362, %v4292
      %v4364 = vadd.f32 %v4363, %v4296
      %v4365 = vadd.f32 %v4364, %v4300
      %v4366 = vadd.f32 %v4365, %v4304
      %v4367 = vadd.f32 %v4366, %v4308
      %v4368 = vadd.f32 %v4367, %v4312
      %v4369 = vadd.f32 %v4368, %v4316
      %v4370 = vadd.f32 %v4369, %v4320
      %v4371 = vadd.f32 %v4370, %v4324
      %v4372 = vadd.f32 %v4371, %v4328
      %v4373 = vadd.f32 %v4372, %v4332
      %v4374 = vadd.f32 %v4373, %v4336
      %v4375 = vrot.slane %v4374, 4
      %v4376 = vadd.f32 %v4374, %v4375
      %v4377 = vrot.slane %v4376, 2
      %v4378 = vadd.f32 %v4376, %v4377
      %v4379 = vrot.slane %v4378, 1
      %v4380 = vadd.f32 %v4378, %v4379
      %v4381 = vadd.f32 %v4277, %v4281
      %v4382 = vadd.f32 %v4381, %v4285
      %v4383 = vadd.f32 %v4382, %v4289
      %v4384 = vadd.f32 %v4383, %v4293
      %v4385 = vadd.f32 %v4384, %v4297
      %v4386 = vadd.f32 %v4385, %v4301
      %v4387 = vadd.f32 %v4386, %v4305
      %v4388 = vadd.f32 %v4387, %v4309
      %v4389 = vadd.f32 %v4388, %v4313
      %v4390 = vadd.f32 %v4389, %v4317
      %v4391 = vadd.f32 %v4390, %v4321
      %v4392 = vadd.f32 %v4391, %v4325
      %v4393 = vadd.f32 %v4392, %v4329
      %v4394 = vadd.f32 %v4393, %v4333
      %v4395 = vadd.f32 %v4394, %v4337
      %v4396 = vrot.slane %v4395, 4
      %v4397 = vadd.f32 %v4395, %v4396
      %v4398 = vrot.slane %v4397, 2
      %v4399 = vadd.f32 %v4397, %v4398
      %v4400 = vrot.slane %v4399, 1
      %v4401 = vadd.f32 %v4399, %v4400
      %v4402 = vadd.f32 %v4278, %v4282
      %v4403 = vadd.f32 %v4402, %v4286
      %v4404 = vadd.f32 %v4403, %v4290
      %v4405 = vadd.f32 %v4404, %v4294
      %v4406 = vadd.f32 %v4405, %v4298
      %v4407 = vadd.f32 %v4406, %v4302
      %v4408 = vadd.f32 %v4407, %v4306
      %v4409 = vadd.f32 %v4408, %v4310
      %v4410 = vadd.f32 %v4409, %v4314
      %v4411 = vadd.f32 %v4410, %v4318
      %v4412 = vadd.f32 %v4411, %v4322
      %v4413 = vadd.f32 %v4412, %v4326
      %v4414 = vadd.f32 %v4413, %v4330
      %v4415 = vadd.f32 %v4414, %v4334
      %v4416 = vadd.f32 %v4415, %v4338
      %v4417 = vrot.slane %v4416, 4
      %v4418 = vadd.f32 %v4416, %v4417
      %v4419 = vrot.slane %v4418, 2
      %v4420 = vadd.f32 %v4418, %v4419
      %v4421 = vrot.slane %v4420, 1
      %v4422 = vadd.f32 %v4420, %v4421
      %v4423 = vld [vmem:[#allocation2] sm:$0x1]
      %4425 = vset.pattern.permute.xlu0 0
      %4426 = vperm.xlu0 %4425, %v4423
      %v4427 = vpop.permute.xlu0 %4426
      %v4429 = vlaneseq
      %v4430 = vshrl.u32 %v4429, 7
      %v4431 = vsub.s32 0, %v4430
      %v4432 = vrot.slane %v4427, %v4431
      %v4433 = vadd.f32 %v4359, %v4432
      %v4434 = vadd.f32 %v4380, %v4432
      %v4435 = vadd.f32 %v4401, %v4432
      %v4436 = vadd.f32 %v4422, %v4432
      %v4441 = vcombine.low %v4433, %v4434
      %v4442 = vcombine.low %v4435, %v4436
      %v4444 = vunpack.c.l.s4 1966171168
      %v4445 = vunpack.c.0.s8 %v4444
      %v4446 = vlaneseq
      %v4447 = vshrl.u32 %v4446, 7
      %v4448 = vsub.s32 %v4445, %v4447
      %v4449 = vrot.slane %v4441, %v4448
      %v4451 = vunpack.c.l.s4 1966171168
      %v4452 = vunpack.c.0.s8 %v4451
      %v4453 = vlaneseq
      %v4454 = vshrl.u32 %v4453, 7
      %v4455 = vsub.s32 %v4452, %v4454
      %v4456 = vrot.slane %v4442, %v4455
      %v4457 = vcombine.low %v4449, %v4456
      %v4459 = vunpack.c.l.s4 1966171168
      %v4460 = vunpack.c.0.s8 %v4459
      %v4461 = vlaneseq
      %v4462 = vshrl.u32 %v4461, 7
      %v4463 = vsub.s32 %v4460, %v4462
      %v4464 = vrot.slane %v4457, %v4463
      %v4466 = vlaneseq
      %vm4467 = vcmp.ge.s32.totalorder %v4466, 0
      %vm4468 = vcmp.lt.s32.totalorder %v4466, 512
      %vm4469 = vmand %vm4467, %vm4468
      %4470 = vst.msk [vmem:[%s334] sm:$0xf] %vm4469, %v4464
      %s4471 = smul.u32 4, %s22
      %p4472 = scmp.lt.s32.totalorder %s4471, 7
      %s4473 = scalar_select %p4472, %s4471, 7
      %s4474 = scalar_lea.vmem %s9, %s4473
      // Predicated region
      $region57: #{revival_dnn_forward.1} parent=55 // pred_check
        %p4475 = pneg %p234
      $region58: #{revival_dnn_forward.1} parent=55 // pred_check_branch
        %4477 = sbr.rel (%p4475) target = $region60
      $region59: #{revival_dnn_forward.1} parent=55 // pred_region
        %s4478 = smul.u32 4, %s22
      $region60: #{revival_dnn_forward.1} parent=55 // pred_fallthru
        _
    $region56: #{revival_dnn_forward.1} parent=5 // pred_fallthru
      _
    %p4479 = scmp.le.s32.totalorder 2, %s17
    // Predicated region
    $region61: #{revival_dnn_forward.1} parent=5 // pred_check
      %p4480 = pneg %p4479
    $region62: #{revival_dnn_forward.1} parent=5 // pred_check_branch
      %4482 = sbr.rel (%p4480) target = $region64
    $region63: #{revival_dnn_forward.1} parent=5 // pred_region
      %s4483 = ssub.s32 %s17, 2
      // Predicated region
      $region65: #{revival_dnn_forward.1} parent=63 // pred_check
        %p4484 = pneg %p240
      $region66: #{revival_dnn_forward.1} parent=63 // pred_check_branch
        %4486 = sbr.rel (%p4484) target = $region68
      $region67: #{revival_dnn_forward.1} parent=63 // pred_region
        %s4487 = smul.u32 4, %s23
        %p4488 = scmp.lt.s32.totalorder %s4487, 7
        %s4489 = scalar_select %p4488, %s4487, 7
        %s4490 = scalar_lea.vmem %s9, %s4489
      $region68: #{revival_dnn_forward.1} parent=63 // pred_fallthru
        _
    $region64: #{revival_dnn_forward.1} parent=5 // pred_fallthru
      _
  $region6: #{revival_dnn_forward.1} parent=0 // loop_footer
    %s21 = sadd.s32 1, %s17
  $region7: #{revival_dnn_forward.1} parent=0 // loop_footer_branch
    %16 = sbr.rel target = $region3
  $region8: #{revival_dnn_forward.1} parent=0 // loop_exit
    _

</llo_original>
